<compile_context>
chip_gen: v7x
topology: tpu7x:2x2x1
jax: 0.10.0
libtpu: 0.0.40
codegen_flags: <defaults>
</compile_context>

<pallas_src>
import functools

import jax
import jax.numpy as jnp
from jax import lax
from jax.experimental import pallas as pl
from jax.experimental.pallas import tpu as pltpu


def _convlstm_kernel(x_ref, h_ref, c_ref, w_ref, b_ref, hout_ref, cout_ref,
                     pad_ref, col_ref, *, H, W, Cin, Ch, Bt, CP):
    # Block shapes (Bt batch elements per grid step):
    #   x_ref    : (Bt, H, W, Cin)          input activations
    #   h_ref    : (Bt, H, W, Ch)           previous hidden state
    #   c_ref    : (Bt*H*W, Ch)   f32       previous cell state (2-D, no reshapes)
    #   w_ref    : (9*CP, 4*Ch)   bf16      conv weights, row-zero-padded im2col layout
    #   b_ref    : (1, 4*Ch)      f32       conv bias
    #   hout_ref : (Bt*H*W, Ch)             new hidden state
    #   cout_ref : (Bt*H*W, Ch)   f32       new cell state
    #   pad_ref  : (Bt, H+2, W+2, CP) bf16  combined channel-padded halo scratch
    #   col_ref  : (Bt*H*W, 9*CP) bf16      im2col slab, one 128-lane stripe per tap
    f32 = jnp.float32
    bf16 = jnp.bfloat16
    Ctot = Cin + Ch
    HW = H * W

    # 1) Combined halo.  Full zero is cheap here (channel dim padded to CP=128
    #    -> unmasked full-lane stores) and keeps both the 1-pixel SAME halo and
    #    the padded channel lanes [Ctot:CP] correct on every step / core.
    pad_ref[...] = jnp.zeros_like(pad_ref)
    for b in range(Bt):
        pad_ref[b, 1:H + 1, 1:W + 1, 0:Cin] = x_ref[b].astype(bf16)
        pad_ref[b, 1:H + 1, 1:W + 1, Cin:Ctot] = h_ref[b].astype(bf16)

    # 2) im2col: tap (dy,dx) owns lanes [tap*CP, (tap+1)*CP) of `col`; every
    #    store is a full CP-lane, 128-aligned, unmasked store (no concat, no
    #    cross-lane shuffles).  K order matches the weight padding in the
    #    wrapper: (dy, dx, [x-channels, h-channels, zeros]).
    for b in range(Bt):
        for dy in range(3):
            for dx in range(3):
                tap = dy * 3 + dx
                slab = pad_ref[b, dy:dy + H, dx:dx + W, :]      # (H, W, CP) bf16
                col_ref[b * HW:(b + 1) * HW,
                        tap * CP:(tap + 1) * CP] = slab.reshape(HW, CP)

    # 3) One MXU matmul for all four gates (bf16 operands, f32 accumulation).
    gates = jnp.dot(col_ref[...], w_ref[...], preferred_element_type=f32)
    gates = gates + b_ref[...]                                  # (Bt*HW, 4*Ch) f32

    # 4) LSTM update (f32). PyTorch chunk(4, dim=C) order: in, remember, out, cell.
    sig = jax.nn.sigmoid(gates[:, :3 * Ch])                     # one wide sigmoid
    in_gate = sig[:, 0 * Ch:1 * Ch]
    rem_gate = sig[:, 1 * Ch:2 * Ch]
    out_gate = sig[:, 2 * Ch:3 * Ch]
    cell_gate = jnp.tanh(gates[:, 3 * Ch:])

    c_prev = c_ref[...]                                         # (Bt*HW, Ch) f32
    c_new = rem_gate * c_prev + in_gate * cell_gate
    h_new = out_gate * jnp.tanh(c_new)

    hout_ref[...] = h_new.astype(hout_ref.dtype)
    cout_ref[...] = c_new                                       # cell stays f32


def conv_lstm_cell_nhwc(x, h_prev, c_prev, w_hwio, bias, *, block_batch=1):
    """One ConvLSTM step in NHWC layout.

    Returns (hidden, cell): hidden is (B,H,W,Ch) in x.dtype, cell is (B,H,W,Ch)
    float32 (kept full precision for recurrent use).
    """
    B, H, W, Cin = x.shape
    Ch = h_prev.shape[-1]
    Ctot = Cin + Ch
    CP = ((Ctot + 127) // 128) * 128        # per-tap stripe width (lane aligned)
    G = 4 * Ch
    HW = H * W
    Bt = min(block_batch, B)
    assert B % Bt == 0, "batch must be divisible by block_batch"

    # Parameter prep (hoist out of any time loop for recurrent use):
    #   weights -> (9*CP, 4*Ch) bf16, rows [tap*CP : tap*CP+Ctot] hold
    #   w_hwio[dy,dx,:,:], remaining rows are zero (multiply the zero-padded
    #   channel lanes of `col`).
    w9 = w_hwio.reshape(9, Ctot, G)
    w_pad = jnp.zeros((9, CP, G), w_hwio.dtype).at[:, :Ctot, :].set(w9)
    w_pad = w_pad.reshape(9 * CP, G).astype(jnp.bfloat16)
    b2 = bias.reshape(1, G).astype(jnp.float32)
    c2 = c_prev.reshape(B * HW, Ch).astype(jnp.float32)          # 2-D, f32

    kernel = functools.partial(_convlstm_kernel,
                               H=H, W=W, Cin=Cin, Ch=Ch, Bt=Bt, CP=CP)

    grid_spec = pltpu.PrefetchScalarGridSpec(
        num_scalar_prefetch=0,
        grid=(B // Bt,),
        in_specs=[
            pl.BlockSpec((Bt, H, W, Cin), lambda b: (b, 0, 0, 0)),  # x (spatial)
            pl.BlockSpec((Bt, H, W, Ch), lambda b: (b, 0, 0, 0)),   # h (spatial)
            pl.BlockSpec((Bt * HW, Ch), lambda b: (b, 0)),          # c (2-D)
            pl.BlockSpec((9 * CP, G), lambda b: (0, 0)),            # weights (reused)
            pl.BlockSpec((1, G), lambda b: (0, 0)),                 # bias (reused)
        ],
        out_specs=[
            pl.BlockSpec((Bt * HW, Ch), lambda b: (b, 0)),          # hidden
            pl.BlockSpec((Bt * HW, Ch), lambda b: (b, 0)),          # cell (f32)
        ],
        scratch_shapes=[
            pltpu.VMEM((Bt, H + 2, W + 2, CP), jnp.bfloat16),       # combined halo
            pltpu.VMEM((Bt * HW, 9 * CP), jnp.bfloat16),            # im2col slab
        ],
    )

    hidden2, cell2 = pl.pallas_call(
        kernel,
        out_shape=(
            jax.ShapeDtypeStruct((B * HW, Ch), x.dtype),
            jax.ShapeDtypeStruct((B * HW, Ch), jnp.float32),
        ),
        grid_spec=grid_spec,
        compiler_params=pltpu.CompilerParams(
            dimension_semantics=("parallel",)),
    )(x, h_prev, c2, w_pad, b2)

    # Contiguous reshapes back to NHWC (free at the XLA level).
    return hidden2.reshape(B, H, W, Ch), cell2.reshape(B, H, W, Ch)


def conv_lstm_cell_nchw(x_nchw, prev_state, w_hwio, bias, hidden_size,
                        *, block_batch=1):
    """PyTorch-semantics wrapper: NCHW in/out, prev_state may be None.

    For recurrent unrolling prefer conv_lstm_cell_nhwc and keep h (NHWC) /
    c (f32) between steps; the transposes below are boundary-only traffic.
    """
    B, Cin, H, W = x_nchw.shape
    to_nhwc = lambda t: jnp.transpose(t, (0, 2, 3, 1))
    to_nchw = lambda t: jnp.transpose(t, (0, 3, 1, 2))

    if prev_state is None:
        h_prev = jnp.zeros((B, H, W, hidden_size), x_nchw.dtype)
        c_prev = jnp.zeros((B, H, W, hidden_size), jnp.float32)
    else:
        h_prev, c_prev = (to_nhwc(t) for t in prev_state)

    hidden, cell = conv_lstm_cell_nhwc(to_nhwc(x_nchw), h_prev, c_prev,
                                       w_hwio, bias, block_batch=block_batch)
    return to_nchw(hidden), to_nchw(cell)


def _reference_nchw(x_nchw, prev_state, w_hwio, bias, hidden_size):
    """Pure-JAX reference (lax conv) mirroring the PyTorch forward."""
    B, Cin, H, W = x_nchw.shape
    if prev_state is None:
        zeros = jnp.zeros((B, hidden_size, H, W), x_nchw.dtype)
        prev_state = (zeros, zeros)
    h_prev, c_prev = prev_state
    stacked = jnp.concatenate([x_nchw, h_prev], axis=1)            # NCHW
    gates = lax.conv_general_dilated(
        stacked, w_hwio, window_strides=(1, 1), padding="SAME",
        dimension_numbers=("NCHW", "HWIO", "NCHW"))
    gates = gates + bias.reshape(1, -1, 1, 1)
    i, f, o, g = jnp.split(gates, 4, axis=1)
    i, f, o, g = jax.nn.sigmoid(i), jax.nn.sigmoid(f), jax.nn.sigmoid(o), jnp.tanh(g)
    cell = f * c_prev + i * g
    hidden = o * jnp.tanh(cell)
    return hidden, cell


if __name__ == "__main__":
    # Small deterministic config: batch=2, in_channels=4, hidden=32, spatial=16x16.
    B, Cin, Ch, H, W = 2, 4, 32, 16, 16
    Ctot = Cin + Ch

    key = jax.random.PRNGKey(0)
    kx, kh, kc, kw, kb = jax.random.split(key, 5)

    x = jax.random.normal(kx, (B, Cin, H, W), jnp.float32)
    h_prev = jax.random.normal(kh, (B, Ch, H, W), jnp.float32) * 0.1
    c_prev = jax.random.normal(kc, (B, Ch, H, W), jnp.float32) * 0.1

    # Conv2d(Ctot -> 4*Ch, k=3, pad=1) parameters in HWIO layout (equivalent
    # to PyTorch's OIHW weight, just transposed), synthesized deterministically.
    w_hwio = jax.random.normal(kw, (3, 3, Ctot, 4 * Ch), jnp.float32) * 0.05
    bias = jax.random.normal(kb, (4 * Ch,), jnp.float32) * 0.05

    hidden, cell = conv_lstm_cell_nchw(x, (h_prev, c_prev), w_hwio, bias, Ch)
    hidden = jax.block_until_ready(hidden)
    cell = jax.block_until_ready(cell)

    # Sanity check against the pure-JAX reference. bf16 matmul operands with
    # f32 accumulation -> loosened (but still tight) tolerance.
    h_want, c_want = _reference_nchw(x, (h_prev, c_prev), w_hwio, bias, Ch)
    assert hidden.shape == (B, Ch, H, W) and cell.shape == (B, Ch, H, W)
    assert jnp.allclose(hidden, h_want, atol=2e-2, rtol=2e-2), \
        float(jnp.max(jnp.abs(hidden - h_want)))
    assert jnp.allclose(cell, c_want, atol=2e-2, rtol=2e-2), \
        float(jnp.max(jnp.abs(cell - c_want)))

    # Also exercise and check the prev_state=None path (zero-initialized state).
    h0, c0 = conv_lstm_cell_nchw(x, None, w_hwio, bias, Ch)
    h0 = jax.block_until_ready(h0)
    h0_want, c0_want = _reference_nchw(x, None, w_hwio, bias, Ch)
    assert jnp.allclose(h0, h0_want, atol=2e-2, rtol=2e-2)
    assert jnp.allclose(c0, c0_want, atol=2e-2, rtol=2e-2)

    print("KERNEL_OK")
</pallas_src>

<mosaic_0001>
module attributes {stable_mosaic.version = 11 : i64} {
  func.func @_convlstm_kernel(%arg0: i32, %arg1: memref<1x16x16x4xf32, #tpu.memory_space<vmem>>, %arg2: memref<1x16x16x32xf32, #tpu.memory_space<vmem>>, %arg3: memref<256x32xf32, #tpu.memory_space<vmem>>, %arg4: memref<1152x128xbf16, #tpu.memory_space<vmem>>, %arg5: memref<1x128xf32, #tpu.memory_space<vmem>>, %arg6: memref<256x32xf32, #tpu.memory_space<vmem>>, %arg7: memref<256x32xf32, #tpu.memory_space<vmem>>, %arg8: memref<1x18x18x128xbf16, #tpu.memory_space<vmem>>, %arg9: memref<256x1152xbf16, #tpu.memory_space<vmem>>) attributes {dimension_semantics = [#tpu.dimension_semantics<parallel>], iteration_bounds = array<i64: 2>, scalar_prefetch = 0 : i64, scratch_operands = 2 : i64, tpu.core_type = #tpu.core_type<tc>, window_params = [{transform_indices = @transform_0, window_bounds = array<i64: 1, 16, 16, 4>}, {transform_indices = @transform_1, window_bounds = array<i64: 1, 16, 16, 32>}, {transform_indices = @transform_2, window_bounds = array<i64: 256, 32>}, {pipeline_mode = #tpu.pipeline_mode<synchronous>, transform_indices = @transform_3, window_bounds = array<i64: 1152, 128>}, {pipeline_mode = #tpu.pipeline_mode<synchronous>, transform_indices = @transform_4, window_bounds = array<i64: 1, 128>}, {transform_indices = @transform_5, window_bounds = array<i64: 256, 32>}, {transform_indices = @transform_6, window_bounds = array<i64: 256, 32>}]} {
    %cst = arith.constant 0.000000e+00 : bf16
    %0 = vector.broadcast %cst : bf16 to vector<1x18x18x128xbf16>
    %c0 = arith.constant 0 : index
    %c0_0 = arith.constant 0 : index
    %c0_1 = arith.constant 0 : index
    %c0_2 = arith.constant 0 : index
    %1 = vector.load %arg8[%c0, %c0_0, %c0_1, %c0_2] : memref<1x18x18x128xbf16, #tpu.memory_space<vmem>>, vector<1x18x18x128xbf16>
    tpu.vector_store %arg8[%c0, %c0_0, %c0_1, %c0_2], %0 {strides = array<i32>} : memref<1x18x18x128xbf16, #tpu.memory_space<vmem>>, vector<1x18x18x128xbf16>,
    %c0_3 = arith.constant 0 : index
    %c0_4 = arith.constant 0 : index
    %c0_5 = arith.constant 0 : index
    %c0_6 = arith.constant 0 : index
    %2 = vector.load %arg1[%c0_3, %c0_4, %c0_5, %c0_6] : memref<1x16x16x4xf32, #tpu.memory_space<vmem>>, vector<1x16x16x4xf32>
    %3 = vector.shape_cast %2 : vector<1x16x16x4xf32> to vector<16x16x4xf32>
    %4 = arith.truncf %3 : vector<16x16x4xf32> to vector<16x16x4xbf16>
    %c0_7 = arith.constant 0 : index
    %c1 = arith.constant 1 : index
    %c1_8 = arith.constant 1 : index
    %c0_9 = arith.constant 0 : index
    %5 = vector.load %arg8[%c0_7, %c1, %c1_8, %c0_9] : memref<1x18x18x128xbf16, #tpu.memory_space<vmem>>, vector<1x16x16x4xbf16>
    %6 = vector.shape_cast %5 : vector<1x16x16x4xbf16> to vector<16x16x4xbf16>
    %7 = vector.shape_cast %4 : vector<16x16x4xbf16> to vector<1x16x16x4xbf16>
    tpu.vector_store %arg8[%c0_7, %c1, %c1_8, %c0_9], %7 {strides = array<i32>} : memref<1x18x18x128xbf16, #tpu.memory_space<vmem>>, vector<1x16x16x4xbf16>,
    %c0_10 = arith.constant 0 : index
    %c0_11 = arith.constant 0 : index
    %c0_12 = arith.constant 0 : index
    %c0_13 = arith.constant 0 : index
    %8 = vector.load %arg2[%c0_10, %c0_11, %c0_12, %c0_13] : memref<1x16x16x32xf32, #tpu.memory_space<vmem>>, vector<1x16x16x32xf32>
    %9 = vector.shape_cast %8 : vector<1x16x16x32xf32> to vector<16x16x32xf32>
    %10 = arith.truncf %9 : vector<16x16x32xf32> to vector<16x16x32xbf16>
    %c0_14 = arith.constant 0 : index
    %c1_15 = arith.constant 1 : index
    %c1_16 = arith.constant 1 : index
    %c4 = arith.constant 4 : index
    %11 = vector.load %arg8[%c0_14, %c1_15, %c1_16, %c4] : memref<1x18x18x128xbf16, #tpu.memory_space<vmem>>, vector<1x16x16x32xbf16>
    %12 = vector.shape_cast %11 : vector<1x16x16x32xbf16> to vector<16x16x32xbf16>
    %13 = vector.shape_cast %10 : vector<16x16x32xbf16> to vector<1x16x16x32xbf16>
    tpu.vector_store %arg8[%c0_14, %c1_15, %c1_16, %c4], %13 {strides = array<i32>} : memref<1x18x18x128xbf16, #tpu.memory_space<vmem>>, vector<1x16x16x32xbf16>,
    %c0_17 = arith.constant 0 : index
    %c0_18 = arith.constant 0 : index
    %c0_19 = arith.constant 0 : index
    %c0_20 = arith.constant 0 : index
    %14 = vector.load %arg8[%c0_17, %c0_18, %c0_19, %c0_20] : memref<1x18x18x128xbf16, #tpu.memory_space<vmem>>, vector<1x16x16x128xbf16>
    %15 = vector.shape_cast %14 : vector<1x16x16x128xbf16> to vector<16x16x128xbf16>
    %16 = vector.shape_cast %15 : vector<16x16x128xbf16> to vector<256x128xbf16>
    %c0_21 = arith.constant 0 : index
    %c0_22 = arith.constant 0 : index
    %17 = vector.load %arg9[%c0_21, %c0_22] : memref<256x1152xbf16, #tpu.memory_space<vmem>>, vector<256x128xbf16>
    tpu.vector_store %arg9[%c0_21, %c0_22], %16 {strides = array<i32>} : memref<256x1152xbf16, #tpu.memory_space<vmem>>, vector<256x128xbf16>,
    %c0_23 = arith.constant 0 : index
    %c0_24 = arith.constant 0 : index
    %c1_25 = arith.constant 1 : index
    %c0_26 = arith.constant 0 : index
    %18 = vector.load %arg8[%c0_23, %c0_24, %c1_25, %c0_26] : memref<1x18x18x128xbf16, #tpu.memory_space<vmem>>, vector<1x16x16x128xbf16>
    %19 = vector.shape_cast %18 : vector<1x16x16x128xbf16> to vector<16x16x128xbf16>
    %20 = vector.shape_cast %19 : vector<16x16x128xbf16> to vector<256x128xbf16>
    %c0_27 = arith.constant 0 : index
    %c128 = arith.constant 128 : index
    %21 = vector.load %arg9[%c0_27, %c128] : memref<256x1152xbf16, #tpu.memory_space<vmem>>, vector<256x128xbf16>
    tpu.vector_store %arg9[%c0_27, %c128], %20 {strides = array<i32>} : memref<256x1152xbf16, #tpu.memory_space<vmem>>, vector<256x128xbf16>,
    %c0_28 = arith.constant 0 : index
    %c0_29 = arith.constant 0 : index
    %c2 = arith.constant 2 : index
    %c0_30 = arith.constant 0 : index
    %22 = vector.load %arg8[%c0_28, %c0_29, %c2, %c0_30] : memref<1x18x18x128xbf16, #tpu.memory_space<vmem>>, vector<1x16x16x128xbf16>
    %23 = vector.shape_cast %22 : vector<1x16x16x128xbf16> to vector<16x16x128xbf16>
    %24 = vector.shape_cast %23 : vector<16x16x128xbf16> to vector<256x128xbf16>
    %c0_31 = arith.constant 0 : index
    %c256 = arith.constant 256 : index
    %25 = vector.load %arg9[%c0_31, %c256] : memref<256x1152xbf16, #tpu.memory_space<vmem>>, vector<256x128xbf16>
    tpu.vector_store %arg9[%c0_31, %c256], %24 {strides = array<i32>} : memref<256x1152xbf16, #tpu.memory_space<vmem>>, vector<256x128xbf16>,
    %c0_32 = arith.constant 0 : index
    %c1_33 = arith.constant 1 : index
    %c0_34 = arith.constant 0 : index
    %c0_35 = arith.constant 0 : index
    %26 = vector.load %arg8[%c0_32, %c1_33, %c0_34, %c0_35] : memref<1x18x18x128xbf16, #tpu.memory_space<vmem>>, vector<1x16x16x128xbf16>
    %27 = vector.shape_cast %26 : vector<1x16x16x128xbf16> to vector<16x16x128xbf16>
    %28 = vector.shape_cast %27 : vector<16x16x128xbf16> to vector<256x128xbf16>
    %c0_36 = arith.constant 0 : index
    %c384 = arith.constant 384 : index
    %29 = vector.load %arg9[%c0_36, %c384] : memref<256x1152xbf16, #tpu.memory_space<vmem>>, vector<256x128xbf16>
    tpu.vector_store %arg9[%c0_36, %c384], %28 {strides = array<i32>} : memref<256x1152xbf16, #tpu.memory_space<vmem>>, vector<256x128xbf16>,
    %c0_37 = arith.constant 0 : index
    %c1_38 = arith.constant 1 : index
    %c1_39 = arith.constant 1 : index
    %c0_40 = arith.constant 0 : index
    %30 = vector.load %arg8[%c0_37, %c1_38, %c1_39, %c0_40] : memref<1x18x18x128xbf16, #tpu.memory_space<vmem>>, vector<1x16x16x128xbf16>
    %31 = vector.shape_cast %30 : vector<1x16x16x128xbf16> to vector<16x16x128xbf16>
    %32 = vector.shape_cast %31 : vector<16x16x128xbf16> to vector<256x128xbf16>
    %c0_41 = arith.constant 0 : index
    %c512 = arith.constant 512 : index
    %33 = vector.load %arg9[%c0_41, %c512] : memref<256x1152xbf16, #tpu.memory_space<vmem>>, vector<256x128xbf16>
    tpu.vector_store %arg9[%c0_41, %c512], %32 {strides = array<i32>} : memref<256x1152xbf16, #tpu.memory_space<vmem>>, vector<256x128xbf16>,
    %c0_42 = arith.constant 0 : index
    %c1_43 = arith.constant 1 : index
    %c2_44 = arith.constant 2 : index
    %c0_45 = arith.constant 0 : index
    %34 = vector.load %arg8[%c0_42, %c1_43, %c2_44, %c0_45] : memref<1x18x18x128xbf16, #tpu.memory_space<vmem>>, vector<1x16x16x128xbf16>
    %35 = vector.shape_cast %34 : vector<1x16x16x128xbf16> to vector<16x16x128xbf16>
    %36 = vector.shape_cast %35 : vector<16x16x128xbf16> to vector<256x128xbf16>
    %c0_46 = arith.constant 0 : index
    %c640 = arith.constant 640 : index
    %37 = vector.load %arg9[%c0_46, %c640] : memref<256x1152xbf16, #tpu.memory_space<vmem>>, vector<256x128xbf16>
    tpu.vector_store %arg9[%c0_46, %c640], %36 {strides = array<i32>} : memref<256x1152xbf16, #tpu.memory_space<vmem>>, vector<256x128xbf16>,
    %c0_47 = arith.constant 0 : index
    %c2_48 = arith.constant 2 : index
    %c0_49 = arith.constant 0 : index
    %c0_50 = arith.constant 0 : index
    %38 = vector.load %arg8[%c0_47, %c2_48, %c0_49, %c0_50] : memref<1x18x18x128xbf16, #tpu.memory_space<vmem>>, vector<1x16x16x128xbf16>
    %39 = vector.shape_cast %38 : vector<1x16x16x128xbf16> to vector<16x16x128xbf16>
    %40 = vector.shape_cast %39 : vector<16x16x128xbf16> to vector<256x128xbf16>
    %c0_51 = arith.constant 0 : index
    %c768 = arith.constant 768 : index
    %41 = vector.load %arg9[%c0_51, %c768] : memref<256x1152xbf16, #tpu.memory_space<vmem>>, vector<256x128xbf16>
    tpu.vector_store %arg9[%c0_51, %c768], %40 {strides = array<i32>} : memref<256x1152xbf16, #tpu.memory_space<vmem>>, vector<256x128xbf16>,
    %c0_52 = arith.constant 0 : index
    %c2_53 = arith.constant 2 : index
    %c1_54 = arith.constant 1 : index
    %c0_55 = arith.constant 0 : index
    %42 = vector.load %arg8[%c0_52, %c2_53, %c1_54, %c0_55] : memref<1x18x18x128xbf16, #tpu.memory_space<vmem>>, vector<1x16x16x128xbf16>
    %43 = vector.shape_cast %42 : vector<1x16x16x128xbf16> to vector<16x16x128xbf16>
    %44 = vector.shape_cast %43 : vector<16x16x128xbf16> to vector<256x128xbf16>
    %c0_56 = arith.constant 0 : index
    %c896 = arith.constant 896 : index
    %45 = vector.load %arg9[%c0_56, %c896] : memref<256x1152xbf16, #tpu.memory_space<vmem>>, vector<256x128xbf16>
    tpu.vector_store %arg9[%c0_56, %c896], %44 {strides = array<i32>} : memref<256x1152xbf16, #tpu.memory_space<vmem>>, vector<256x128xbf16>,
    %c0_57 = arith.constant 0 : index
    %c2_58 = arith.constant 2 : index
    %c2_59 = arith.constant 2 : index
    %c0_60 = arith.constant 0 : index
    %46 = vector.load %arg8[%c0_57, %c2_58, %c2_59, %c0_60] : memref<1x18x18x128xbf16, #tpu.memory_space<vmem>>, vector<1x16x16x128xbf16>
    %47 = vector.shape_cast %46 : vector<1x16x16x128xbf16> to vector<16x16x128xbf16>
    %48 = vector.shape_cast %47 : vector<16x16x128xbf16> to vector<256x128xbf16>
    %c0_61 = arith.constant 0 : index
    %c1024 = arith.constant 1024 : index
    %49 = vector.load %arg9[%c0_61, %c1024] : memref<256x1152xbf16, #tpu.memory_space<vmem>>, vector<256x128xbf16>
    tpu.vector_store %arg9[%c0_61, %c1024], %48 {strides = array<i32>} : memref<256x1152xbf16, #tpu.memory_space<vmem>>, vector<256x128xbf16>,
    %c0_62 = arith.constant 0 : index
    %c0_63 = arith.constant 0 : index
    %50 = vector.load %arg9[%c0_62, %c0_63] : memref<256x1152xbf16, #tpu.memory_space<vmem>>, vector<256x1152xbf16>
    %c0_64 = arith.constant 0 : index
    %c0_65 = arith.constant 0 : index
    %51 = vector.load %arg4[%c0_64, %c0_65] : memref<1152x128xbf16, #tpu.memory_space<vmem>>, vector<1152x128xbf16>
    %cst_66 = arith.constant dense<0.000000e+00> : vector<256x128xf32>
    %52 = tpu.matmul %50, %51, %cst_66 {dimension_numbers = #tpu.dot_dimension_numbers<[1], [0], [0], [1], [0, 0, 1, 1], [], []>} : vector<256x1152xbf16>, vector<1152x128xbf16>, vector<256x128xf32> -> vector<256x128xf32>
    %c0_67 = arith.constant 0 : index
    %c0_68 = arith.constant 0 : index
    %53 = vector.load %arg5[%c0_67, %c0_68] : memref<1x128xf32, #tpu.memory_space<vmem>>, vector<1x128xf32>
    %54 = vector.broadcast %53 : vector<1x128xf32> to vector<256x128xf32>
    %55 = arith.addf %52, %54 : vector<256x128xf32>
    %56 = vector.extract_strided_slice %55 {offsets = [0, 0], sizes = [256, 96], strides = [1, 1]} : vector<256x128xf32> to vector<256x96xf32>
    %57 = arith.negf %56 : vector<256x96xf32>
    %58 = math.exp %57 : vector<256x96xf32>
    %cst_69 = arith.constant 1.000000e+00 : f32
    %59 = vector.broadcast %cst_69 : f32 to vector<256x96xf32>
    %60 = arith.addf %59, %58 : vector<256x96xf32>
    %61 = arith.divf %59, %60 : vector<256x96xf32>
    %62 = vector.extract_strided_slice %61 {offsets = [0, 0], sizes = [256, 32], strides = [1, 1]} : vector<256x96xf32> to vector<256x32xf32>
    %63 = vector.extract_strided_slice %61 {offsets = [0, 32], sizes = [256, 32], strides = [1, 1]} : vector<256x96xf32> to vector<256x32xf32>
    %64 = vector.extract_strided_slice %61 {offsets = [0, 64], sizes = [256, 32], strides = [1, 1]} : vector<256x96xf32> to vector<256x32xf32>
    %65 = vector.extract_strided_slice %55 {offsets = [0, 96], sizes = [256, 32], strides = [1, 1]} : vector<256x128xf32> to vector<256x32xf32>
    %66 = math.tanh %65 : vector<256x32xf32>
    %c0_70 = arith.constant 0 : index
    %c0_71 = arith.constant 0 : index
    %67 = vector.load %arg3[%c0_70, %c0_71] : memref<256x32xf32, #tpu.memory_space<vmem>>, vector<256x32xf32>
    %68 = arith.mulf %63, %67 : vector<256x32xf32>
    %69 = arith.mulf %62, %66 : vector<256x32xf32>
    %70 = arith.addf %68, %69 : vector<256x32xf32>
    %71 = math.tanh %70 : vector<256x32xf32>
    %72 = arith.mulf %64, %71 : vector<256x32xf32>
    %c0_72 = arith.constant 0 : index
    %c0_73 = arith.constant 0 : index
    %73 = vector.load %arg6[%c0_72, %c0_73] : memref<256x32xf32, #tpu.memory_space<vmem>>, vector<256x32xf32>
    tpu.vector_store %arg6[%c0_72, %c0_73], %72 {strides = array<i32>} : memref<256x32xf32, #tpu.memory_space<vmem>>, vector<256x32xf32>,
    %c0_74 = arith.constant 0 : index
    %c0_75 = arith.constant 0 : index
    %74 = vector.load %arg7[%c0_74, %c0_75] : memref<256x32xf32, #tpu.memory_space<vmem>>, vector<256x32xf32>
    tpu.vector_store %arg7[%c0_74, %c0_75], %70 {strides = array<i32>} : memref<256x32xf32, #tpu.memory_space<vmem>>, vector<256x32xf32>,
    return
  }
  func.func @transform_0(%arg0: i32) -> (i32, i32, i32, i32) {
    %c0_i32 = arith.constant 0 : i32
    %c0_i32_0 = arith.constant 0 : i32
    %c0_i32_1 = arith.constant 0 : i32
    %c0_i32_2 = arith.constant 0 : i32
    return %arg0, %c0_i32, %c0_i32_0, %c0_i32_1 : i32, i32, i32, i32
  }
  func.func @transform_1(%arg0: i32) -> (i32, i32, i32, i32) {
    %c0_i32 = arith.constant 0 : i32
    %c0_i32_0 = arith.constant 0 : i32
    %c0_i32_1 = arith.constant 0 : i32
    %c0_i32_2 = arith.constant 0 : i32
    return %arg0, %c0_i32, %c0_i32_0, %c0_i32_1 : i32, i32, i32, i32
  }
  func.func @transform_2(%arg0: i32) -> (i32, i32) {
    %c0_i32 = arith.constant 0 : i32
    %c0_i32_0 = arith.constant 0 : i32
    return %arg0, %c0_i32 : i32, i32
  }
  func.func @transform_3(%arg0: i32) -> (i32, i32) {
    %c0_i32 = arith.constant 0 : i32
    %c0_i32_0 = arith.constant 0 : i32
    %c0_i32_1 = arith.constant 0 : i32
    return %c0_i32, %c0_i32_0 : i32, i32
  }
  func.func @transform_4(%arg0: i32) -> (i32, i32) {
    %c0_i32 = arith.constant 0 : i32
    %c0_i32_0 = arith.constant 0 : i32
    %c0_i32_1 = arith.constant 0 : i32
    return %c0_i32, %c0_i32_0 : i32, i32
  }
  func.func @transform_5(%arg0: i32) -> (i32, i32) {
    %c0_i32 = arith.constant 0 : i32
    %c0_i32_0 = arith.constant 0 : i32
    return %arg0, %c0_i32 : i32, i32
  }
  func.func @transform_6(%arg0: i32) -> (i32, i32) {
    %c0_i32 = arith.constant 0 : i32
    %c0_i32_0 = arith.constant 0 : i32
    return %arg0, %c0_i32 : i32, i32
  }
}

</mosaic_0001>

<llo_original>
// kernel: tpu_custom_call.1
$region0: #{tpu_custom_call.1}
  #allocation0 [shape = 'u32[]', space=smem, size = 0x4, offset = 0x4, fixed_abs, tag = 'smem constant byte address 0x4 - core index']
  #allocation1 [shape = 'u32[144,128]{1,0:T(1,128)}', space=vmem, size = 0x12000, scoped, tag = 'internal scratch']
  #allocation2 [shape = 'bf16[1,18,18,128]{3,2,1,0:T(8,128)(2,1)}', space=vmem, size = 0x1b000, scoped, tag = 'scratch operand']
  #allocation3 [shape = 'bf16[256,1152]{1,0:T(16,128)(2,1)}', space=vmem, size = 0x90000, scoped, tag = 'scratch operand']
  %s0 = inlined_call_operand.vmem [shape: f32[2,16,16,4], index: 0, kind: input, shape index: {}]
  %s1 = inlined_call_operand.vmem [shape: f32[2,16,16,32], index: 1, kind: input, shape index: {}]
  %s2 = inlined_call_operand.vmem [shape: f32[512,32], index: 2, kind: input, shape index: {}]
  %s3 = inlined_call_operand.vmem [shape: bf16[1152,128], index: 3, kind: input, shape index: {}]
  %s4 = inlined_call_operand.vmem [shape: f32[1,128], index: 4, kind: input, shape index: {}]
  %s5 = inlined_call_operand.vmem [shape: f32[512,32], index: 5, kind: output, shape index: {0}]
  %s6 = inlined_call_operand.vmem [shape: f32[512,32], index: 6, kind: output, shape index: {1}]
  %7 = xla_tuple %s5, %s6
  %s8 = sld [smem:[#allocation0]]
  $region61: #{tpu_custom_call.1} parent=0
    _
  %s10 = ssub.s32 1, %s8
  %s11 = scalar_select 0, %s10, %s8
  loop: start=0, step=1, limit=4
  $region2: #{tpu_custom_call.1} parent=0 // loop_pre_header
    _
  $region3: #{tpu_custom_call.1} parent=0 // loop_header
    %s13 = sphi 0, %s17
    %p14 = scmp.ge.s32.totalorder %s13, 4
    %s23 = sphi 0, %s25
    %s26 = sphi 0, %s23
    %s27 = sphi 0, %s26
    %s43 = sphi 0, %s27
    %s49 = sphi 0, %s51
    %s52 = sphi 0, %s49
    %s53 = sphi 0, %s52
    %s69 = sphi 0, %s53
    %s75 = sphi 0, %s77
    %s78 = sphi 0, %s75
    %s79 = sphi 0, %s78
    %s95 = sphi 0, %s79
    %s99 = sphi 0, %s99
    %s101 = sphi 0, %s99
    %s102 = sphi 0, %s101
    %s116 = sphi 0, %s102
    %s120 = sphi 0, %s120
    %s122 = sphi 0, %s120
    %s123 = sphi 0, %s122
    %s137 = sphi 0, %s123
    %s143 = sphi 0, %s145
    %s146 = sphi 0, %s143
    %s147 = sphi 0, %s146
    %s163 = sphi 0, %s147
    %s169 = sphi 0, %s171
    %s172 = sphi 0, %s169
    %s173 = sphi 0, %s172
    %s189 = sphi 0, %s173
  $region4: #{tpu_custom_call.1} parent=0 // loop_header_branch
    %16 = sbr.rel (%p14) target = $region8
  $region5: #{tpu_custom_call.1} parent=0 // loop_body
    %s18 = ssub.s32 %s13, 1
    %s19 = ssub.s32 %s13, 2
    %s20 = sadd.s32 %s13, 1
    %s21 = ssub.s32 %s13, %s20
    %p22 = scmp.eq.s32.totalorder %s21, 0
    %s24 = sadd.s32 %s23, 1
    %s25 = scalar_select %p22, %s23, %s24
    %p28 = pneg %p22
    %p29 = scmp.eq.s32.totalorder %s13, 1
    %p30 = por %p28, %p29
    %p31 = scmp.ne.s32.totalorder %s23, %s26
    %p32 = scmp.eq.s32.totalorder %s13, 0
    %p33 = por %p31, %p32
    %p34 = scmp.ne.s32.totalorder %s23, %s26
    %p35 = scmp.eq.s32.totalorder %s18, 1
    %p36 = por %p34, %p35
    %p37 = scmp.ne.s32.totalorder %s26, %s27
    %p38 = scmp.eq.s32.totalorder %s18, 0
    %p39 = por %p37, %p38
    %p40 = scmp.ne.s32.totalorder %s26, %s27
    %p41 = scmp.eq.s32.totalorder %s19, 1
    %p42 = por %p40, %p41
    %p44 = scmp.ne.s32.totalorder %s27, %s43
    %p45 = scmp.eq.s32.totalorder %s19, 0
    %p46 = por %p44, %p45
    %s47 = ssub.s32 %s13, %s20
    %p48 = scmp.eq.s32.totalorder %s47, 0
    %s50 = sadd.s32 %s49, 1
    %s51 = scalar_select %p48, %s49, %s50
    %p54 = pneg %p48
    %p55 = scmp.eq.s32.totalorder %s13, 1
    %p56 = por %p54, %p55
    %p57 = scmp.ne.s32.totalorder %s49, %s52
    %p58 = scmp.eq.s32.totalorder %s13, 0
    %p59 = por %p57, %p58
    %p60 = scmp.ne.s32.totalorder %s49, %s52
    %p61 = scmp.eq.s32.totalorder %s18, 1
    %p62 = por %p60, %p61
    %p63 = scmp.ne.s32.totalorder %s52, %s53
    %p64 = scmp.eq.s32.totalorder %s18, 0
    %p65 = por %p63, %p64
    %p66 = scmp.ne.s32.totalorder %s52, %s53
    %p67 = scmp.eq.s32.totalorder %s19, 1
    %p68 = por %p66, %p67
    %p70 = scmp.ne.s32.totalorder %s53, %s69
    %p71 = scmp.eq.s32.totalorder %s19, 0
    %p72 = por %p70, %p71
    %s73 = ssub.s32 %s13, %s20
    %p74 = scmp.eq.s32.totalorder %s73, 0
    %s76 = sadd.s32 %s75, 1
    %s77 = scalar_select %p74, %s75, %s76
    %p80 = pneg %p74
    %p81 = scmp.eq.s32.totalorder %s13, 1
    %p82 = por %p80, %p81
    %p83 = scmp.ne.s32.totalorder %s75, %s78
    %p84 = scmp.eq.s32.totalorder %s13, 0
    %p85 = por %p83, %p84
    %p86 = scmp.ne.s32.totalorder %s75, %s78
    %p87 = scmp.eq.s32.totalorder %s18, 1
    %p88 = por %p86, %p87
    %p89 = scmp.ne.s32.totalorder %s78, %s79
    %p90 = scmp.eq.s32.totalorder %s18, 0
    %p91 = por %p89, %p90
    %p92 = scmp.ne.s32.totalorder %s78, %s79
    %p93 = scmp.eq.s32.totalorder %s19, 1
    %p94 = por %p92, %p93
    %p96 = scmp.ne.s32.totalorder %s79, %s95
    %p97 = scmp.eq.s32.totalorder %s19, 0
    %p98 = por %p96, %p97
    %s100 = sadd.s32 %s99, 1
    %p103 = scmp.eq.s32.totalorder %s13, 1
    %p104 = scmp.ne.s32.totalorder %s99, %s101
    %p105 = scmp.eq.s32.totalorder %s13, 0
    %p106 = por %p104, %p105
    %p107 = scmp.ne.s32.totalorder %s99, %s101
    %p108 = scmp.eq.s32.totalorder %s18, 1
    %p109 = por %p107, %p108
    %p110 = scmp.ne.s32.totalorder %s101, %s102
    %p111 = scmp.eq.s32.totalorder %s18, 0
    %p112 = por %p110, %p111
    %p113 = scmp.ne.s32.totalorder %s101, %s102
    %p114 = scmp.eq.s32.totalorder %s19, 1
    %p115 = por %p113, %p114
    %p117 = scmp.ne.s32.totalorder %s102, %s116
    %p118 = scmp.eq.s32.totalorder %s19, 0
    %p119 = por %p117, %p118
    %s121 = sadd.s32 %s120, 1
    %p124 = scmp.eq.s32.totalorder %s13, 1
    %p125 = scmp.ne.s32.totalorder %s120, %s122
    %p126 = scmp.eq.s32.totalorder %s13, 0
    %p127 = por %p125, %p126
    %p128 = scmp.ne.s32.totalorder %s120, %s122
    %p129 = scmp.eq.s32.totalorder %s18, 1
    %p130 = por %p128, %p129
    %p131 = scmp.ne.s32.totalorder %s122, %s123
    %p132 = scmp.eq.s32.totalorder %s18, 0
    %p133 = por %p131, %p132
    %p134 = scmp.ne.s32.totalorder %s122, %s123
    %p135 = scmp.eq.s32.totalorder %s19, 1
    %p136 = por %p134, %p135
    %p138 = scmp.ne.s32.totalorder %s123, %s137
    %p139 = scmp.eq.s32.totalorder %s19, 0
    %p140 = por %p138, %p139
    %s141 = ssub.s32 %s13, %s20
    %p142 = scmp.eq.s32.totalorder %s141, 0
    %s144 = sadd.s32 %s143, 1
    %s145 = scalar_select %p142, %s143, %s144
    %p148 = pneg %p142
    %p149 = scmp.eq.s32.totalorder %s13, 1
    %p150 = por %p148, %p149
    %p151 = scmp.ne.s32.totalorder %s143, %s146
    %p152 = scmp.eq.s32.totalorder %s13, 0
    %p153 = por %p151, %p152
    %p154 = scmp.ne.s32.totalorder %s143, %s146
    %p155 = scmp.eq.s32.totalorder %s18, 1
    %p156 = por %p154, %p155
    %p157 = scmp.ne.s32.totalorder %s146, %s147
    %p158 = scmp.eq.s32.totalorder %s18, 0
    %p159 = por %p157, %p158
    %p160 = scmp.ne.s32.totalorder %s146, %s147
    %p161 = scmp.eq.s32.totalorder %s19, 1
    %p162 = por %p160, %p161
    %p164 = scmp.ne.s32.totalorder %s147, %s163
    %p165 = scmp.eq.s32.totalorder %s19, 0
    %p166 = por %p164, %p165
    %s167 = ssub.s32 %s13, %s20
    %p168 = scmp.eq.s32.totalorder %s167, 0
    %s170 = sadd.s32 %s169, 1
    %s171 = scalar_select %p168, %s169, %s170
    %p174 = pneg %p168
    %p175 = scmp.eq.s32.totalorder %s13, 1
    %p176 = por %p174, %p175
    %p177 = scmp.ne.s32.totalorder %s169, %s172
    %p178 = scmp.eq.s32.totalorder %s13, 0
    %p179 = por %p177, %p178
    %p180 = scmp.ne.s32.totalorder %s169, %s172
    %p181 = scmp.eq.s32.totalorder %s18, 1
    %p182 = por %p180, %p181
    %p183 = scmp.ne.s32.totalorder %s172, %s173
    %p184 = scmp.eq.s32.totalorder %s18, 0
    %p185 = por %p183, %p184
    %p186 = scmp.ne.s32.totalorder %s172, %s173
    %p187 = scmp.eq.s32.totalorder %s19, 1
    %p188 = por %p186, %p187
    %p190 = scmp.ne.s32.totalorder %s173, %s189
    %p191 = scmp.eq.s32.totalorder %s19, 0
    %p192 = por %p190, %p191
    %p193 = scmp.le.s32.totalorder 1, %s13
    %p194 = scmp.lt.s32.totalorder %s13, 3
    %p195 = pnand %p193, %p194
    %p196 = pneg %p195
    // Predicated region
    $region9: #{tpu_custom_call.1} parent=5 // pred_check
      _
    $region10: #{tpu_custom_call.1} parent=5 // pred_check_branch
      %198 = sbr.rel (%p195) target = $region12
    $region11: #{tpu_custom_call.1} parent=5 // pred_region
      %s199 = ssub.s32 %s13, 1
      // Predicated region
      $region13: #{tpu_custom_call.1} parent=11 // pred_check
        %p200 = pneg %p112
      $region14: #{tpu_custom_call.1} parent=11 // pred_check_branch
        %202 = sbr.rel (%p200) target = $region16
      $region15: #{tpu_custom_call.1} parent=11 // pred_region
        _
      $region16: #{tpu_custom_call.1} parent=11 // pred_fallthru
        _
      // Predicated region
      $region17: #{tpu_custom_call.1} parent=11 // pred_check
        %p203 = pneg %p133
      $region18: #{tpu_custom_call.1} parent=11 // pred_check_branch
        %205 = sbr.rel (%p203) target = $region20
      $region19: #{tpu_custom_call.1} parent=11 // pred_region
        _
      $region20: #{tpu_custom_call.1} parent=11 // pred_fallthru
        _
    $region12: #{tpu_custom_call.1} parent=5 // pred_fallthru
      _
    %p206 = scmp.lt.s32.totalorder %s13, 2
    // Predicated region
    $region21: #{tpu_custom_call.1} parent=5 // pred_check
      %p207 = pneg %p206
    $region22: #{tpu_custom_call.1} parent=5 // pred_check_branch
      %209 = sbr.rel (%p207) target = $region24
    $region23: #{tpu_custom_call.1} parent=5 // pred_region
      // Predicated region
      $region25: #{tpu_custom_call.1} parent=23 // pred_check
        %p210 = pneg %p33
      $region26: #{tpu_custom_call.1} parent=23 // pred_check_branch
        %212 = sbr.rel (%p210) target = $region28
      $region27: #{tpu_custom_call.1} parent=23 // pred_region
        %p213 = scmp.lt.s32.totalorder %s13, 1
        %s214 = scalar_select %p213, %s13, 1
        %s215 = smul.addr %s214, 32
        %s216 = smul.addr %s215, 8
        %s217 = scalar_lea.vmem %s0, %s216
      $region28: #{tpu_custom_call.1} parent=23 // pred_fallthru
        _
      // Predicated region
      $region29: #{tpu_custom_call.1} parent=23 // pred_check
        %p218 = pneg %p59
      $region30: #{tpu_custom_call.1} parent=23 // pred_check_branch
        %220 = sbr.rel (%p218) target = $region32
      $region31: #{tpu_custom_call.1} parent=23 // pred_region
        %p221 = scmp.lt.s32.totalorder %s13, 1
        %s222 = scalar_select %p221, %s13, 1
        %s223 = smul.addr %s222, 32
        %s224 = smul.addr %s223, 8
        %s225 = scalar_lea.vmem %s1, %s224
      $region32: #{tpu_custom_call.1} parent=23 // pred_fallthru
        _
      // Predicated region
      $region33: #{tpu_custom_call.1} parent=23 // pred_check
        %p226 = pneg %p85
      $region34: #{tpu_custom_call.1} parent=23 // pred_check_branch
        %228 = sbr.rel (%p226) target = $region36
      $region35: #{tpu_custom_call.1} parent=23 // pred_region
        %s229 = smul.u32 32, %s13
        %p230 = scmp.lt.s32.totalorder %s229, 63
        %s231 = scalar_select %p230, %s229, 63
        %s232 = smul.addr %s231, 8
        %s233 = scalar_lea.vmem %s2, %s232
        %s234 = smul.u32 32, %s13
      $region36: #{tpu_custom_call.1} parent=23 // pred_fallthru
        _
    $region24: #{tpu_custom_call.1} parent=5 // pred_fallthru
      _
    %p235 = scmp.le.s32.totalorder 1, %s13
    %p236 = scmp.lt.s32.totalorder %s13, 3
    %p237 = pnand %p235, %p236
    %p238 = pneg %p237
    // Predicated region
    $region37: #{tpu_custom_call.1} parent=5 // pred_check
      _
    $region38: #{tpu_custom_call.1} parent=5 // pred_check_branch
      %240 = sbr.rel (%p237) target = $region40
    $region39: #{tpu_custom_call.1} parent=5 // pred_region
      %s241 = ssub.s32 %s13, 1
      %p242 = scmp.lt.s32.totalorder %s18, 1
      %s243 = scalar_select %p242, %s18, 1
      %s244 = smul.addr %s243, 32
      %s245 = smul.addr %s244, 8
      %s246 = scalar_lea.vmem %s0, %s245
      %p247 = pneg %p39
      %p248 = pneg %p36
      %p249 = scmp.lt.s32.totalorder %s18, 1
      %s250 = scalar_select %p249, %s18, 1
      %s251 = smul.addr %s250, 32
      %s252 = smul.addr %s251, 8
      %s253 = scalar_lea.vmem %s1, %s252
      %p254 = pneg %p65
      %p255 = pneg %p62
      %s256 = smul.u32 32, %s18
      %p257 = scmp.lt.s32.totalorder %s256, 63
      %s258 = scalar_select %p257, %s256, 63
      %s259 = smul.addr %s258, 8
      %s260 = scalar_lea.vmem %s2, %s259
      %p261 = pneg %p91
      %p262 = pneg %p88
      %p263 = pneg %p112
      %p264 = pneg %p109
      %p265 = pneg %p133
      %p266 = pneg %p130
      %p267 = pneg %p159
      %p268 = pneg %p156
      %s269 = smul.u32 32, %s18
      %p270 = scmp.lt.s32.totalorder %s269, 63
      %s271 = scalar_select %p270, %s269, 63
      %s272 = smul.addr %s271, 8
      %s273 = scalar_lea.vmem %s5, %s272
      %p274 = pneg %p185
      %p275 = pneg %p182
      %s276 = smul.u32 32, %s18
      %p277 = scmp.lt.s32.totalorder %s276, 63
      %s278 = scalar_select %p277, %s276, 63
      %s279 = smul.addr %s278, 8
      %s280 = scalar_lea.vmem %s6, %s279
      %p281 = scmp.lt.s32.totalorder %s18, 1
      %s282 = scalar_select %p281, %s18, 1
      %s283 = smul.addr %s282, 32
      %s284 = smul.addr %s283, 8
      %s285 = scalar_lea.vmem %s0, %s284
      %p286 = scmp.lt.s32.totalorder %s18, 1
      %s287 = scalar_select %p286, %s18, 1
      %s288 = smul.addr %s287, 32
      %s289 = smul.addr %s288, 8
      %s290 = scalar_lea.vmem %s1, %s289
      %s291 = smul.u32 32, %s18
      %p292 = scmp.lt.s32.totalorder %s291, 63
      %s293 = scalar_select %p292, %s291, 63
      %s294 = smul.addr %s293, 8
      %s295 = scalar_lea.vmem %s2, %s294
      %s296 = smul.u32 32, %s18
      %s297 = smul.u32 32, %s18
      %p298 = scmp.lt.s32.totalorder %s297, 63
      %s299 = scalar_select %p298, %s297, 63
      %s300 = smul.addr %s299, 8
      %s301 = scalar_lea.vmem %s5, %s300
      %s302 = smul.u32 32, %s18
      %s303 = smul.u32 32, %s18
      %p304 = scmp.lt.s32.totalorder %s303, 63
      %s305 = scalar_select %p304, %s303, 63
      %s306 = smul.addr %s305, 8
      %s307 = scalar_lea.vmem %s6, %s306
      %s308 = smul.u32 32, %s18
      %310 = vst [vmem:[#allocation2] sm:$0xf] 0
      %311 = vst [vmem:[#allocation2 + $0x4] sm:$0xf] 0
      %312 = vst [vmem:[#allocation2 + $0x8] sm:$0x1] 0
      %313 = vst [vmem:[#allocation2 + $0xc] sm:$0xf] 0
      %314 = vst [vmem:[#allocation2 + $0x10] sm:$0xf] 0
      %315 = vst [vmem:[#allocation2 + $0x14] sm:$0x1] 0
      %316 = vst [vmem:[#allocation2 + $0x18] sm:$0xf] 0
      %317 = vst [vmem:[#allocation2 + $0x1c] sm:$0xf] 0
      %318 = vst [vmem:[#allocation2 + $0x20] sm:$0x1] 0
      %319 = vst [vmem:[#allocation2 + $0x24] sm:$0xf] 0
      %320 = vst [vmem:[#allocation2 + $0x28] sm:$0xf] 0
      %321 = vst [vmem:[#allocation2 + $0x2c] sm:$0x1] 0
      %322 = vst [vmem:[#allocation2 + $0x30] sm:$0xf] 0
      %323 = vst [vmem:[#allocation2 + $0x34] sm:$0xf] 0
      %324 = vst [vmem:[#allocation2 + $0x38] sm:$0x1] 0
      %325 = vst [vmem:[#allocation2 + $0x3c] sm:$0xf] 0
      %326 = vst [vmem:[#allocation2 + $0x40] sm:$0xf] 0
      %327 = vst [vmem:[#allocation2 + $0x44] sm:$0x1] 0
      %328 = vst [vmem:[#allocation2 + $0x48] sm:$0xf] 0
      %329 = vst [vmem:[#allocation2 + $0x4c] sm:$0xf] 0
      %330 = vst [vmem:[#allocation2 + $0x50] sm:$0x1] 0
      %331 = vst [vmem:[#allocation2 + $0x54] sm:$0xf] 0
      %332 = vst [vmem:[#allocation2 + $0x58] sm:$0xf] 0
      %333 = vst [vmem:[#allocation2 + $0x5c] sm:$0x1] 0
      %334 = vst [vmem:[#allocation2 + $0x60] sm:$0xf] 0
      %335 = vst [vmem:[#allocation2 + $0x64] sm:$0xf] 0
      %336 = vst [vmem:[#allocation2 + $0x68] sm:$0x1] 0
      %337 = vst [vmem:[#allocation2 + $0x6c] sm:$0xf] 0
      %338 = vst [vmem:[#allocation2 + $0x70] sm:$0xf] 0
      %339 = vst [vmem:[#allocation2 + $0x74] sm:$0x1] 0
      %340 = vst [vmem:[#allocation2 + $0x78] sm:$0xf] 0
      %341 = vst [vmem:[#allocation2 + $0x7c] sm:$0xf] 0
      %342 = vst [vmem:[#allocation2 + $0x80] sm:$0x1] 0
      %343 = vst [vmem:[#allocation2 + $0x84] sm:$0xf] 0
      %344 = vst [vmem:[#allocation2 + $0x88] sm:$0xf] 0
      %345 = vst [vmem:[#allocation2 + $0x8c] sm:$0x1] 0
      %346 = vst [vmem:[#allocation2 + $0x90] sm:$0xf] 0
      %347 = vst [vmem:[#allocation2 + $0x94] sm:$0xf] 0
      %348 = vst [vmem:[#allocation2 + $0x98] sm:$0x1] 0
      %349 = vst [vmem:[#allocation2 + $0x9c] sm:$0xf] 0
      %350 = vst [vmem:[#allocation2 + $0xa0] sm:$0xf] 0
      %351 = vst [vmem:[#allocation2 + $0xa4] sm:$0x1] 0
      %352 = vst [vmem:[#allocation2 + $0xa8] sm:$0xf] 0
      %353 = vst [vmem:[#allocation2 + $0xac] sm:$0xf] 0
      %354 = vst [vmem:[#allocation2 + $0xb0] sm:$0x1] 0
      %355 = vst [vmem:[#allocation2 + $0xb4] sm:$0xf] 0
      %356 = vst [vmem:[#allocation2 + $0xb8] sm:$0xf] 0
      %357 = vst [vmem:[#allocation2 + $0xbc] sm:$0x1] 0
      %358 = vst [vmem:[#allocation2 + $0xc0] sm:$0xf] 0
      %359 = vst [vmem:[#allocation2 + $0xc4] sm:$0xf] 0
      %360 = vst [vmem:[#allocation2 + $0xc8] sm:$0x1] 0
      %361 = vst [vmem:[#allocation2 + $0xcc] sm:$0xf] 0
      %362 = vst [vmem:[#allocation2 + $0xd0] sm:$0xf] 0
      %363 = vst [vmem:[#allocation2 + $0xd4] sm:$0x1] 0
      %v364 = vld [vmem:[%s285] sm:$0xff]
      %v365 = vld [vmem:[%s285 + $0x8] sm:$0xff]
      %v366 = vld [vmem:[%s285 + $0x10] sm:$0xff]
      %v367 = vld [vmem:[%s285 + $0x18] sm:$0xff]
      %v368 = vld [vmem:[%s285 + $0x20] sm:$0xff]
      %v369 = vld [vmem:[%s285 + $0x28] sm:$0xff]
      %v370 = vld [vmem:[%s285 + $0x30] sm:$0xff]
      %v371 = vld [vmem:[%s285 + $0x38] sm:$0xff]
      %v372 = vld [vmem:[%s285 + $0x40] sm:$0xff]
      %v373 = vld [vmem:[%s285 + $0x48] sm:$0xff]
      %v374 = vld [vmem:[%s285 + $0x50] sm:$0xff]
      %v375 = vld [vmem:[%s285 + $0x58] sm:$0xff]
      %v376 = vld [vmem:[%s285 + $0x60] sm:$0xff]
      %v377 = vld [vmem:[%s285 + $0x68] sm:$0xff]
      %v378 = vld [vmem:[%s285 + $0x70] sm:$0xff]
      %v379 = vld [vmem:[%s285 + $0x78] sm:$0xff]
      %v380 = vld [vmem:[%s285 + $0x80] sm:$0xff]
      %v381 = vld [vmem:[%s285 + $0x88] sm:$0xff]
      %v382 = vld [vmem:[%s285 + $0x90] sm:$0xff]
      %v383 = vld [vmem:[%s285 + $0x98] sm:$0xff]
      %v384 = vld [vmem:[%s285 + $0xa0] sm:$0xff]
      %v385 = vld [vmem:[%s285 + $0xa8] sm:$0xff]
      %v386 = vld [vmem:[%s285 + $0xb0] sm:$0xff]
      %v387 = vld [vmem:[%s285 + $0xb8] sm:$0xff]
      %v388 = vld [vmem:[%s285 + $0xc0] sm:$0xff]
      %v389 = vld [vmem:[%s285 + $0xc8] sm:$0xff]
      %v390 = vld [vmem:[%s285 + $0xd0] sm:$0xff]
      %v391 = vld [vmem:[%s285 + $0xd8] sm:$0xff]
      %v392 = vld [vmem:[%s285 + $0xe0] sm:$0xff]
      %v393 = vld [vmem:[%s285 + $0xe8] sm:$0xff]
      %v394 = vld [vmem:[%s285 + $0xf0] sm:$0xff]
      %v395 = vld [vmem:[%s285 + $0xf8] sm:$0xff]
      %v396 = vpack.c.bf16 %v365, %v364
      %v397 = vpack.c.bf16 %v367, %v366
      %v398 = vpack.c.bf16 %v369, %v368
      %v399 = vpack.c.bf16 %v371, %v370
      %v400 = vpack.c.bf16 %v373, %v372
      %v401 = vpack.c.bf16 %v375, %v374
      %v402 = vpack.c.bf16 %v377, %v376
      %v403 = vpack.c.bf16 %v379, %v378
      %v404 = vpack.c.bf16 %v381, %v380
      %v405 = vpack.c.bf16 %v383, %v382
      %v406 = vpack.c.bf16 %v385, %v384
      %v407 = vpack.c.bf16 %v387, %v386
      %v408 = vpack.c.bf16 %v389, %v388
      %v409 = vpack.c.bf16 %v391, %v390
      %v410 = vpack.c.bf16 %v393, %v392
      %v411 = vpack.c.bf16 %v395, %v394
      %v428 = vunpack.c.l.b16 %v396
      %v429 = vunpack.c.h.b16 %v396
      %v430 = vunpack.c.l.b16 %v397
      %v431 = vunpack.c.h.b16 %v397
      %v432 = vunpack.c.l.b16 %v398
      %v433 = vunpack.c.h.b16 %v398
      %v434 = vunpack.c.l.b16 %v399
      %v435 = vunpack.c.h.b16 %v399
      %v436 = vunpack.c.l.b16 %v400
      %v437 = vunpack.c.h.b16 %v400
      %v438 = vunpack.c.l.b16 %v401
      %v439 = vunpack.c.h.b16 %v401
      %v440 = vunpack.c.l.b16 %v402
      %v441 = vunpack.c.h.b16 %v402
      %v442 = vunpack.c.l.b16 %v403
      %v443 = vunpack.c.h.b16 %v403
      %v444 = vunpack.c.l.b16 %v404
      %v445 = vunpack.c.h.b16 %v404
      %v446 = vunpack.c.l.b16 %v405
      %v447 = vunpack.c.h.b16 %v405
      %v448 = vunpack.c.l.b16 %v406
      %v449 = vunpack.c.h.b16 %v406
      %v450 = vunpack.c.l.b16 %v407
      %v451 = vunpack.c.h.b16 %v407
      %v452 = vunpack.c.l.b16 %v408
      %v453 = vunpack.c.h.b16 %v408
      %v454 = vunpack.c.l.b16 %v409
      %v455 = vunpack.c.h.b16 %v409
      %v456 = vunpack.c.l.b16 %v410
      %v457 = vunpack.c.h.b16 %v410
      %v458 = vunpack.c.l.b16 %v411
      %v459 = vunpack.c.h.b16 %v411
      %v460 = vpack.c.b16 %v428, %v428
      %v461 = vpack.c.b16 %v429, %v429
      %v462 = vpack.c.b16 %v430, %v430
      %v463 = vpack.c.b16 %v431, %v431
      %v464 = vpack.c.b16 %v432, %v432
      %v465 = vpack.c.b16 %v433, %v433
      %v466 = vpack.c.b16 %v434, %v434
      %v467 = vpack.c.b16 %v435, %v435
      %v468 = vpack.c.b16 %v436, %v436
      %v469 = vpack.c.b16 %v437, %v437
      %v470 = vpack.c.b16 %v438, %v438
      %v471 = vpack.c.b16 %v439, %v439
      %v472 = vpack.c.b16 %v440, %v440
      %v473 = vpack.c.b16 %v441, %v441
      %v474 = vpack.c.b16 %v442, %v442
      %v475 = vpack.c.b16 %v443, %v443
      %v476 = vpack.c.b16 %v444, %v444
      %v477 = vpack.c.b16 %v445, %v445
      %v478 = vpack.c.b16 %v446, %v446
      %v479 = vpack.c.b16 %v447, %v447
      %v480 = vpack.c.b16 %v448, %v448
      %v481 = vpack.c.b16 %v449, %v449
      %v482 = vpack.c.b16 %v450, %v450
      %v483 = vpack.c.b16 %v451, %v451
      %v484 = vpack.c.b16 %v452, %v452
      %v485 = vpack.c.b16 %v453, %v453
      %v486 = vpack.c.b16 %v454, %v454
      %v487 = vpack.c.b16 %v455, %v455
      %v488 = vpack.c.b16 %v456, %v456
      %v489 = vpack.c.b16 %v457, %v457
      %v490 = vpack.c.b16 %v458, %v458
      %v491 = vpack.c.b16 %v459, %v459
      %vm492 = vsmask.f32 256
      %vm493 = vsmask.f32 4368
      %vm494 = vmor %vm492, %vm493
      %v496 = vshrl.u32 %v460, 16
      %v498 = vrot.slane %v496, 7
      %v499 = vshll.u32 %v460, 16
      %v501 = vor.u32 %v498, %v499
      %v502 = vrot.slane %v498, 4
      %v504 = vshrl.u32 %v461, 16
      %v506 = vrot.slane %v504, 7
      %v507 = vshll.u32 %v461, 16
      %v509 = vor.u32 %v506, %v507
      %v510 = vsel %vm494, %v502, %v509
      %v511 = vrot.slane %v506, 4
      %v513 = vshrl.u32 %v462, 16
      %v515 = vrot.slane %v513, 7
      %v516 = vshll.u32 %v462, 16
      %v518 = vor.u32 %v515, %v516
      %v519 = vrot.slane %v515, 4
      %v521 = vshrl.u32 %v463, 16
      %v523 = vrot.slane %v521, 7
      %v524 = vshll.u32 %v463, 16
      %v526 = vor.u32 %v523, %v524
      %v527 = vsel %vm494, %v519, %v526
      %v528 = vrot.slane %v523, 4
      %v530 = vshrl.u32 %v464, 16
      %v532 = vrot.slane %v530, 7
      %v533 = vshll.u32 %v464, 16
      %v535 = vor.u32 %v532, %v533
      %v536 = vrot.slane %v532, 4
      %v538 = vshrl.u32 %v465, 16
      %v540 = vrot.slane %v538, 7
      %v541 = vshll.u32 %v465, 16
      %v543 = vor.u32 %v540, %v541
      %v544 = vsel %vm494, %v536, %v543
      %v545 = vrot.slane %v540, 4
      %v547 = vshrl.u32 %v466, 16
      %v549 = vrot.slane %v547, 7
      %v550 = vshll.u32 %v466, 16
      %v552 = vor.u32 %v549, %v550
      %v553 = vrot.slane %v549, 4
      %v555 = vshrl.u32 %v467, 16
      %v557 = vrot.slane %v555, 7
      %v558 = vshll.u32 %v467, 16
      %v560 = vor.u32 %v557, %v558
      %v561 = vsel %vm494, %v553, %v560
      %v562 = vrot.slane %v557, 4
      %v564 = vshrl.u32 %v468, 16
      %v566 = vrot.slane %v564, 7
      %v567 = vshll.u32 %v468, 16
      %v569 = vor.u32 %v566, %v567
      %v570 = vrot.slane %v566, 4
      %v572 = vshrl.u32 %v469, 16
      %v574 = vrot.slane %v572, 7
      %v575 = vshll.u32 %v469, 16
      %v577 = vor.u32 %v574, %v575
      %v578 = vsel %vm494, %v570, %v577
      %v579 = vrot.slane %v574, 4
      %v581 = vshrl.u32 %v470, 16
      %v583 = vrot.slane %v581, 7
      %v584 = vshll.u32 %v470, 16
      %v586 = vor.u32 %v583, %v584
      %v587 = vrot.slane %v583, 4
      %v589 = vshrl.u32 %v471, 16
      %v591 = vrot.slane %v589, 7
      %v592 = vshll.u32 %v471, 16
      %v594 = vor.u32 %v591, %v592
      %v595 = vsel %vm494, %v587, %v594
      %v596 = vrot.slane %v591, 4
      %v598 = vshrl.u32 %v472, 16
      %v600 = vrot.slane %v598, 7
      %v601 = vshll.u32 %v472, 16
      %v603 = vor.u32 %v600, %v601
      %v604 = vrot.slane %v600, 4
      %v606 = vshrl.u32 %v473, 16
      %v608 = vrot.slane %v606, 7
      %v609 = vshll.u32 %v473, 16
      %v611 = vor.u32 %v608, %v609
      %v612 = vsel %vm494, %v604, %v611
      %v613 = vrot.slane %v608, 4
      %v615 = vshrl.u32 %v474, 16
      %v617 = vrot.slane %v615, 7
      %v618 = vshll.u32 %v474, 16
      %v620 = vor.u32 %v617, %v618
      %v621 = vrot.slane %v617, 4
      %v623 = vshrl.u32 %v475, 16
      %v625 = vrot.slane %v623, 7
      %v626 = vshll.u32 %v475, 16
      %v628 = vor.u32 %v625, %v626
      %v629 = vsel %vm494, %v621, %v628
      %v630 = vrot.slane %v625, 4
      %v632 = vshrl.u32 %v476, 16
      %v634 = vrot.slane %v632, 7
      %v635 = vshll.u32 %v476, 16
      %v637 = vor.u32 %v634, %v635
      %v638 = vrot.slane %v634, 4
      %v640 = vshrl.u32 %v477, 16
      %v642 = vrot.slane %v640, 7
      %v643 = vshll.u32 %v477, 16
      %v645 = vor.u32 %v642, %v643
      %v646 = vsel %vm494, %v638, %v645
      %v647 = vrot.slane %v642, 4
      %v649 = vshrl.u32 %v478, 16
      %v651 = vrot.slane %v649, 7
      %v652 = vshll.u32 %v478, 16
      %v654 = vor.u32 %v651, %v652
      %v655 = vrot.slane %v651, 4
      %v657 = vshrl.u32 %v479, 16
      %v659 = vrot.slane %v657, 7
      %v660 = vshll.u32 %v479, 16
      %v662 = vor.u32 %v659, %v660
      %v663 = vsel %vm494, %v655, %v662
      %v664 = vrot.slane %v659, 4
      %v666 = vshrl.u32 %v480, 16
      %v668 = vrot.slane %v666, 7
      %v669 = vshll.u32 %v480, 16
      %v671 = vor.u32 %v668, %v669
      %v672 = vrot.slane %v668, 4
      %v674 = vshrl.u32 %v481, 16
      %v676 = vrot.slane %v674, 7
      %v677 = vshll.u32 %v481, 16
      %v679 = vor.u32 %v676, %v677
      %v680 = vsel %vm494, %v672, %v679
      %v681 = vrot.slane %v676, 4
      %v683 = vshrl.u32 %v482, 16
      %v685 = vrot.slane %v683, 7
      %v686 = vshll.u32 %v482, 16
      %v688 = vor.u32 %v685, %v686
      %v689 = vrot.slane %v685, 4
      %v691 = vshrl.u32 %v483, 16
      %v693 = vrot.slane %v691, 7
      %v694 = vshll.u32 %v483, 16
      %v696 = vor.u32 %v693, %v694
      %v697 = vsel %vm494, %v689, %v696
      %v698 = vrot.slane %v693, 4
      %v700 = vshrl.u32 %v484, 16
      %v702 = vrot.slane %v700, 7
      %v703 = vshll.u32 %v484, 16
      %v705 = vor.u32 %v702, %v703
      %v706 = vrot.slane %v702, 4
      %v708 = vshrl.u32 %v485, 16
      %v710 = vrot.slane %v708, 7
      %v711 = vshll.u32 %v485, 16
      %v713 = vor.u32 %v710, %v711
      %v714 = vsel %vm494, %v706, %v713
      %v715 = vrot.slane %v710, 4
      %v717 = vshrl.u32 %v486, 16
      %v719 = vrot.slane %v717, 7
      %v720 = vshll.u32 %v486, 16
      %v722 = vor.u32 %v719, %v720
      %v723 = vrot.slane %v719, 4
      %v725 = vshrl.u32 %v487, 16
      %v727 = vrot.slane %v725, 7
      %v728 = vshll.u32 %v487, 16
      %v730 = vor.u32 %v727, %v728
      %v731 = vsel %vm494, %v723, %v730
      %v732 = vrot.slane %v727, 4
      %v734 = vshrl.u32 %v488, 16
      %v736 = vrot.slane %v734, 7
      %v737 = vshll.u32 %v488, 16
      %v739 = vor.u32 %v736, %v737
      %v740 = vrot.slane %v736, 4
      %v742 = vshrl.u32 %v489, 16
      %v744 = vrot.slane %v742, 7
      %v745 = vshll.u32 %v489, 16
      %v747 = vor.u32 %v744, %v745
      %v748 = vsel %vm494, %v740, %v747
      %v749 = vrot.slane %v744, 4
      %v751 = vshrl.u32 %v490, 16
      %v753 = vrot.slane %v751, 7
      %v754 = vshll.u32 %v490, 16
      %v756 = vor.u32 %v753, %v754
      %v757 = vrot.slane %v753, 4
      %v759 = vshrl.u32 %v491, 16
      %v761 = vrot.slane %v759, 7
      %v762 = vshll.u32 %v491, 16
      %v764 = vor.u32 %v761, %v762
      %v765 = vsel %vm494, %v757, %v764
      %v766 = vrot.slane %v761, 4
      %s815 = scalar_lea.vmem [#allocation2], 12
      %vm816 = vcmask 27648
      %vm817 = vsmask.f32 7938
      %vm818 = vmand %vm816, %vm817
      %v819 = vld [vmem:[%s815] sm:$0xf]
      %v820 = vsel %vm818, %v501, %v819
      %821 = vst [vmem:[%s815] sm:$0xf] %v820
      %vm822 = vcmask 27648
      %823 = vst.msk [vmem:[%s815 + $0x4] sm:$0xf] %vm822, %v510
      %vm824 = vcmask 24576
      %vm825 = vmand %vm824, %vm492
      %v826 = vld [vmem:[%s815 + $0x8] sm:$0x1]
      %v827 = vsel %vm825, %v511, %v826
      %828 = vst [vmem:[%s815 + $0x8] sm:$0x1] %v827
      %v829 = vld [vmem:[%s815 + $0xc] sm:$0xf]
      %v830 = vsel %vm818, %v518, %v829
      %831 = vst [vmem:[%s815 + $0xc] sm:$0xf] %v830
      %832 = vst.msk [vmem:[%s815 + $0x10] sm:$0xf] %vm822, %v527
      %v833 = vld [vmem:[%s815 + $0x14] sm:$0x1]
      %v834 = vsel %vm825, %v528, %v833
      %835 = vst [vmem:[%s815 + $0x14] sm:$0x1] %v834
      %v836 = vld [vmem:[%s815 + $0x18] sm:$0xf]
      %v837 = vsel %vm818, %v535, %v836
      %838 = vst [vmem:[%s815 + $0x18] sm:$0xf] %v837
      %839 = vst.msk [vmem:[%s815 + $0x1c] sm:$0xf] %vm822, %v544
      %v840 = vld [vmem:[%s815 + $0x20] sm:$0x1]
      %v841 = vsel %vm825, %v545, %v840
      %842 = vst [vmem:[%s815 + $0x20] sm:$0x1] %v841
      %v843 = vld [vmem:[%s815 + $0x24] sm:$0xf]
      %v844 = vsel %vm818, %v552, %v843
      %845 = vst [vmem:[%s815 + $0x24] sm:$0xf] %v844
      %846 = vst.msk [vmem:[%s815 + $0x28] sm:$0xf] %vm822, %v561
      %v847 = vld [vmem:[%s815 + $0x2c] sm:$0x1]
      %v848 = vsel %vm825, %v562, %v847
      %849 = vst [vmem:[%s815 + $0x2c] sm:$0x1] %v848
      %v850 = vld [vmem:[%s815 + $0x30] sm:$0xf]
      %v851 = vsel %vm818, %v569, %v850
      %852 = vst [vmem:[%s815 + $0x30] sm:$0xf] %v851
      %853 = vst.msk [vmem:[%s815 + $0x34] sm:$0xf] %vm822, %v578
      %v854 = vld [vmem:[%s815 + $0x38] sm:$0x1]
      %v855 = vsel %vm825, %v579, %v854
      %856 = vst [vmem:[%s815 + $0x38] sm:$0x1] %v855
      %v857 = vld [vmem:[%s815 + $0x3c] sm:$0xf]
      %v858 = vsel %vm818, %v586, %v857
      %859 = vst [vmem:[%s815 + $0x3c] sm:$0xf] %v858
      %860 = vst.msk [vmem:[%s815 + $0x40] sm:$0xf] %vm822, %v595
      %v861 = vld [vmem:[%s815 + $0x44] sm:$0x1]
      %v862 = vsel %vm825, %v596, %v861
      %863 = vst [vmem:[%s815 + $0x44] sm:$0x1] %v862
      %v864 = vld [vmem:[%s815 + $0x48] sm:$0xf]
      %v865 = vsel %vm818, %v603, %v864
      %866 = vst [vmem:[%s815 + $0x48] sm:$0xf] %v865
      %867 = vst.msk [vmem:[%s815 + $0x4c] sm:$0xf] %vm822, %v612
      %v868 = vld [vmem:[%s815 + $0x50] sm:$0x1]
      %v869 = vsel %vm825, %v613, %v868
      %870 = vst [vmem:[%s815 + $0x50] sm:$0x1] %v869
      %v871 = vld [vmem:[%s815 + $0x54] sm:$0xf]
      %v872 = vsel %vm818, %v620, %v871
      %873 = vst [vmem:[%s815 + $0x54] sm:$0xf] %v872
      %874 = vst.msk [vmem:[%s815 + $0x58] sm:$0xf] %vm822, %v629
      %v875 = vld [vmem:[%s815 + $0x5c] sm:$0x1]
      %v876 = vsel %vm825, %v630, %v875
      %877 = vst [vmem:[%s815 + $0x5c] sm:$0x1] %v876
      %v878 = vld [vmem:[%s815 + $0x60] sm:$0xf]
      %v879 = vsel %vm818, %v637, %v878
      %880 = vst [vmem:[%s815 + $0x60] sm:$0xf] %v879
      %881 = vst.msk [vmem:[%s815 + $0x64] sm:$0xf] %vm822, %v646
      %v882 = vld [vmem:[%s815 + $0x68] sm:$0x1]
      %v883 = vsel %vm825, %v647, %v882
      %884 = vst [vmem:[%s815 + $0x68] sm:$0x1] %v883
      %v885 = vld [vmem:[%s815 + $0x6c] sm:$0xf]
      %v886 = vsel %vm818, %v654, %v885
      %887 = vst [vmem:[%s815 + $0x6c] sm:$0xf] %v886
      %888 = vst.msk [vmem:[%s815 + $0x70] sm:$0xf] %vm822, %v663
      %v889 = vld [vmem:[%s815 + $0x74] sm:$0x1]
      %v890 = vsel %vm825, %v664, %v889
      %891 = vst [vmem:[%s815 + $0x74] sm:$0x1] %v890
      %v892 = vld [vmem:[%s815 + $0x78] sm:$0xf]
      %v893 = vsel %vm818, %v671, %v892
      %894 = vst [vmem:[%s815 + $0x78] sm:$0xf] %v893
      %895 = vst.msk [vmem:[%s815 + $0x7c] sm:$0xf] %vm822, %v680
      %v896 = vld [vmem:[%s815 + $0x80] sm:$0x1]
      %v897 = vsel %vm825, %v681, %v896
      %898 = vst [vmem:[%s815 + $0x80] sm:$0x1] %v897
      %v899 = vld [vmem:[%s815 + $0x84] sm:$0xf]
      %v900 = vsel %vm818, %v688, %v899
      %901 = vst [vmem:[%s815 + $0x84] sm:$0xf] %v900
      %902 = vst.msk [vmem:[%s815 + $0x88] sm:$0xf] %vm822, %v697
      %v903 = vld [vmem:[%s815 + $0x8c] sm:$0x1]
      %v904 = vsel %vm825, %v698, %v903
      %905 = vst [vmem:[%s815 + $0x8c] sm:$0x1] %v904
      %v906 = vld [vmem:[%s815 + $0x90] sm:$0xf]
      %v907 = vsel %vm818, %v705, %v906
      %908 = vst [vmem:[%s815 + $0x90] sm:$0xf] %v907
      %909 = vst.msk [vmem:[%s815 + $0x94] sm:$0xf] %vm822, %v714
      %v910 = vld [vmem:[%s815 + $0x98] sm:$0x1]
      %v911 = vsel %vm825, %v715, %v910
      %912 = vst [vmem:[%s815 + $0x98] sm:$0x1] %v911
      %v913 = vld [vmem:[%s815 + $0x9c] sm:$0xf]
      %v914 = vsel %vm818, %v722, %v913
      %915 = vst [vmem:[%s815 + $0x9c] sm:$0xf] %v914
      %916 = vst.msk [vmem:[%s815 + $0xa0] sm:$0xf] %vm822, %v731
      %v917 = vld [vmem:[%s815 + $0xa4] sm:$0x1]
      %v918 = vsel %vm825, %v732, %v917
      %919 = vst [vmem:[%s815 + $0xa4] sm:$0x1] %v918
      %v920 = vld [vmem:[%s815 + $0xa8] sm:$0xf]
      %v921 = vsel %vm818, %v739, %v920
      %922 = vst [vmem:[%s815 + $0xa8] sm:$0xf] %v921
      %923 = vst.msk [vmem:[%s815 + $0xac] sm:$0xf] %vm822, %v748
      %v924 = vld [vmem:[%s815 + $0xb0] sm:$0x1]
      %v925 = vsel %vm825, %v749, %v924
      %926 = vst [vmem:[%s815 + $0xb0] sm:$0x1] %v925
      %v927 = vld [vmem:[%s815 + $0xb4] sm:$0xf]
      %v928 = vsel %vm818, %v756, %v927
      %929 = vst [vmem:[%s815 + $0xb4] sm:$0xf] %v928
      %930 = vst.msk [vmem:[%s815 + $0xb8] sm:$0xf] %vm822, %v765
      %v931 = vld [vmem:[%s815 + $0xbc] sm:$0x1]
      %v932 = vsel %vm825, %v766, %v931
      %933 = vst [vmem:[%s815 + $0xbc] sm:$0x1] %v932
      %v934 = vld [vmem:[%s290] sm:$0xff]
      %v935 = vld [vmem:[%s290 + $0x8] sm:$0xff]
      %v936 = vld [vmem:[%s290 + $0x10] sm:$0xff]
      %v937 = vld [vmem:[%s290 + $0x18] sm:$0xff]
      %v938 = vld [vmem:[%s290 + $0x20] sm:$0xff]
      %v939 = vld [vmem:[%s290 + $0x28] sm:$0xff]
      %v940 = vld [vmem:[%s290 + $0x30] sm:$0xff]
      %v941 = vld [vmem:[%s290 + $0x38] sm:$0xff]
      %v942 = vld [vmem:[%s290 + $0x40] sm:$0xff]
      %v943 = vld [vmem:[%s290 + $0x48] sm:$0xff]
      %v944 = vld [vmem:[%s290 + $0x50] sm:$0xff]
      %v945 = vld [vmem:[%s290 + $0x58] sm:$0xff]
      %v946 = vld [vmem:[%s290 + $0x60] sm:$0xff]
      %v947 = vld [vmem:[%s290 + $0x68] sm:$0xff]
      %v948 = vld [vmem:[%s290 + $0x70] sm:$0xff]
      %v949 = vld [vmem:[%s290 + $0x78] sm:$0xff]
      %v950 = vld [vmem:[%s290 + $0x80] sm:$0xff]
      %v951 = vld [vmem:[%s290 + $0x88] sm:$0xff]
      %v952 = vld [vmem:[%s290 + $0x90] sm:$0xff]
      %v953 = vld [vmem:[%s290 + $0x98] sm:$0xff]
      %v954 = vld [vmem:[%s290 + $0xa0] sm:$0xff]
      %v955 = vld [vmem:[%s290 + $0xa8] sm:$0xff]
      %v956 = vld [vmem:[%s290 + $0xb0] sm:$0xff]
      %v957 = vld [vmem:[%s290 + $0xb8] sm:$0xff]
      %v958 = vld [vmem:[%s290 + $0xc0] sm:$0xff]
      %v959 = vld [vmem:[%s290 + $0xc8] sm:$0xff]
      %v960 = vld [vmem:[%s290 + $0xd0] sm:$0xff]
      %v961 = vld [vmem:[%s290 + $0xd8] sm:$0xff]
      %v962 = vld [vmem:[%s290 + $0xe0] sm:$0xff]
      %v963 = vld [vmem:[%s290 + $0xe8] sm:$0xff]
      %v964 = vld [vmem:[%s290 + $0xf0] sm:$0xff]
      %v965 = vld [vmem:[%s290 + $0xf8] sm:$0xff]
      %v966 = vpack.c.bf16 %v935, %v934
      %v967 = vpack.c.bf16 %v937, %v936
      %v968 = vpack.c.bf16 %v939, %v938
      %v969 = vpack.c.bf16 %v941, %v940
      %v970 = vpack.c.bf16 %v943, %v942
      %v971 = vpack.c.bf16 %v945, %v944
      %v972 = vpack.c.bf16 %v947, %v946
      %v973 = vpack.c.bf16 %v949, %v948
      %v974 = vpack.c.bf16 %v951, %v950
      %v975 = vpack.c.bf16 %v953, %v952
      %v976 = vpack.c.bf16 %v955, %v954
      %v977 = vpack.c.bf16 %v957, %v956
      %v978 = vpack.c.bf16 %v959, %v958
      %v979 = vpack.c.bf16 %v961, %v960
      %v980 = vpack.c.bf16 %v963, %v962
      %v981 = vpack.c.bf16 %v965, %v964
      %v998 = vunpack.c.l.b16 %v966
      %v999 = vunpack.c.h.b16 %v966
      %v1000 = vunpack.c.l.b16 %v967
      %v1001 = vunpack.c.h.b16 %v967
      %v1002 = vunpack.c.l.b16 %v968
      %v1003 = vunpack.c.h.b16 %v968
      %v1004 = vunpack.c.l.b16 %v969
      %v1005 = vunpack.c.h.b16 %v969
      %v1006 = vunpack.c.l.b16 %v970
      %v1007 = vunpack.c.h.b16 %v970
      %v1008 = vunpack.c.l.b16 %v971
      %v1009 = vunpack.c.h.b16 %v971
      %v1010 = vunpack.c.l.b16 %v972
      %v1011 = vunpack.c.h.b16 %v972
      %v1012 = vunpack.c.l.b16 %v973
      %v1013 = vunpack.c.h.b16 %v973
      %v1014 = vunpack.c.l.b16 %v974
      %v1015 = vunpack.c.h.b16 %v974
      %v1016 = vunpack.c.l.b16 %v975
      %v1017 = vunpack.c.h.b16 %v975
      %v1018 = vunpack.c.l.b16 %v976
      %v1019 = vunpack.c.h.b16 %v976
      %v1020 = vunpack.c.l.b16 %v977
      %v1021 = vunpack.c.h.b16 %v977
      %v1022 = vunpack.c.l.b16 %v978
      %v1023 = vunpack.c.h.b16 %v978
      %v1024 = vunpack.c.l.b16 %v979
      %v1025 = vunpack.c.h.b16 %v979
      %v1026 = vunpack.c.l.b16 %v980
      %v1027 = vunpack.c.h.b16 %v980
      %v1028 = vunpack.c.l.b16 %v981
      %v1029 = vunpack.c.h.b16 %v981
      %v1030 = vpack.c.b16 %v998, %v998
      %v1031 = vpack.c.b16 %v999, %v999
      %v1032 = vpack.c.b16 %v1000, %v1000
      %v1033 = vpack.c.b16 %v1001, %v1001
      %v1034 = vpack.c.b16 %v1002, %v1002
      %v1035 = vpack.c.b16 %v1003, %v1003
      %v1036 = vpack.c.b16 %v1004, %v1004
      %v1037 = vpack.c.b16 %v1005, %v1005
      %v1038 = vpack.c.b16 %v1006, %v1006
      %v1039 = vpack.c.b16 %v1007, %v1007
      %v1040 = vpack.c.b16 %v1008, %v1008
      %v1041 = vpack.c.b16 %v1009, %v1009
      %v1042 = vpack.c.b16 %v1010, %v1010
      %v1043 = vpack.c.b16 %v1011, %v1011
      %v1044 = vpack.c.b16 %v1012, %v1012
      %v1045 = vpack.c.b16 %v1013, %v1013
      %v1046 = vpack.c.b16 %v1014, %v1014
      %v1047 = vpack.c.b16 %v1015, %v1015
      %v1048 = vpack.c.b16 %v1016, %v1016
      %v1049 = vpack.c.b16 %v1017, %v1017
      %v1050 = vpack.c.b16 %v1018, %v1018
      %v1051 = vpack.c.b16 %v1019, %v1019
      %v1052 = vpack.c.b16 %v1020, %v1020
      %v1053 = vpack.c.b16 %v1021, %v1021
      %v1054 = vpack.c.b16 %v1022, %v1022
      %v1055 = vpack.c.b16 %v1023, %v1023
      %v1056 = vpack.c.b16 %v1024, %v1024
      %v1057 = vpack.c.b16 %v1025, %v1025
      %v1058 = vpack.c.b16 %v1026, %v1026
      %v1059 = vpack.c.b16 %v1027, %v1027
      %v1060 = vpack.c.b16 %v1028, %v1028
      %v1061 = vpack.c.b16 %v1029, %v1029
      %v1063 = vshrl.u32 %v1030, 16
      %v1065 = vrot.slane %v1063, 7
      %v1066 = vshll.u32 %v1030, 16
      %v1068 = vor.u32 %v1065, %v1066
      %v1069 = vrot.slane %v1065, 4
      %v1071 = vshrl.u32 %v1031, 16
      %v1073 = vrot.slane %v1071, 7
      %v1074 = vshll.u32 %v1031, 16
      %v1076 = vor.u32 %v1073, %v1074
      %v1077 = vsel %vm494, %v1069, %v1076
      %v1078 = vrot.slane %v1073, 4
      %v1080 = vshrl.u32 %v1032, 16
      %v1082 = vrot.slane %v1080, 7
      %v1083 = vshll.u32 %v1032, 16
      %v1085 = vor.u32 %v1082, %v1083
      %v1086 = vrot.slane %v1082, 4
      %v1088 = vshrl.u32 %v1033, 16
      %v1090 = vrot.slane %v1088, 7
      %v1091 = vshll.u32 %v1033, 16
      %v1093 = vor.u32 %v1090, %v1091
      %v1094 = vsel %vm494, %v1086, %v1093
      %v1095 = vrot.slane %v1090, 4
      %v1097 = vshrl.u32 %v1034, 16
      %v1099 = vrot.slane %v1097, 7
      %v1100 = vshll.u32 %v1034, 16
      %v1102 = vor.u32 %v1099, %v1100
      %v1103 = vrot.slane %v1099, 4
      %v1105 = vshrl.u32 %v1035, 16
      %v1107 = vrot.slane %v1105, 7
      %v1108 = vshll.u32 %v1035, 16
      %v1110 = vor.u32 %v1107, %v1108
      %v1111 = vsel %vm494, %v1103, %v1110
      %v1112 = vrot.slane %v1107, 4
      %v1114 = vshrl.u32 %v1036, 16
      %v1116 = vrot.slane %v1114, 7
      %v1117 = vshll.u32 %v1036, 16
      %v1119 = vor.u32 %v1116, %v1117
      %v1120 = vrot.slane %v1116, 4
      %v1122 = vshrl.u32 %v1037, 16
      %v1124 = vrot.slane %v1122, 7
      %v1125 = vshll.u32 %v1037, 16
      %v1127 = vor.u32 %v1124, %v1125
      %v1128 = vsel %vm494, %v1120, %v1127
      %v1129 = vrot.slane %v1124, 4
      %v1131 = vshrl.u32 %v1038, 16
      %v1133 = vrot.slane %v1131, 7
      %v1134 = vshll.u32 %v1038, 16
      %v1136 = vor.u32 %v1133, %v1134
      %v1137 = vrot.slane %v1133, 4
      %v1139 = vshrl.u32 %v1039, 16
      %v1141 = vrot.slane %v1139, 7
      %v1142 = vshll.u32 %v1039, 16
      %v1144 = vor.u32 %v1141, %v1142
      %v1145 = vsel %vm494, %v1137, %v1144
      %v1146 = vrot.slane %v1141, 4
      %v1148 = vshrl.u32 %v1040, 16
      %v1150 = vrot.slane %v1148, 7
      %v1151 = vshll.u32 %v1040, 16
      %v1153 = vor.u32 %v1150, %v1151
      %v1154 = vrot.slane %v1150, 4
      %v1156 = vshrl.u32 %v1041, 16
      %v1158 = vrot.slane %v1156, 7
      %v1159 = vshll.u32 %v1041, 16
      %v1161 = vor.u32 %v1158, %v1159
      %v1162 = vsel %vm494, %v1154, %v1161
      %v1163 = vrot.slane %v1158, 4
      %v1165 = vshrl.u32 %v1042, 16
      %v1167 = vrot.slane %v1165, 7
      %v1168 = vshll.u32 %v1042, 16
      %v1170 = vor.u32 %v1167, %v1168
      %v1171 = vrot.slane %v1167, 4
      %v1173 = vshrl.u32 %v1043, 16
      %v1175 = vrot.slane %v1173, 7
      %v1176 = vshll.u32 %v1043, 16
      %v1178 = vor.u32 %v1175, %v1176
      %v1179 = vsel %vm494, %v1171, %v1178
      %v1180 = vrot.slane %v1175, 4
      %v1182 = vshrl.u32 %v1044, 16
      %v1184 = vrot.slane %v1182, 7
      %v1185 = vshll.u32 %v1044, 16
      %v1187 = vor.u32 %v1184, %v1185
      %v1188 = vrot.slane %v1184, 4
      %v1190 = vshrl.u32 %v1045, 16
      %v1192 = vrot.slane %v1190, 7
      %v1193 = vshll.u32 %v1045, 16
      %v1195 = vor.u32 %v1192, %v1193
      %v1196 = vsel %vm494, %v1188, %v1195
      %v1197 = vrot.slane %v1192, 4
      %v1199 = vshrl.u32 %v1046, 16
      %v1201 = vrot.slane %v1199, 7
      %v1202 = vshll.u32 %v1046, 16
      %v1204 = vor.u32 %v1201, %v1202
      %v1205 = vrot.slane %v1201, 4
      %v1207 = vshrl.u32 %v1047, 16
      %v1209 = vrot.slane %v1207, 7
      %v1210 = vshll.u32 %v1047, 16
      %v1212 = vor.u32 %v1209, %v1210
      %v1213 = vsel %vm494, %v1205, %v1212
      %v1214 = vrot.slane %v1209, 4
      %v1216 = vshrl.u32 %v1048, 16
      %v1218 = vrot.slane %v1216, 7
      %v1219 = vshll.u32 %v1048, 16
      %v1221 = vor.u32 %v1218, %v1219
      %v1222 = vrot.slane %v1218, 4
      %v1224 = vshrl.u32 %v1049, 16
      %v1226 = vrot.slane %v1224, 7
      %v1227 = vshll.u32 %v1049, 16
      %v1229 = vor.u32 %v1226, %v1227
      %v1230 = vsel %vm494, %v1222, %v1229
      %v1231 = vrot.slane %v1226, 4
      %v1233 = vshrl.u32 %v1050, 16
      %v1235 = vrot.slane %v1233, 7
      %v1236 = vshll.u32 %v1050, 16
      %v1238 = vor.u32 %v1235, %v1236
      %v1239 = vrot.slane %v1235, 4
      %v1241 = vshrl.u32 %v1051, 16
      %v1243 = vrot.slane %v1241, 7
      %v1244 = vshll.u32 %v1051, 16
      %v1246 = vor.u32 %v1243, %v1244
      %v1247 = vsel %vm494, %v1239, %v1246
      %v1248 = vrot.slane %v1243, 4
      %v1250 = vshrl.u32 %v1052, 16
      %v1252 = vrot.slane %v1250, 7
      %v1253 = vshll.u32 %v1052, 16
      %v1255 = vor.u32 %v1252, %v1253
      %v1256 = vrot.slane %v1252, 4
      %v1258 = vshrl.u32 %v1053, 16
      %v1260 = vrot.slane %v1258, 7
      %v1261 = vshll.u32 %v1053, 16
      %v1263 = vor.u32 %v1260, %v1261
      %v1264 = vsel %vm494, %v1256, %v1263
      %v1265 = vrot.slane %v1260, 4
      %v1267 = vshrl.u32 %v1054, 16
      %v1269 = vrot.slane %v1267, 7
      %v1270 = vshll.u32 %v1054, 16
      %v1272 = vor.u32 %v1269, %v1270
      %v1273 = vrot.slane %v1269, 4
      %v1275 = vshrl.u32 %v1055, 16
      %v1277 = vrot.slane %v1275, 7
      %v1278 = vshll.u32 %v1055, 16
      %v1280 = vor.u32 %v1277, %v1278
      %v1281 = vsel %vm494, %v1273, %v1280
      %v1282 = vrot.slane %v1277, 4
      %v1284 = vshrl.u32 %v1056, 16
      %v1286 = vrot.slane %v1284, 7
      %v1287 = vshll.u32 %v1056, 16
      %v1289 = vor.u32 %v1286, %v1287
      %v1290 = vrot.slane %v1286, 4
      %v1292 = vshrl.u32 %v1057, 16
      %v1294 = vrot.slane %v1292, 7
      %v1295 = vshll.u32 %v1057, 16
      %v1297 = vor.u32 %v1294, %v1295
      %v1298 = vsel %vm494, %v1290, %v1297
      %v1299 = vrot.slane %v1294, 4
      %v1301 = vshrl.u32 %v1058, 16
      %v1303 = vrot.slane %v1301, 7
      %v1304 = vshll.u32 %v1058, 16
      %v1306 = vor.u32 %v1303, %v1304
      %v1307 = vrot.slane %v1303, 4
      %v1309 = vshrl.u32 %v1059, 16
      %v1311 = vrot.slane %v1309, 7
      %v1312 = vshll.u32 %v1059, 16
      %v1314 = vor.u32 %v1311, %v1312
      %v1315 = vsel %vm494, %v1307, %v1314
      %v1316 = vrot.slane %v1311, 4
      %v1318 = vshrl.u32 %v1060, 16
      %v1320 = vrot.slane %v1318, 7
      %v1321 = vshll.u32 %v1060, 16
      %v1323 = vor.u32 %v1320, %v1321
      %v1324 = vrot.slane %v1320, 4
      %v1326 = vshrl.u32 %v1061, 16
      %v1328 = vrot.slane %v1326, 7
      %v1329 = vshll.u32 %v1061, 16
      %v1331 = vor.u32 %v1328, %v1329
      %v1332 = vsel %vm494, %v1324, %v1331
      %v1333 = vrot.slane %v1328, 4
      %1334 = vrot.lane.b32.xlu0 %v1068, 4
      %v1335 = vpop.permute.xlu0 %1334
      %1336 = vrot.lane.b32.xlu0 %v1077, 4
      %v1337 = vpop.permute.xlu0 %1336
      %1338 = vrot.lane.b32.xlu0 %v1078, 4
      %v1339 = vpop.permute.xlu0 %1338
      %1340 = vrot.lane.b32.xlu0 %v1085, 4
      %v1341 = vpop.permute.xlu0 %1340
      %1342 = vrot.lane.b32.xlu0 %v1094, 4
      %v1343 = vpop.permute.xlu0 %1342
      %1344 = vrot.lane.b32.xlu0 %v1095, 4
      %v1345 = vpop.permute.xlu0 %1344
      %1346 = vrot.lane.b32.xlu0 %v1102, 4
      %v1347 = vpop.permute.xlu0 %1346
      %1348 = vrot.lane.b32.xlu0 %v1111, 4
      %v1349 = vpop.permute.xlu0 %1348
      %1350 = vrot.lane.b32.xlu0 %v1112, 4
      %v1351 = vpop.permute.xlu0 %1350
      %1352 = vrot.lane.b32.xlu0 %v1119, 4
      %v1353 = vpop.permute.xlu0 %1352
      %1354 = vrot.lane.b32.xlu0 %v1128, 4
      %v1355 = vpop.permute.xlu0 %1354
      %1356 = vrot.lane.b32.xlu0 %v1129, 4
      %v1357 = vpop.permute.xlu0 %1356
      %1358 = vrot.lane.b32.xlu0 %v1136, 4
      %v1359 = vpop.permute.xlu0 %1358
      %1360 = vrot.lane.b32.xlu0 %v1145, 4
      %v1361 = vpop.permute.xlu0 %1360
      %1362 = vrot.lane.b32.xlu0 %v1146, 4
      %v1363 = vpop.permute.xlu0 %1362
      %1364 = vrot.lane.b32.xlu0 %v1153, 4
      %v1365 = vpop.permute.xlu0 %1364
      %1366 = vrot.lane.b32.xlu0 %v1162, 4
      %v1367 = vpop.permute.xlu0 %1366
      %1368 = vrot.lane.b32.xlu0 %v1163, 4
      %v1369 = vpop.permute.xlu0 %1368
      %1370 = vrot.lane.b32.xlu0 %v1170, 4
      %v1371 = vpop.permute.xlu0 %1370
      %1372 = vrot.lane.b32.xlu0 %v1179, 4
      %v1373 = vpop.permute.xlu0 %1372
      %1374 = vrot.lane.b32.xlu0 %v1180, 4
      %v1375 = vpop.permute.xlu0 %1374
      %1376 = vrot.lane.b32.xlu0 %v1187, 4
      %v1377 = vpop.permute.xlu0 %1376
      %1378 = vrot.lane.b32.xlu0 %v1196, 4
      %v1379 = vpop.permute.xlu0 %1378
      %1380 = vrot.lane.b32.xlu0 %v1197, 4
      %v1381 = vpop.permute.xlu0 %1380
      %1382 = vrot.lane.b32.xlu0 %v1204, 4
      %v1383 = vpop.permute.xlu0 %1382
      %1384 = vrot.lane.b32.xlu0 %v1213, 4
      %v1385 = vpop.permute.xlu0 %1384
      %1386 = vrot.lane.b32.xlu0 %v1214, 4
      %v1387 = vpop.permute.xlu0 %1386
      %1388 = vrot.lane.b32.xlu0 %v1221, 4
      %v1389 = vpop.permute.xlu0 %1388
      %1390 = vrot.lane.b32.xlu0 %v1230, 4
      %v1391 = vpop.permute.xlu0 %1390
      %1392 = vrot.lane.b32.xlu0 %v1231, 4
      %v1393 = vpop.permute.xlu0 %1392
      %1394 = vrot.lane.b32.xlu0 %v1238, 4
      %v1395 = vpop.permute.xlu0 %1394
      %1396 = vrot.lane.b32.xlu0 %v1247, 4
      %v1397 = vpop.permute.xlu0 %1396
      %1398 = vrot.lane.b32.xlu0 %v1248, 4
      %v1399 = vpop.permute.xlu0 %1398
      %1400 = vrot.lane.b32.xlu0 %v1255, 4
      %v1401 = vpop.permute.xlu0 %1400
      %1402 = vrot.lane.b32.xlu0 %v1264, 4
      %v1403 = vpop.permute.xlu0 %1402
      %1404 = vrot.lane.b32.xlu0 %v1265, 4
      %v1405 = vpop.permute.xlu0 %1404
      %1406 = vrot.lane.b32.xlu0 %v1272, 4
      %v1407 = vpop.permute.xlu0 %1406
      %1408 = vrot.lane.b32.xlu0 %v1281, 4
      %v1409 = vpop.permute.xlu0 %1408
      %1410 = vrot.lane.b32.xlu0 %v1282, 4
      %v1411 = vpop.permute.xlu0 %1410
      %1412 = vrot.lane.b32.xlu0 %v1289, 4
      %v1413 = vpop.permute.xlu0 %1412
      %1414 = vrot.lane.b32.xlu0 %v1298, 4
      %v1415 = vpop.permute.xlu0 %1414
      %1416 = vrot.lane.b32.xlu0 %v1299, 4
      %v1417 = vpop.permute.xlu0 %1416
      %1418 = vrot.lane.b32.xlu0 %v1306, 4
      %v1419 = vpop.permute.xlu0 %1418
      %1420 = vrot.lane.b32.xlu0 %v1315, 4
      %v1421 = vpop.permute.xlu0 %1420
      %1422 = vrot.lane.b32.xlu0 %v1316, 4
      %v1423 = vpop.permute.xlu0 %1422
      %1424 = vrot.lane.b32.xlu0 %v1323, 4
      %v1425 = vpop.permute.xlu0 %1424
      %1426 = vrot.lane.b32.xlu0 %v1332, 4
      %v1427 = vpop.permute.xlu0 %1426
      %1428 = vrot.lane.b32.xlu0 %v1333, 4
      %v1429 = vpop.permute.xlu0 %1428
      %vm1478 = vcmask 289824
      %vm1479 = vmand %vm1478, %vm817
      %v1480 = vld [vmem:[%s815] sm:$0xf]
      %v1481 = vsel %vm1479, %v1335, %v1480
      %1482 = vst [vmem:[%s815] sm:$0xf] %v1481
      %vm1483 = vcmask 289824
      %1484 = vst.msk [vmem:[%s815 + $0x4] sm:$0xf] %vm1483, %v1337
      %vm1485 = vcmask 286752
      %vm1486 = vmand %vm1485, %vm492
      %v1487 = vld [vmem:[%s815 + $0x8] sm:$0x1]
      %v1488 = vsel %vm1486, %v1339, %v1487
      %1489 = vst [vmem:[%s815 + $0x8] sm:$0x1] %v1488
      %v1490 = vld [vmem:[%s815 + $0xc] sm:$0xf]
      %v1491 = vsel %vm1479, %v1341, %v1490
      %1492 = vst [vmem:[%s815 + $0xc] sm:$0xf] %v1491
      %1493 = vst.msk [vmem:[%s815 + $0x10] sm:$0xf] %vm1483, %v1343
      %v1494 = vld [vmem:[%s815 + $0x14] sm:$0x1]
      %v1495 = vsel %vm1486, %v1345, %v1494
      %1496 = vst [vmem:[%s815 + $0x14] sm:$0x1] %v1495
      %v1497 = vld [vmem:[%s815 + $0x18] sm:$0xf]
      %v1498 = vsel %vm1479, %v1347, %v1497
      %1499 = vst [vmem:[%s815 + $0x18] sm:$0xf] %v1498
      %1500 = vst.msk [vmem:[%s815 + $0x1c] sm:$0xf] %vm1483, %v1349
      %v1501 = vld [vmem:[%s815 + $0x20] sm:$0x1]
      %v1502 = vsel %vm1486, %v1351, %v1501
      %1503 = vst [vmem:[%s815 + $0x20] sm:$0x1] %v1502
      %v1504 = vld [vmem:[%s815 + $0x24] sm:$0xf]
      %v1505 = vsel %vm1479, %v1353, %v1504
      %1506 = vst [vmem:[%s815 + $0x24] sm:$0xf] %v1505
      %1507 = vst.msk [vmem:[%s815 + $0x28] sm:$0xf] %vm1483, %v1355
      %v1508 = vld [vmem:[%s815 + $0x2c] sm:$0x1]
      %v1509 = vsel %vm1486, %v1357, %v1508
      %1510 = vst [vmem:[%s815 + $0x2c] sm:$0x1] %v1509
      %v1511 = vld [vmem:[%s815 + $0x30] sm:$0xf]
      %v1512 = vsel %vm1479, %v1359, %v1511
      %1513 = vst [vmem:[%s815 + $0x30] sm:$0xf] %v1512
      %1514 = vst.msk [vmem:[%s815 + $0x34] sm:$0xf] %vm1483, %v1361
      %v1515 = vld [vmem:[%s815 + $0x38] sm:$0x1]
      %v1516 = vsel %vm1486, %v1363, %v1515
      %1517 = vst [vmem:[%s815 + $0x38] sm:$0x1] %v1516
      %v1518 = vld [vmem:[%s815 + $0x3c] sm:$0xf]
      %v1519 = vsel %vm1479, %v1365, %v1518
      %1520 = vst [vmem:[%s815 + $0x3c] sm:$0xf] %v1519
      %1521 = vst.msk [vmem:[%s815 + $0x40] sm:$0xf] %vm1483, %v1367
      %v1522 = vld [vmem:[%s815 + $0x44] sm:$0x1]
      %v1523 = vsel %vm1486, %v1369, %v1522
      %1524 = vst [vmem:[%s815 + $0x44] sm:$0x1] %v1523
      %v1525 = vld [vmem:[%s815 + $0x48] sm:$0xf]
      %v1526 = vsel %vm1479, %v1371, %v1525
      %1527 = vst [vmem:[%s815 + $0x48] sm:$0xf] %v1526
      %1528 = vst.msk [vmem:[%s815 + $0x4c] sm:$0xf] %vm1483, %v1373
      %v1529 = vld [vmem:[%s815 + $0x50] sm:$0x1]
      %v1530 = vsel %vm1486, %v1375, %v1529
      %1531 = vst [vmem:[%s815 + $0x50] sm:$0x1] %v1530
      %v1532 = vld [vmem:[%s815 + $0x54] sm:$0xf]
      %v1533 = vsel %vm1479, %v1377, %v1532
      %1534 = vst [vmem:[%s815 + $0x54] sm:$0xf] %v1533
      %1535 = vst.msk [vmem:[%s815 + $0x58] sm:$0xf] %vm1483, %v1379
      %v1536 = vld [vmem:[%s815 + $0x5c] sm:$0x1]
      %v1537 = vsel %vm1486, %v1381, %v1536
      %1538 = vst [vmem:[%s815 + $0x5c] sm:$0x1] %v1537
      %v1539 = vld [vmem:[%s815 + $0x60] sm:$0xf]
      %v1540 = vsel %vm1479, %v1383, %v1539
      %1541 = vst [vmem:[%s815 + $0x60] sm:$0xf] %v1540
      %1542 = vst.msk [vmem:[%s815 + $0x64] sm:$0xf] %vm1483, %v1385
      %v1543 = vld [vmem:[%s815 + $0x68] sm:$0x1]
      %v1544 = vsel %vm1486, %v1387, %v1543
      %1545 = vst [vmem:[%s815 + $0x68] sm:$0x1] %v1544
      %v1546 = vld [vmem:[%s815 + $0x6c] sm:$0xf]
      %v1547 = vsel %vm1479, %v1389, %v1546
      %1548 = vst [vmem:[%s815 + $0x6c] sm:$0xf] %v1547
      %1549 = vst.msk [vmem:[%s815 + $0x70] sm:$0xf] %vm1483, %v1391
      %v1550 = vld [vmem:[%s815 + $0x74] sm:$0x1]
      %v1551 = vsel %vm1486, %v1393, %v1550
      %1552 = vst [vmem:[%s815 + $0x74] sm:$0x1] %v1551
      %v1553 = vld [vmem:[%s815 + $0x78] sm:$0xf]
      %v1554 = vsel %vm1479, %v1395, %v1553
      %1555 = vst [vmem:[%s815 + $0x78] sm:$0xf] %v1554
      %1556 = vst.msk [vmem:[%s815 + $0x7c] sm:$0xf] %vm1483, %v1397
      %v1557 = vld [vmem:[%s815 + $0x80] sm:$0x1]
      %v1558 = vsel %vm1486, %v1399, %v1557
      %1559 = vst [vmem:[%s815 + $0x80] sm:$0x1] %v1558
      %v1560 = vld [vmem:[%s815 + $0x84] sm:$0xf]
      %v1561 = vsel %vm1479, %v1401, %v1560
      %1562 = vst [vmem:[%s815 + $0x84] sm:$0xf] %v1561
      %1563 = vst.msk [vmem:[%s815 + $0x88] sm:$0xf] %vm1483, %v1403
      %v1564 = vld [vmem:[%s815 + $0x8c] sm:$0x1]
      %v1565 = vsel %vm1486, %v1405, %v1564
      %1566 = vst [vmem:[%s815 + $0x8c] sm:$0x1] %v1565
      %v1567 = vld [vmem:[%s815 + $0x90] sm:$0xf]
      %v1568 = vsel %vm1479, %v1407, %v1567
      %1569 = vst [vmem:[%s815 + $0x90] sm:$0xf] %v1568
      %1570 = vst.msk [vmem:[%s815 + $0x94] sm:$0xf] %vm1483, %v1409
      %v1571 = vld [vmem:[%s815 + $0x98] sm:$0x1]
      %v1572 = vsel %vm1486, %v1411, %v1571
      %1573 = vst [vmem:[%s815 + $0x98] sm:$0x1] %v1572
      %v1574 = vld [vmem:[%s815 + $0x9c] sm:$0xf]
      %v1575 = vsel %vm1479, %v1413, %v1574
      %1576 = vst [vmem:[%s815 + $0x9c] sm:$0xf] %v1575
      %1577 = vst.msk [vmem:[%s815 + $0xa0] sm:$0xf] %vm1483, %v1415
      %v1578 = vld [vmem:[%s815 + $0xa4] sm:$0x1]
      %v1579 = vsel %vm1486, %v1417, %v1578
      %1580 = vst [vmem:[%s815 + $0xa4] sm:$0x1] %v1579
      %v1581 = vld [vmem:[%s815 + $0xa8] sm:$0xf]
      %v1582 = vsel %vm1479, %v1419, %v1581
      %1583 = vst [vmem:[%s815 + $0xa8] sm:$0xf] %v1582
      %1584 = vst.msk [vmem:[%s815 + $0xac] sm:$0xf] %vm1483, %v1421
      %v1585 = vld [vmem:[%s815 + $0xb0] sm:$0x1]
      %v1586 = vsel %vm1486, %v1423, %v1585
      %1587 = vst [vmem:[%s815 + $0xb0] sm:$0x1] %v1586
      %v1588 = vld [vmem:[%s815 + $0xb4] sm:$0xf]
      %v1589 = vsel %vm1479, %v1425, %v1588
      %1590 = vst [vmem:[%s815 + $0xb4] sm:$0xf] %v1589
      %1591 = vst.msk [vmem:[%s815 + $0xb8] sm:$0xf] %vm1483, %v1427
      %v1592 = vld [vmem:[%s815 + $0xbc] sm:$0x1]
      %v1593 = vsel %vm1486, %v1429, %v1592
      %1594 = vst [vmem:[%s815 + $0xbc] sm:$0x1] %v1593
      %v1595 = vld [vmem:[#allocation2] sm:$0xf]
      %v1596 = vld [vmem:[#allocation2 + $0x4] sm:$0xf]
      %v1597 = vld [vmem:[#allocation2 + $0xc] sm:$0xf]
      %v1598 = vld [vmem:[#allocation2 + $0x10] sm:$0xf]
      %v1599 = vld [vmem:[#allocation2 + $0x18] sm:$0xf]
      %v1600 = vld [vmem:[#allocation2 + $0x1c] sm:$0xf]
      %v1601 = vld [vmem:[#allocation2 + $0x24] sm:$0xf]
      %v1602 = vld [vmem:[#allocation2 + $0x28] sm:$0xf]
      %v1603 = vld [vmem:[#allocation2 + $0x30] sm:$0xf]
      %v1604 = vld [vmem:[#allocation2 + $0x34] sm:$0xf]
      %v1605 = vld [vmem:[#allocation2 + $0x3c] sm:$0xf]
      %v1606 = vld [vmem:[#allocation2 + $0x40] sm:$0xf]
      %v1607 = vld [vmem:[#allocation2 + $0x48] sm:$0xf]
      %v1608 = vld [vmem:[#allocation2 + $0x4c] sm:$0xf]
      %v1609 = vld [vmem:[#allocation2 + $0x54] sm:$0xf]
      %v1610 = vld [vmem:[#allocation2 + $0x58] sm:$0xf]
      %v1611 = vld [vmem:[#allocation2 + $0x60] sm:$0xf]
      %v1612 = vld [vmem:[#allocation2 + $0x64] sm:$0xf]
      %v1613 = vld [vmem:[#allocation2 + $0x6c] sm:$0xf]
      %v1614 = vld [vmem:[#allocation2 + $0x70] sm:$0xf]
      %v1615 = vld [vmem:[#allocation2 + $0x78] sm:$0xf]
      %v1616 = vld [vmem:[#allocation2 + $0x7c] sm:$0xf]
      %v1617 = vld [vmem:[#allocation2 + $0x84] sm:$0xf]
      %v1618 = vld [vmem:[#allocation2 + $0x88] sm:$0xf]
      %v1619 = vld [vmem:[#allocation2 + $0x90] sm:$0xf]
      %v1620 = vld [vmem:[#allocation2 + $0x94] sm:$0xf]
      %v1621 = vld [vmem:[#allocation2 + $0x9c] sm:$0xf]
      %v1622 = vld [vmem:[#allocation2 + $0xa0] sm:$0xf]
      %v1623 = vld [vmem:[#allocation2 + $0xa8] sm:$0xf]
      %v1624 = vld [vmem:[#allocation2 + $0xac] sm:$0xf]
      %v1625 = vld [vmem:[#allocation2 + $0xb4] sm:$0xf]
      %v1626 = vld [vmem:[#allocation2 + $0xb8] sm:$0xf]
      %v1659 = vunpack.c.l.b16 %v1595
      %v1660 = vunpack.c.l.b16 %v1596
      %v1661 = vunpack.c.l.b16 %v1597
      %v1662 = vunpack.c.l.b16 %v1598
      %v1663 = vunpack.c.l.b16 %v1599
      %v1664 = vunpack.c.l.b16 %v1600
      %v1665 = vunpack.c.l.b16 %v1601
      %v1666 = vunpack.c.l.b16 %v1602
      %v1667 = vunpack.c.l.b16 %v1603
      %v1668 = vunpack.c.l.b16 %v1604
      %v1669 = vunpack.c.l.b16 %v1605
      %v1670 = vunpack.c.l.b16 %v1606
      %v1671 = vunpack.c.l.b16 %v1607
      %v1672 = vunpack.c.l.b16 %v1608
      %v1673 = vunpack.c.l.b16 %v1609
      %v1674 = vunpack.c.l.b16 %v1610
      %v1675 = vunpack.c.l.b16 %v1611
      %v1676 = vunpack.c.l.b16 %v1612
      %v1677 = vunpack.c.l.b16 %v1613
      %v1678 = vunpack.c.l.b16 %v1614
      %v1679 = vunpack.c.l.b16 %v1615
      %v1680 = vunpack.c.l.b16 %v1616
      %v1681 = vunpack.c.l.b16 %v1617
      %v1682 = vunpack.c.l.b16 %v1618
      %v1683 = vunpack.c.l.b16 %v1619
      %v1684 = vunpack.c.l.b16 %v1620
      %v1685 = vunpack.c.l.b16 %v1621
      %v1686 = vunpack.c.l.b16 %v1622
      %v1687 = vunpack.c.l.b16 %v1623
      %v1688 = vunpack.c.l.b16 %v1624
      %v1689 = vunpack.c.l.b16 %v1625
      %v1690 = vunpack.c.l.b16 %v1626
      %v1691 = vpack.c.b16 %v1660, %v1659
      %v1692 = vpack.c.b16 %v1662, %v1661
      %v1693 = vpack.c.b16 %v1664, %v1663
      %v1694 = vpack.c.b16 %v1666, %v1665
      %v1695 = vpack.c.b16 %v1668, %v1667
      %v1696 = vpack.c.b16 %v1670, %v1669
      %v1697 = vpack.c.b16 %v1672, %v1671
      %v1698 = vpack.c.b16 %v1674, %v1673
      %v1699 = vpack.c.b16 %v1676, %v1675
      %v1700 = vpack.c.b16 %v1678, %v1677
      %v1701 = vpack.c.b16 %v1680, %v1679
      %v1702 = vpack.c.b16 %v1682, %v1681
      %v1703 = vpack.c.b16 %v1684, %v1683
      %v1704 = vpack.c.b16 %v1686, %v1685
      %v1705 = vpack.c.b16 %v1688, %v1687
      %v1706 = vpack.c.b16 %v1690, %v1689
      %1723 = vst [vmem:[#allocation3] sm:$0xff] %v1691
      %1724 = vst [vmem:[#allocation3 + $0x48] sm:$0xff] %v1692
      %1725 = vst [vmem:[#allocation3 + $0x90] sm:$0xff] %v1693
      %1726 = vst [vmem:[#allocation3 + $0xd8] sm:$0xff] %v1694
      %1727 = vst [vmem:[#allocation3 + $0x120] sm:$0xff] %v1695
      %1728 = vst [vmem:[#allocation3 + $0x168] sm:$0xff] %v1696
      %1729 = vst [vmem:[#allocation3 + $0x1b0] sm:$0xff] %v1697
      %1730 = vst [vmem:[#allocation3 + $0x1f8] sm:$0xff] %v1698
      %1731 = vst [vmem:[#allocation3 + $0x240] sm:$0xff] %v1699
      %1732 = vst [vmem:[#allocation3 + $0x288] sm:$0xff] %v1700
      %1733 = vst [vmem:[#allocation3 + $0x2d0] sm:$0xff] %v1701
      %1734 = vst [vmem:[#allocation3 + $0x318] sm:$0xff] %v1702
      %1735 = vst [vmem:[#allocation3 + $0x360] sm:$0xff] %v1703
      %1736 = vst [vmem:[#allocation3 + $0x3a8] sm:$0xff] %v1704
      %1737 = vst [vmem:[#allocation3 + $0x3f0] sm:$0xff] %v1705
      %1738 = vst [vmem:[#allocation3 + $0x438] sm:$0xff] %v1706
      %v1739 = vld [vmem:[#allocation2] sm:$0xf]
      %v1740 = vld [vmem:[#allocation2 + $0x4] sm:$0xf]
      %v1741 = vld [vmem:[#allocation2 + $0x8] sm:$0x1]
      %v1742 = vld [vmem:[#allocation2 + $0xc] sm:$0xf]
      %v1743 = vld [vmem:[#allocation2 + $0x10] sm:$0xf]
      %v1744 = vld [vmem:[#allocation2 + $0x14] sm:$0x1]
      %v1745 = vld [vmem:[#allocation2 + $0x18] sm:$0xf]
      %v1746 = vld [vmem:[#allocation2 + $0x1c] sm:$0xf]
      %v1747 = vld [vmem:[#allocation2 + $0x20] sm:$0x1]
      %v1748 = vld [vmem:[#allocation2 + $0x24] sm:$0xf]
      %v1749 = vld [vmem:[#allocation2 + $0x28] sm:$0xf]
      %v1750 = vld [vmem:[#allocation2 + $0x2c] sm:$0x1]
      %v1751 = vld [vmem:[#allocation2 + $0x30] sm:$0xf]
      %v1752 = vld [vmem:[#allocation2 + $0x34] sm:$0xf]
      %v1753 = vld [vmem:[#allocation2 + $0x38] sm:$0x1]
      %v1754 = vld [vmem:[#allocation2 + $0x3c] sm:$0xf]
      %v1755 = vld [vmem:[#allocation2 + $0x40] sm:$0xf]
      %v1756 = vld [vmem:[#allocation2 + $0x44] sm:$0x1]
      %v1757 = vld [vmem:[#allocation2 + $0x48] sm:$0xf]
      %v1758 = vld [vmem:[#allocation2 + $0x4c] sm:$0xf]
      %v1759 = vld [vmem:[#allocation2 + $0x50] sm:$0x1]
      %v1760 = vld [vmem:[#allocation2 + $0x54] sm:$0xf]
      %v1761 = vld [vmem:[#allocation2 + $0x58] sm:$0xf]
      %v1762 = vld [vmem:[#allocation2 + $0x5c] sm:$0x1]
      %v1763 = vld [vmem:[#allocation2 + $0x60] sm:$0xf]
      %v1764 = vld [vmem:[#allocation2 + $0x64] sm:$0xf]
      %v1765 = vld [vmem:[#allocation2 + $0x68] sm:$0x1]
      %v1766 = vld [vmem:[#allocation2 + $0x6c] sm:$0xf]
      %v1767 = vld [vmem:[#allocation2 + $0x70] sm:$0xf]
      %v1768 = vld [vmem:[#allocation2 + $0x74] sm:$0x1]
      %v1769 = vld [vmem:[#allocation2 + $0x78] sm:$0xf]
      %v1770 = vld [vmem:[#allocation2 + $0x7c] sm:$0xf]
      %v1771 = vld [vmem:[#allocation2 + $0x80] sm:$0x1]
      %v1772 = vld [vmem:[#allocation2 + $0x84] sm:$0xf]
      %v1773 = vld [vmem:[#allocation2 + $0x88] sm:$0xf]
      %v1774 = vld [vmem:[#allocation2 + $0x8c] sm:$0x1]
      %v1775 = vld [vmem:[#allocation2 + $0x90] sm:$0xf]
      %v1776 = vld [vmem:[#allocation2 + $0x94] sm:$0xf]
      %v1777 = vld [vmem:[#allocation2 + $0x98] sm:$0x1]
      %v1778 = vld [vmem:[#allocation2 + $0x9c] sm:$0xf]
      %v1779 = vld [vmem:[#allocation2 + $0xa0] sm:$0xf]
      %v1780 = vld [vmem:[#allocation2 + $0xa4] sm:$0x1]
      %v1781 = vld [vmem:[#allocation2 + $0xa8] sm:$0xf]
      %v1782 = vld [vmem:[#allocation2 + $0xac] sm:$0xf]
      %v1783 = vld [vmem:[#allocation2 + $0xb0] sm:$0x1]
      %v1784 = vld [vmem:[#allocation2 + $0xb4] sm:$0xf]
      %v1785 = vld [vmem:[#allocation2 + $0xb8] sm:$0xf]
      %v1786 = vld [vmem:[#allocation2 + $0xbc] sm:$0x1]
      %vm1787 = vsmask.f32 3328
      %vm1788 = vsmask.f32 7440
      %vm1789 = vmor %vm1787, %vm1788
      %v1791 = vshrl.u32 %v1739, 16
      %v1793 = vrot.slane %v1791, 4
      %v1794 = vshll.u32 %v1739, 16
      %v1796 = vrot.slane %v1794, 5
      %v1797 = vor.u32 %v1793, %v1796
      %v1798 = vrot.slane %v1797, 4
      %v1800 = vshll.u32 %v1740, 16
      %v1802 = vrot.slane %v1800, 5
      %v1803 = vsel %vm1789, %v1798, %v1802
      %v1804 = vshrl.u32 %v1740, 16
      %v1806 = vrot.slane %v1804, 4
      %v1807 = vor.u32 %v1806, %v1802
      %v1808 = vrot.slane %v1807, 4
      %v1810 = vshll.u32 %v1741, 16
      %v1812 = vrot.slane %v1810, 5
      %v1813 = vsel %vm1789, %v1808, %v1812
      %v1815 = vshrl.u32 %v1742, 16
      %v1817 = vrot.slane %v1815, 4
      %v1818 = vshll.u32 %v1742, 16
      %v1820 = vrot.slane %v1818, 5
      %v1821 = vor.u32 %v1817, %v1820
      %v1822 = vrot.slane %v1821, 4
      %v1824 = vshll.u32 %v1743, 16
      %v1826 = vrot.slane %v1824, 5
      %v1827 = vsel %vm1789, %v1822, %v1826
      %v1828 = vshrl.u32 %v1743, 16
      %v1830 = vrot.slane %v1828, 4
      %v1831 = vor.u32 %v1830, %v1826
      %v1832 = vrot.slane %v1831, 4
      %v1834 = vshll.u32 %v1744, 16
      %v1836 = vrot.slane %v1834, 5
      %v1837 = vsel %vm1789, %v1832, %v1836
      %v1839 = vshrl.u32 %v1745, 16
      %v1841 = vrot.slane %v1839, 4
      %v1842 = vshll.u32 %v1745, 16
      %v1844 = vrot.slane %v1842, 5
      %v1845 = vor.u32 %v1841, %v1844
      %v1846 = vrot.slane %v1845, 4
      %v1848 = vshll.u32 %v1746, 16
      %v1850 = vrot.slane %v1848, 5
      %v1851 = vsel %vm1789, %v1846, %v1850
      %v1852 = vshrl.u32 %v1746, 16
      %v1854 = vrot.slane %v1852, 4
      %v1855 = vor.u32 %v1854, %v1850
      %v1856 = vrot.slane %v1855, 4
      %v1858 = vshll.u32 %v1747, 16
      %v1860 = vrot.slane %v1858, 5
      %v1861 = vsel %vm1789, %v1856, %v1860
      %v1863 = vshrl.u32 %v1748, 16
      %v1865 = vrot.slane %v1863, 4
      %v1866 = vshll.u32 %v1748, 16
      %v1868 = vrot.slane %v1866, 5
      %v1869 = vor.u32 %v1865, %v1868
      %v1870 = vrot.slane %v1869, 4
      %v1872 = vshll.u32 %v1749, 16
      %v1874 = vrot.slane %v1872, 5
      %v1875 = vsel %vm1789, %v1870, %v1874
      %v1876 = vshrl.u32 %v1749, 16
      %v1878 = vrot.slane %v1876, 4
      %v1879 = vor.u32 %v1878, %v1874
      %v1880 = vrot.slane %v1879, 4
      %v1882 = vshll.u32 %v1750, 16
      %v1884 = vrot.slane %v1882, 5
      %v1885 = vsel %vm1789, %v1880, %v1884
      %v1887 = vshrl.u32 %v1751, 16
      %v1889 = vrot.slane %v1887, 4
      %v1890 = vshll.u32 %v1751, 16
      %v1892 = vrot.slane %v1890, 5
      %v1893 = vor.u32 %v1889, %v1892
      %v1894 = vrot.slane %v1893, 4
      %v1896 = vshll.u32 %v1752, 16
      %v1898 = vrot.slane %v1896, 5
      %v1899 = vsel %vm1789, %v1894, %v1898
      %v1900 = vshrl.u32 %v1752, 16
      %v1902 = vrot.slane %v1900, 4
      %v1903 = vor.u32 %v1902, %v1898
      %v1904 = vrot.slane %v1903, 4
      %v1906 = vshll.u32 %v1753, 16
      %v1908 = vrot.slane %v1906, 5
      %v1909 = vsel %vm1789, %v1904, %v1908
      %v1911 = vshrl.u32 %v1754, 16
      %v1913 = vrot.slane %v1911, 4
      %v1914 = vshll.u32 %v1754, 16
      %v1916 = vrot.slane %v1914, 5
      %v1917 = vor.u32 %v1913, %v1916
      %v1918 = vrot.slane %v1917, 4
      %v1920 = vshll.u32 %v1755, 16
      %v1922 = vrot.slane %v1920, 5
      %v1923 = vsel %vm1789, %v1918, %v1922
      %v1924 = vshrl.u32 %v1755, 16
      %v1926 = vrot.slane %v1924, 4
      %v1927 = vor.u32 %v1926, %v1922
      %v1928 = vrot.slane %v1927, 4
      %v1930 = vshll.u32 %v1756, 16
      %v1932 = vrot.slane %v1930, 5
      %v1933 = vsel %vm1789, %v1928, %v1932
      %v1935 = vshrl.u32 %v1757, 16
      %v1937 = vrot.slane %v1935, 4
      %v1938 = vshll.u32 %v1757, 16
      %v1940 = vrot.slane %v1938, 5
      %v1941 = vor.u32 %v1937, %v1940
      %v1942 = vrot.slane %v1941, 4
      %v1944 = vshll.u32 %v1758, 16
      %v1946 = vrot.slane %v1944, 5
      %v1947 = vsel %vm1789, %v1942, %v1946
      %v1948 = vshrl.u32 %v1758, 16
      %v1950 = vrot.slane %v1948, 4
      %v1951 = vor.u32 %v1950, %v1946
      %v1952 = vrot.slane %v1951, 4
      %v1954 = vshll.u32 %v1759, 16
      %v1956 = vrot.slane %v1954, 5
      %v1957 = vsel %vm1789, %v1952, %v1956
      %v1959 = vshrl.u32 %v1760, 16
      %v1961 = vrot.slane %v1959, 4
      %v1962 = vshll.u32 %v1760, 16
      %v1964 = vrot.slane %v1962, 5
      %v1965 = vor.u32 %v1961, %v1964
      %v1966 = vrot.slane %v1965, 4
      %v1968 = vshll.u32 %v1761, 16
      %v1970 = vrot.slane %v1968, 5
      %v1971 = vsel %vm1789, %v1966, %v1970
      %v1972 = vshrl.u32 %v1761, 16
      %v1974 = vrot.slane %v1972, 4
      %v1975 = vor.u32 %v1974, %v1970
      %v1976 = vrot.slane %v1975, 4
      %v1978 = vshll.u32 %v1762, 16
      %v1980 = vrot.slane %v1978, 5
      %v1981 = vsel %vm1789, %v1976, %v1980
      %v1983 = vshrl.u32 %v1763, 16
      %v1985 = vrot.slane %v1983, 4
      %v1986 = vshll.u32 %v1763, 16
      %v1988 = vrot.slane %v1986, 5
      %v1989 = vor.u32 %v1985, %v1988
      %v1990 = vrot.slane %v1989, 4
      %v1992 = vshll.u32 %v1764, 16
      %v1994 = vrot.slane %v1992, 5
      %v1995 = vsel %vm1789, %v1990, %v1994
      %v1996 = vshrl.u32 %v1764, 16
      %v1998 = vrot.slane %v1996, 4
      %v1999 = vor.u32 %v1998, %v1994
      %v2000 = vrot.slane %v1999, 4
      %v2002 = vshll.u32 %v1765, 16
      %v2004 = vrot.slane %v2002, 5
      %v2005 = vsel %vm1789, %v2000, %v2004
      %v2007 = vshrl.u32 %v1766, 16
      %v2009 = vrot.slane %v2007, 4
      %v2010 = vshll.u32 %v1766, 16
      %v2012 = vrot.slane %v2010, 5
      %v2013 = vor.u32 %v2009, %v2012
      %v2014 = vrot.slane %v2013, 4
      %v2016 = vshll.u32 %v1767, 16
      %v2018 = vrot.slane %v2016, 5
      %v2019 = vsel %vm1789, %v2014, %v2018
      %v2020 = vshrl.u32 %v1767, 16
      %v2022 = vrot.slane %v2020, 4
      %v2023 = vor.u32 %v2022, %v2018
      %v2024 = vrot.slane %v2023, 4
      %v2026 = vshll.u32 %v1768, 16
      %v2028 = vrot.slane %v2026, 5
      %v2029 = vsel %vm1789, %v2024, %v2028
      %v2031 = vshrl.u32 %v1769, 16
      %v2033 = vrot.slane %v2031, 4
      %v2034 = vshll.u32 %v1769, 16
      %v2036 = vrot.slane %v2034, 5
      %v2037 = vor.u32 %v2033, %v2036
      %v2038 = vrot.slane %v2037, 4
      %v2040 = vshll.u32 %v1770, 16
      %v2042 = vrot.slane %v2040, 5
      %v2043 = vsel %vm1789, %v2038, %v2042
      %v2044 = vshrl.u32 %v1770, 16
      %v2046 = vrot.slane %v2044, 4
      %v2047 = vor.u32 %v2046, %v2042
      %v2048 = vrot.slane %v2047, 4
      %v2050 = vshll.u32 %v1771, 16
      %v2052 = vrot.slane %v2050, 5
      %v2053 = vsel %vm1789, %v2048, %v2052
      %v2055 = vshrl.u32 %v1772, 16
      %v2057 = vrot.slane %v2055, 4
      %v2058 = vshll.u32 %v1772, 16
      %v2060 = vrot.slane %v2058, 5
      %v2061 = vor.u32 %v2057, %v2060
      %v2062 = vrot.slane %v2061, 4
      %v2064 = vshll.u32 %v1773, 16
      %v2066 = vrot.slane %v2064, 5
      %v2067 = vsel %vm1789, %v2062, %v2066
      %v2068 = vshrl.u32 %v1773, 16
      %v2070 = vrot.slane %v2068, 4
      %v2071 = vor.u32 %v2070, %v2066
      %v2072 = vrot.slane %v2071, 4
      %v2074 = vshll.u32 %v1774, 16
      %v2076 = vrot.slane %v2074, 5
      %v2077 = vsel %vm1789, %v2072, %v2076
      %v2079 = vshrl.u32 %v1775, 16
      %v2081 = vrot.slane %v2079, 4
      %v2082 = vshll.u32 %v1775, 16
      %v2084 = vrot.slane %v2082, 5
      %v2085 = vor.u32 %v2081, %v2084
      %v2086 = vrot.slane %v2085, 4
      %v2088 = vshll.u32 %v1776, 16
      %v2090 = vrot.slane %v2088, 5
      %v2091 = vsel %vm1789, %v2086, %v2090
      %v2092 = vshrl.u32 %v1776, 16
      %v2094 = vrot.slane %v2092, 4
      %v2095 = vor.u32 %v2094, %v2090
      %v2096 = vrot.slane %v2095, 4
      %v2098 = vshll.u32 %v1777, 16
      %v2100 = vrot.slane %v2098, 5
      %v2101 = vsel %vm1789, %v2096, %v2100
      %v2103 = vshrl.u32 %v1778, 16
      %v2105 = vrot.slane %v2103, 4
      %v2106 = vshll.u32 %v1778, 16
      %v2108 = vrot.slane %v2106, 5
      %v2109 = vor.u32 %v2105, %v2108
      %v2110 = vrot.slane %v2109, 4
      %v2112 = vshll.u32 %v1779, 16
      %v2114 = vrot.slane %v2112, 5
      %v2115 = vsel %vm1789, %v2110, %v2114
      %v2116 = vshrl.u32 %v1779, 16
      %v2118 = vrot.slane %v2116, 4
      %v2119 = vor.u32 %v2118, %v2114
      %v2120 = vrot.slane %v2119, 4
      %v2122 = vshll.u32 %v1780, 16
      %v2124 = vrot.slane %v2122, 5
      %v2125 = vsel %vm1789, %v2120, %v2124
      %v2127 = vshrl.u32 %v1781, 16
      %v2129 = vrot.slane %v2127, 4
      %v2130 = vshll.u32 %v1781, 16
      %v2132 = vrot.slane %v2130, 5
      %v2133 = vor.u32 %v2129, %v2132
      %v2134 = vrot.slane %v2133, 4
      %v2136 = vshll.u32 %v1782, 16
      %v2138 = vrot.slane %v2136, 5
      %v2139 = vsel %vm1789, %v2134, %v2138
      %v2140 = vshrl.u32 %v1782, 16
      %v2142 = vrot.slane %v2140, 4
      %v2143 = vor.u32 %v2142, %v2138
      %v2144 = vrot.slane %v2143, 4
      %v2146 = vshll.u32 %v1783, 16
      %v2148 = vrot.slane %v2146, 5
      %v2149 = vsel %vm1789, %v2144, %v2148
      %v2151 = vshrl.u32 %v1784, 16
      %v2153 = vrot.slane %v2151, 4
      %v2154 = vshll.u32 %v1784, 16
      %v2156 = vrot.slane %v2154, 5
      %v2157 = vor.u32 %v2153, %v2156
      %v2158 = vrot.slane %v2157, 4
      %v2160 = vshll.u32 %v1785, 16
      %v2162 = vrot.slane %v2160, 5
      %v2163 = vsel %vm1789, %v2158, %v2162
      %v2164 = vshrl.u32 %v1785, 16
      %v2166 = vrot.slane %v2164, 4
      %v2167 = vor.u32 %v2166, %v2162
      %v2168 = vrot.slane %v2167, 4
      %v2170 = vshll.u32 %v1786, 16
      %v2172 = vrot.slane %v2170, 5
      %v2173 = vsel %vm1789, %v2168, %v2172
      %v2174 = vunpack.c.l.b16 %v1803
      %v2175 = vunpack.c.l.b16 %v1813
      %v2176 = vunpack.c.l.b16 %v1827
      %v2177 = vunpack.c.l.b16 %v1837
      %v2178 = vunpack.c.l.b16 %v1851
      %v2179 = vunpack.c.l.b16 %v1861
      %v2180 = vunpack.c.l.b16 %v1875
      %v2181 = vunpack.c.l.b16 %v1885
      %v2182 = vunpack.c.l.b16 %v1899
      %v2183 = vunpack.c.l.b16 %v1909
      %v2184 = vunpack.c.l.b16 %v1923
      %v2185 = vunpack.c.l.b16 %v1933
      %v2186 = vunpack.c.l.b16 %v1947
      %v2187 = vunpack.c.l.b16 %v1957
      %v2188 = vunpack.c.l.b16 %v1971
      %v2189 = vunpack.c.l.b16 %v1981
      %v2190 = vunpack.c.l.b16 %v1995
      %v2191 = vunpack.c.l.b16 %v2005
      %v2192 = vunpack.c.l.b16 %v2019
      %v2193 = vunpack.c.l.b16 %v2029
      %v2194 = vunpack.c.l.b16 %v2043
      %v2195 = vunpack.c.l.b16 %v2053
      %v2196 = vunpack.c.l.b16 %v2067
      %v2197 = vunpack.c.l.b16 %v2077
      %v2198 = vunpack.c.l.b16 %v2091
      %v2199 = vunpack.c.l.b16 %v2101
      %v2200 = vunpack.c.l.b16 %v2115
      %v2201 = vunpack.c.l.b16 %v2125
      %v2202 = vunpack.c.l.b16 %v2139
      %v2203 = vunpack.c.l.b16 %v2149
      %v2204 = vunpack.c.l.b16 %v2163
      %v2205 = vunpack.c.l.b16 %v2173
      %v2206 = vpack.c.b16 %v2175, %v2174
      %v2207 = vpack.c.b16 %v2177, %v2176
      %v2208 = vpack.c.b16 %v2179, %v2178
      %v2209 = vpack.c.b16 %v2181, %v2180
      %v2210 = vpack.c.b16 %v2183, %v2182
      %v2211 = vpack.c.b16 %v2185, %v2184
      %v2212 = vpack.c.b16 %v2187, %v2186
      %v2213 = vpack.c.b16 %v2189, %v2188
      %v2214 = vpack.c.b16 %v2191, %v2190
      %v2215 = vpack.c.b16 %v2193, %v2192
      %v2216 = vpack.c.b16 %v2195, %v2194
      %v2217 = vpack.c.b16 %v2197, %v2196
      %v2218 = vpack.c.b16 %v2199, %v2198
      %v2219 = vpack.c.b16 %v2201, %v2200
      %v2220 = vpack.c.b16 %v2203, %v2202
      %v2221 = vpack.c.b16 %v2205, %v2204
      %2238 = vst [vmem:[#allocation3 + $0x8] sm:$0xff] %v2206
      %2239 = vst [vmem:[#allocation3 + $0x50] sm:$0xff] %v2207
      %2240 = vst [vmem:[#allocation3 + $0x98] sm:$0xff] %v2208
      %2241 = vst [vmem:[#allocation3 + $0xe0] sm:$0xff] %v2209
      %2242 = vst [vmem:[#allocation3 + $0x128] sm:$0xff] %v2210
      %2243 = vst [vmem:[#allocation3 + $0x170] sm:$0xff] %v2211
      %2244 = vst [vmem:[#allocation3 + $0x1b8] sm:$0xff] %v2212
      %2245 = vst [vmem:[#allocation3 + $0x200] sm:$0xff] %v2213
      %2246 = vst [vmem:[#allocation3 + $0x248] sm:$0xff] %v2214
      %2247 = vst [vmem:[#allocation3 + $0x290] sm:$0xff] %v2215
      %2248 = vst [vmem:[#allocation3 + $0x2d8] sm:$0xff] %v2216
      %2249 = vst [vmem:[#allocation3 + $0x320] sm:$0xff] %v2217
      %2250 = vst [vmem:[#allocation3 + $0x368] sm:$0xff] %v2218
      %2251 = vst [vmem:[#allocation3 + $0x3b0] sm:$0xff] %v2219
      %2252 = vst [vmem:[#allocation3 + $0x3f8] sm:$0xff] %v2220
      %2253 = vst [vmem:[#allocation3 + $0x440] sm:$0xff] %v2221
      %v2254 = vld [vmem:[#allocation2] sm:$0xe]
      %v2255 = vld [vmem:[#allocation2 + $0x4] sm:$0xf]
      %v2256 = vld [vmem:[#allocation2 + $0x8] sm:$0x1]
      %v2257 = vld [vmem:[#allocation2 + $0xc] sm:$0xe]
      %v2258 = vld [vmem:[#allocation2 + $0x10] sm:$0xf]
      %v2259 = vld [vmem:[#allocation2 + $0x14] sm:$0x1]
      %v2260 = vld [vmem:[#allocation2 + $0x18] sm:$0xe]
      %v2261 = vld [vmem:[#allocation2 + $0x1c] sm:$0xf]
      %v2262 = vld [vmem:[#allocation2 + $0x20] sm:$0x1]
      %v2263 = vld [vmem:[#allocation2 + $0x24] sm:$0xe]
      %v2264 = vld [vmem:[#allocation2 + $0x28] sm:$0xf]
      %v2265 = vld [vmem:[#allocation2 + $0x2c] sm:$0x1]
      %v2266 = vld [vmem:[#allocation2 + $0x30] sm:$0xe]
      %v2267 = vld [vmem:[#allocation2 + $0x34] sm:$0xf]
      %v2268 = vld [vmem:[#allocation2 + $0x38] sm:$0x1]
      %v2269 = vld [vmem:[#allocation2 + $0x3c] sm:$0xe]
      %v2270 = vld [vmem:[#allocation2 + $0x40] sm:$0xf]
      %v2271 = vld [vmem:[#allocation2 + $0x44] sm:$0x1]
      %v2272 = vld [vmem:[#allocation2 + $0x48] sm:$0xe]
      %v2273 = vld [vmem:[#allocation2 + $0x4c] sm:$0xf]
      %v2274 = vld [vmem:[#allocation2 + $0x50] sm:$0x1]
      %v2275 = vld [vmem:[#allocation2 + $0x54] sm:$0xe]
      %v2276 = vld [vmem:[#allocation2 + $0x58] sm:$0xf]
      %v2277 = vld [vmem:[#allocation2 + $0x5c] sm:$0x1]
      %v2278 = vld [vmem:[#allocation2 + $0x60] sm:$0xe]
      %v2279 = vld [vmem:[#allocation2 + $0x64] sm:$0xf]
      %v2280 = vld [vmem:[#allocation2 + $0x68] sm:$0x1]
      %v2281 = vld [vmem:[#allocation2 + $0x6c] sm:$0xe]
      %v2282 = vld [vmem:[#allocation2 + $0x70] sm:$0xf]
      %v2283 = vld [vmem:[#allocation2 + $0x74] sm:$0x1]
      %v2284 = vld [vmem:[#allocation2 + $0x78] sm:$0xe]
      %v2285 = vld [vmem:[#allocation2 + $0x7c] sm:$0xf]
      %v2286 = vld [vmem:[#allocation2 + $0x80] sm:$0x1]
      %v2287 = vld [vmem:[#allocation2 + $0x84] sm:$0xe]
      %v2288 = vld [vmem:[#allocation2 + $0x88] sm:$0xf]
      %v2289 = vld [vmem:[#allocation2 + $0x8c] sm:$0x1]
      %v2290 = vld [vmem:[#allocation2 + $0x90] sm:$0xe]
      %v2291 = vld [vmem:[#allocation2 + $0x94] sm:$0xf]
      %v2292 = vld [vmem:[#allocation2 + $0x98] sm:$0x1]
      %v2293 = vld [vmem:[#allocation2 + $0x9c] sm:$0xe]
      %v2294 = vld [vmem:[#allocation2 + $0xa0] sm:$0xf]
      %v2295 = vld [vmem:[#allocation2 + $0xa4] sm:$0x1]
      %v2296 = vld [vmem:[#allocation2 + $0xa8] sm:$0xe]
      %v2297 = vld [vmem:[#allocation2 + $0xac] sm:$0xf]
      %v2298 = vld [vmem:[#allocation2 + $0xb0] sm:$0x1]
      %v2299 = vld [vmem:[#allocation2 + $0xb4] sm:$0xe]
      %v2300 = vld [vmem:[#allocation2 + $0xb8] sm:$0xf]
      %v2301 = vld [vmem:[#allocation2 + $0xbc] sm:$0x1]
      %vm2350 = vcmask 1042432
      %vm2351 = vcmask 1046532
      %vm2352 = vmor %vm2350, %vm2351
      %v2353 = vrot.slane %v2254, 5
      %v2354 = vrot.slane %v2353, 4
      %v2355 = vrot.slane %v2255, 5
      %v2356 = vsel %vm2352, %v2354, %v2355
      %v2357 = vrot.slane %v2355, 4
      %v2358 = vrot.slane %v2256, 5
      %v2359 = vsel %vm2352, %v2357, %v2358
      %v2360 = vrot.slane %v2257, 5
      %v2361 = vrot.slane %v2360, 4
      %v2362 = vrot.slane %v2258, 5
      %v2363 = vsel %vm2352, %v2361, %v2362
      %v2364 = vrot.slane %v2362, 4
      %v2365 = vrot.slane %v2259, 5
      %v2366 = vsel %vm2352, %v2364, %v2365
      %v2367 = vrot.slane %v2260, 5
      %v2368 = vrot.slane %v2367, 4
      %v2369 = vrot.slane %v2261, 5
      %v2370 = vsel %vm2352, %v2368, %v2369
      %v2371 = vrot.slane %v2369, 4
      %v2372 = vrot.slane %v2262, 5
      %v2373 = vsel %vm2352, %v2371, %v2372
      %v2374 = vrot.slane %v2263, 5
      %v2375 = vrot.slane %v2374, 4
      %v2376 = vrot.slane %v2264, 5
      %v2377 = vsel %vm2352, %v2375, %v2376
      %v2378 = vrot.slane %v2376, 4
      %v2379 = vrot.slane %v2265, 5
      %v2380 = vsel %vm2352, %v2378, %v2379
      %v2381 = vrot.slane %v2266, 5
      %v2382 = vrot.slane %v2381, 4
      %v2383 = vrot.slane %v2267, 5
      %v2384 = vsel %vm2352, %v2382, %v2383
      %v2385 = vrot.slane %v2383, 4
      %v2386 = vrot.slane %v2268, 5
      %v2387 = vsel %vm2352, %v2385, %v2386
      %v2388 = vrot.slane %v2269, 5
      %v2389 = vrot.slane %v2388, 4
      %v2390 = vrot.slane %v2270, 5
      %v2391 = vsel %vm2352, %v2389, %v2390
      %v2392 = vrot.slane %v2390, 4
      %v2393 = vrot.slane %v2271, 5
      %v2394 = vsel %vm2352, %v2392, %v2393
      %v2395 = vrot.slane %v2272, 5
      %v2396 = vrot.slane %v2395, 4
      %v2397 = vrot.slane %v2273, 5
      %v2398 = vsel %vm2352, %v2396, %v2397
      %v2399 = vrot.slane %v2397, 4
      %v2400 = vrot.slane %v2274, 5
      %v2401 = vsel %vm2352, %v2399, %v2400
      %v2402 = vrot.slane %v2275, 5
      %v2403 = vrot.slane %v2402, 4
      %v2404 = vrot.slane %v2276, 5
      %v2405 = vsel %vm2352, %v2403, %v2404
      %v2406 = vrot.slane %v2404, 4
      %v2407 = vrot.slane %v2277, 5
      %v2408 = vsel %vm2352, %v2406, %v2407
      %v2409 = vrot.slane %v2278, 5
      %v2410 = vrot.slane %v2409, 4
      %v2411 = vrot.slane %v2279, 5
      %v2412 = vsel %vm2352, %v2410, %v2411
      %v2413 = vrot.slane %v2411, 4
      %v2414 = vrot.slane %v2280, 5
      %v2415 = vsel %vm2352, %v2413, %v2414
      %v2416 = vrot.slane %v2281, 5
      %v2417 = vrot.slane %v2416, 4
      %v2418 = vrot.slane %v2282, 5
      %v2419 = vsel %vm2352, %v2417, %v2418
      %v2420 = vrot.slane %v2418, 4
      %v2421 = vrot.slane %v2283, 5
      %v2422 = vsel %vm2352, %v2420, %v2421
      %v2423 = vrot.slane %v2284, 5
      %v2424 = vrot.slane %v2423, 4
      %v2425 = vrot.slane %v2285, 5
      %v2426 = vsel %vm2352, %v2424, %v2425
      %v2427 = vrot.slane %v2425, 4
      %v2428 = vrot.slane %v2286, 5
      %v2429 = vsel %vm2352, %v2427, %v2428
      %v2430 = vrot.slane %v2287, 5
      %v2431 = vrot.slane %v2430, 4
      %v2432 = vrot.slane %v2288, 5
      %v2433 = vsel %vm2352, %v2431, %v2432
      %v2434 = vrot.slane %v2432, 4
      %v2435 = vrot.slane %v2289, 5
      %v2436 = vsel %vm2352, %v2434, %v2435
      %v2437 = vrot.slane %v2290, 5
      %v2438 = vrot.slane %v2437, 4
      %v2439 = vrot.slane %v2291, 5
      %v2440 = vsel %vm2352, %v2438, %v2439
      %v2441 = vrot.slane %v2439, 4
      %v2442 = vrot.slane %v2292, 5
      %v2443 = vsel %vm2352, %v2441, %v2442
      %v2444 = vrot.slane %v2293, 5
      %v2445 = vrot.slane %v2444, 4
      %v2446 = vrot.slane %v2294, 5
      %v2447 = vsel %vm2352, %v2445, %v2446
      %v2448 = vrot.slane %v2446, 4
      %v2449 = vrot.slane %v2295, 5
      %v2450 = vsel %vm2352, %v2448, %v2449
      %v2451 = vrot.slane %v2296, 5
      %v2452 = vrot.slane %v2451, 4
      %v2453 = vrot.slane %v2297, 5
      %v2454 = vsel %vm2352, %v2452, %v2453
      %v2455 = vrot.slane %v2453, 4
      %v2456 = vrot.slane %v2298, 5
      %v2457 = vsel %vm2352, %v2455, %v2456
      %v2458 = vrot.slane %v2299, 5
      %v2459 = vrot.slane %v2458, 4
      %v2460 = vrot.slane %v2300, 5
      %v2461 = vsel %vm2352, %v2459, %v2460
      %v2462 = vrot.slane %v2460, 4
      %v2463 = vrot.slane %v2301, 5
      %v2464 = vsel %vm2352, %v2462, %v2463
      %v2465 = vunpack.c.l.b16 %v2356
      %v2466 = vunpack.c.l.b16 %v2359
      %v2467 = vunpack.c.l.b16 %v2363
      %v2468 = vunpack.c.l.b16 %v2366
      %v2469 = vunpack.c.l.b16 %v2370
      %v2470 = vunpack.c.l.b16 %v2373
      %v2471 = vunpack.c.l.b16 %v2377
      %v2472 = vunpack.c.l.b16 %v2380
      %v2473 = vunpack.c.l.b16 %v2384
      %v2474 = vunpack.c.l.b16 %v2387
      %v2475 = vunpack.c.l.b16 %v2391
      %v2476 = vunpack.c.l.b16 %v2394
      %v2477 = vunpack.c.l.b16 %v2398
      %v2478 = vunpack.c.l.b16 %v2401
      %v2479 = vunpack.c.l.b16 %v2405
      %v2480 = vunpack.c.l.b16 %v2408
      %v2481 = vunpack.c.l.b16 %v2412
      %v2482 = vunpack.c.l.b16 %v2415
      %v2483 = vunpack.c.l.b16 %v2419
      %v2484 = vunpack.c.l.b16 %v2422
      %v2485 = vunpack.c.l.b16 %v2426
      %v2486 = vunpack.c.l.b16 %v2429
      %v2487 = vunpack.c.l.b16 %v2433
      %v2488 = vunpack.c.l.b16 %v2436
      %v2489 = vunpack.c.l.b16 %v2440
      %v2490 = vunpack.c.l.b16 %v2443
      %v2491 = vunpack.c.l.b16 %v2447
      %v2492 = vunpack.c.l.b16 %v2450
      %v2493 = vunpack.c.l.b16 %v2454
      %v2494 = vunpack.c.l.b16 %v2457
      %v2495 = vunpack.c.l.b16 %v2461
      %v2496 = vunpack.c.l.b16 %v2464
      %v2497 = vpack.c.b16 %v2466, %v2465
      %v2498 = vpack.c.b16 %v2468, %v2467
      %v2499 = vpack.c.b16 %v2470, %v2469
      %v2500 = vpack.c.b16 %v2472, %v2471
      %v2501 = vpack.c.b16 %v2474, %v2473
      %v2502 = vpack.c.b16 %v2476, %v2475
      %v2503 = vpack.c.b16 %v2478, %v2477
      %v2504 = vpack.c.b16 %v2480, %v2479
      %v2505 = vpack.c.b16 %v2482, %v2481
      %v2506 = vpack.c.b16 %v2484, %v2483
      %v2507 = vpack.c.b16 %v2486, %v2485
      %v2508 = vpack.c.b16 %v2488, %v2487
      %v2509 = vpack.c.b16 %v2490, %v2489
      %v2510 = vpack.c.b16 %v2492, %v2491
      %v2511 = vpack.c.b16 %v2494, %v2493
      %v2512 = vpack.c.b16 %v2496, %v2495
      %2529 = vst [vmem:[#allocation3 + $0x10] sm:$0xff] %v2497
      %2530 = vst [vmem:[#allocation3 + $0x58] sm:$0xff] %v2498
      %2531 = vst [vmem:[#allocation3 + $0xa0] sm:$0xff] %v2499
      %2532 = vst [vmem:[#allocation3 + $0xe8] sm:$0xff] %v2500
      %2533 = vst [vmem:[#allocation3 + $0x130] sm:$0xff] %v2501
      %2534 = vst [vmem:[#allocation3 + $0x178] sm:$0xff] %v2502
      %2535 = vst [vmem:[#allocation3 + $0x1c0] sm:$0xff] %v2503
      %2536 = vst [vmem:[#allocation3 + $0x208] sm:$0xff] %v2504
      %2537 = vst [vmem:[#allocation3 + $0x250] sm:$0xff] %v2505
      %2538 = vst [vmem:[#allocation3 + $0x298] sm:$0xff] %v2506
      %2539 = vst [vmem:[#allocation3 + $0x2e0] sm:$0xff] %v2507
      %2540 = vst [vmem:[#allocation3 + $0x328] sm:$0xff] %v2508
      %2541 = vst [vmem:[#allocation3 + $0x370] sm:$0xff] %v2509
      %2542 = vst [vmem:[#allocation3 + $0x3b8] sm:$0xff] %v2510
      %2543 = vst [vmem:[#allocation3 + $0x400] sm:$0xff] %v2511
      %2544 = vst [vmem:[#allocation3 + $0x448] sm:$0xff] %v2512
      %v2545 = vld [vmem:[%s815] sm:$0xf]
      %v2546 = vld [vmem:[%s815 + $0x4] sm:$0xf]
      %v2547 = vld [vmem:[%s815 + $0xc] sm:$0xf]
      %v2548 = vld [vmem:[%s815 + $0x10] sm:$0xf]
      %v2549 = vld [vmem:[%s815 + $0x18] sm:$0xf]
      %v2550 = vld [vmem:[%s815 + $0x1c] sm:$0xf]
      %v2551 = vld [vmem:[%s815 + $0x24] sm:$0xf]
      %v2552 = vld [vmem:[%s815 + $0x28] sm:$0xf]
      %v2553 = vld [vmem:[%s815 + $0x30] sm:$0xf]
      %v2554 = vld [vmem:[%s815 + $0x34] sm:$0xf]
      %v2555 = vld [vmem:[%s815 + $0x3c] sm:$0xf]
      %v2556 = vld [vmem:[%s815 + $0x40] sm:$0xf]
      %v2557 = vld [vmem:[%s815 + $0x48] sm:$0xf]
      %v2558 = vld [vmem:[%s815 + $0x4c] sm:$0xf]
      %v2559 = vld [vmem:[%s815 + $0x54] sm:$0xf]
      %v2560 = vld [vmem:[%s815 + $0x58] sm:$0xf]
      %v2561 = vld [vmem:[%s815 + $0x60] sm:$0xf]
      %v2562 = vld [vmem:[%s815 + $0x64] sm:$0xf]
      %v2563 = vld [vmem:[%s815 + $0x6c] sm:$0xf]
      %v2564 = vld [vmem:[%s815 + $0x70] sm:$0xf]
      %v2565 = vld [vmem:[%s815 + $0x78] sm:$0xf]
      %v2566 = vld [vmem:[%s815 + $0x7c] sm:$0xf]
      %v2567 = vld [vmem:[%s815 + $0x84] sm:$0xf]
      %v2568 = vld [vmem:[%s815 + $0x88] sm:$0xf]
      %v2569 = vld [vmem:[%s815 + $0x90] sm:$0xf]
      %v2570 = vld [vmem:[%s815 + $0x94] sm:$0xf]
      %v2571 = vld [vmem:[%s815 + $0x9c] sm:$0xf]
      %v2572 = vld [vmem:[%s815 + $0xa0] sm:$0xf]
      %v2573 = vld [vmem:[%s815 + $0xa8] sm:$0xf]
      %v2574 = vld [vmem:[%s815 + $0xac] sm:$0xf]
      %v2575 = vld [vmem:[%s815 + $0xb4] sm:$0xf]
      %v2576 = vld [vmem:[%s815 + $0xb8] sm:$0xf]
      %v2609 = vunpack.c.l.b16 %v2545
      %v2610 = vunpack.c.l.b16 %v2546
      %v2611 = vunpack.c.l.b16 %v2547
      %v2612 = vunpack.c.l.b16 %v2548
      %v2613 = vunpack.c.l.b16 %v2549
      %v2614 = vunpack.c.l.b16 %v2550
      %v2615 = vunpack.c.l.b16 %v2551
      %v2616 = vunpack.c.l.b16 %v2552
      %v2617 = vunpack.c.l.b16 %v2553
      %v2618 = vunpack.c.l.b16 %v2554
      %v2619 = vunpack.c.l.b16 %v2555
      %v2620 = vunpack.c.l.b16 %v2556
      %v2621 = vunpack.c.l.b16 %v2557
      %v2622 = vunpack.c.l.b16 %v2558
      %v2623 = vunpack.c.l.b16 %v2559
      %v2624 = vunpack.c.l.b16 %v2560
      %v2625 = vunpack.c.l.b16 %v2561
      %v2626 = vunpack.c.l.b16 %v2562
      %v2627 = vunpack.c.l.b16 %v2563
      %v2628 = vunpack.c.l.b16 %v2564
      %v2629 = vunpack.c.l.b16 %v2565
      %v2630 = vunpack.c.l.b16 %v2566
      %v2631 = vunpack.c.l.b16 %v2567
      %v2632 = vunpack.c.l.b16 %v2568
      %v2633 = vunpack.c.l.b16 %v2569
      %v2634 = vunpack.c.l.b16 %v2570
      %v2635 = vunpack.c.l.b16 %v2571
      %v2636 = vunpack.c.l.b16 %v2572
      %v2637 = vunpack.c.l.b16 %v2573
      %v2638 = vunpack.c.l.b16 %v2574
      %v2639 = vunpack.c.l.b16 %v2575
      %v2640 = vunpack.c.l.b16 %v2576
      %v2641 = vpack.c.b16 %v2610, %v2609
      %v2642 = vpack.c.b16 %v2612, %v2611
      %v2643 = vpack.c.b16 %v2614, %v2613
      %v2644 = vpack.c.b16 %v2616, %v2615
      %v2645 = vpack.c.b16 %v2618, %v2617
      %v2646 = vpack.c.b16 %v2620, %v2619
      %v2647 = vpack.c.b16 %v2622, %v2621
      %v2648 = vpack.c.b16 %v2624, %v2623
      %v2649 = vpack.c.b16 %v2626, %v2625
      %v2650 = vpack.c.b16 %v2628, %v2627
      %v2651 = vpack.c.b16 %v2630, %v2629
      %v2652 = vpack.c.b16 %v2632, %v2631
      %v2653 = vpack.c.b16 %v2634, %v2633
      %v2654 = vpack.c.b16 %v2636, %v2635
      %v2655 = vpack.c.b16 %v2638, %v2637
      %v2656 = vpack.c.b16 %v2640, %v2639
      %2673 = vst [vmem:[#allocation3 + $0x18] sm:$0xff] %v2641
      %2674 = vst [vmem:[#allocation3 + $0x60] sm:$0xff] %v2642
      %2675 = vst [vmem:[#allocation3 + $0xa8] sm:$0xff] %v2643
      %2676 = vst [vmem:[#allocation3 + $0xf0] sm:$0xff] %v2644
      %2677 = vst [vmem:[#allocation3 + $0x138] sm:$0xff] %v2645
      %2678 = vst [vmem:[#allocation3 + $0x180] sm:$0xff] %v2646
      %2679 = vst [vmem:[#allocation3 + $0x1c8] sm:$0xff] %v2647
      %2680 = vst [vmem:[#allocation3 + $0x210] sm:$0xff] %v2648
      %2681 = vst [vmem:[#allocation3 + $0x258] sm:$0xff] %v2649
      %2682 = vst [vmem:[#allocation3 + $0x2a0] sm:$0xff] %v2650
      %2683 = vst [vmem:[#allocation3 + $0x2e8] sm:$0xff] %v2651
      %2684 = vst [vmem:[#allocation3 + $0x330] sm:$0xff] %v2652
      %2685 = vst [vmem:[#allocation3 + $0x378] sm:$0xff] %v2653
      %2686 = vst [vmem:[#allocation3 + $0x3c0] sm:$0xff] %v2654
      %2687 = vst [vmem:[#allocation3 + $0x408] sm:$0xff] %v2655
      %2688 = vst [vmem:[#allocation3 + $0x450] sm:$0xff] %v2656
      %v2689 = vld [vmem:[%s815] sm:$0xf]
      %v2690 = vld [vmem:[%s815 + $0x4] sm:$0xf]
      %v2691 = vld [vmem:[%s815 + $0x8] sm:$0x1]
      %v2692 = vld [vmem:[%s815 + $0xc] sm:$0xf]
      %v2693 = vld [vmem:[%s815 + $0x10] sm:$0xf]
      %v2694 = vld [vmem:[%s815 + $0x14] sm:$0x1]
      %v2695 = vld [vmem:[%s815 + $0x18] sm:$0xf]
      %v2696 = vld [vmem:[%s815 + $0x1c] sm:$0xf]
      %v2697 = vld [vmem:[%s815 + $0x20] sm:$0x1]
      %v2698 = vld [vmem:[%s815 + $0x24] sm:$0xf]
      %v2699 = vld [vmem:[%s815 + $0x28] sm:$0xf]
      %v2700 = vld [vmem:[%s815 + $0x2c] sm:$0x1]
      %v2701 = vld [vmem:[%s815 + $0x30] sm:$0xf]
      %v2702 = vld [vmem:[%s815 + $0x34] sm:$0xf]
      %v2703 = vld [vmem:[%s815 + $0x38] sm:$0x1]
      %v2704 = vld [vmem:[%s815 + $0x3c] sm:$0xf]
      %v2705 = vld [vmem:[%s815 + $0x40] sm:$0xf]
      %v2706 = vld [vmem:[%s815 + $0x44] sm:$0x1]
      %v2707 = vld [vmem:[%s815 + $0x48] sm:$0xf]
      %v2708 = vld [vmem:[%s815 + $0x4c] sm:$0xf]
      %v2709 = vld [vmem:[%s815 + $0x50] sm:$0x1]
      %v2710 = vld [vmem:[%s815 + $0x54] sm:$0xf]
      %v2711 = vld [vmem:[%s815 + $0x58] sm:$0xf]
      %v2712 = vld [vmem:[%s815 + $0x5c] sm:$0x1]
      %v2713 = vld [vmem:[%s815 + $0x60] sm:$0xf]
      %v2714 = vld [vmem:[%s815 + $0x64] sm:$0xf]
      %v2715 = vld [vmem:[%s815 + $0x68] sm:$0x1]
      %v2716 = vld [vmem:[%s815 + $0x6c] sm:$0xf]
      %v2717 = vld [vmem:[%s815 + $0x70] sm:$0xf]
      %v2718 = vld [vmem:[%s815 + $0x74] sm:$0x1]
      %v2719 = vld [vmem:[%s815 + $0x78] sm:$0xf]
      %v2720 = vld [vmem:[%s815 + $0x7c] sm:$0xf]
      %v2721 = vld [vmem:[%s815 + $0x80] sm:$0x1]
      %v2722 = vld [vmem:[%s815 + $0x84] sm:$0xf]
      %v2723 = vld [vmem:[%s815 + $0x88] sm:$0xf]
      %v2724 = vld [vmem:[%s815 + $0x8c] sm:$0x1]
      %v2725 = vld [vmem:[%s815 + $0x90] sm:$0xf]
      %v2726 = vld [vmem:[%s815 + $0x94] sm:$0xf]
      %v2727 = vld [vmem:[%s815 + $0x98] sm:$0x1]
      %v2728 = vld [vmem:[%s815 + $0x9c] sm:$0xf]
      %v2729 = vld [vmem:[%s815 + $0xa0] sm:$0xf]
      %v2730 = vld [vmem:[%s815 + $0xa4] sm:$0x1]
      %v2731 = vld [vmem:[%s815 + $0xa8] sm:$0xf]
      %v2732 = vld [vmem:[%s815 + $0xac] sm:$0xf]
      %v2733 = vld [vmem:[%s815 + $0xb0] sm:$0x1]
      %v2734 = vld [vmem:[%s815 + $0xb4] sm:$0xf]
      %v2735 = vld [vmem:[%s815 + $0xb8] sm:$0xf]
      %v2736 = vld [vmem:[%s815 + $0xbc] sm:$0x1]
      %v2738 = vshrl.u32 %v2689, 16
      %v2740 = vrot.slane %v2738, 4
      %v2741 = vshll.u32 %v2689, 16
      %v2743 = vrot.slane %v2741, 5
      %v2744 = vor.u32 %v2740, %v2743
      %v2745 = vrot.slane %v2744, 4
      %v2747 = vshll.u32 %v2690, 16
      %v2749 = vrot.slane %v2747, 5
      %v2750 = vsel %vm1789, %v2745, %v2749
      %v2751 = vshrl.u32 %v2690, 16
      %v2753 = vrot.slane %v2751, 4
      %v2754 = vor.u32 %v2753, %v2749
      %v2755 = vrot.slane %v2754, 4
      %v2757 = vshll.u32 %v2691, 16
      %v2759 = vrot.slane %v2757, 5
      %v2760 = vsel %vm1789, %v2755, %v2759
      %v2762 = vshrl.u32 %v2692, 16
      %v2764 = vrot.slane %v2762, 4
      %v2765 = vshll.u32 %v2692, 16
      %v2767 = vrot.slane %v2765, 5
      %v2768 = vor.u32 %v2764, %v2767
      %v2769 = vrot.slane %v2768, 4
      %v2771 = vshll.u32 %v2693, 16
      %v2773 = vrot.slane %v2771, 5
      %v2774 = vsel %vm1789, %v2769, %v2773
      %v2775 = vshrl.u32 %v2693, 16
      %v2777 = vrot.slane %v2775, 4
      %v2778 = vor.u32 %v2777, %v2773
      %v2779 = vrot.slane %v2778, 4
      %v2781 = vshll.u32 %v2694, 16
      %v2783 = vrot.slane %v2781, 5
      %v2784 = vsel %vm1789, %v2779, %v2783
      %v2786 = vshrl.u32 %v2695, 16
      %v2788 = vrot.slane %v2786, 4
      %v2789 = vshll.u32 %v2695, 16
      %v2791 = vrot.slane %v2789, 5
      %v2792 = vor.u32 %v2788, %v2791
      %v2793 = vrot.slane %v2792, 4
      %v2795 = vshll.u32 %v2696, 16
      %v2797 = vrot.slane %v2795, 5
      %v2798 = vsel %vm1789, %v2793, %v2797
      %v2799 = vshrl.u32 %v2696, 16
      %v2801 = vrot.slane %v2799, 4
      %v2802 = vor.u32 %v2801, %v2797
      %v2803 = vrot.slane %v2802, 4
      %v2805 = vshll.u32 %v2697, 16
      %v2807 = vrot.slane %v2805, 5
      %v2808 = vsel %vm1789, %v2803, %v2807
      %v2810 = vshrl.u32 %v2698, 16
      %v2812 = vrot.slane %v2810, 4
      %v2813 = vshll.u32 %v2698, 16
      %v2815 = vrot.slane %v2813, 5
      %v2816 = vor.u32 %v2812, %v2815
      %v2817 = vrot.slane %v2816, 4
      %v2819 = vshll.u32 %v2699, 16
      %v2821 = vrot.slane %v2819, 5
      %v2822 = vsel %vm1789, %v2817, %v2821
      %v2823 = vshrl.u32 %v2699, 16
      %v2825 = vrot.slane %v2823, 4
      %v2826 = vor.u32 %v2825, %v2821
      %v2827 = vrot.slane %v2826, 4
      %v2829 = vshll.u32 %v2700, 16
      %v2831 = vrot.slane %v2829, 5
      %v2832 = vsel %vm1789, %v2827, %v2831
      %v2834 = vshrl.u32 %v2701, 16
      %v2836 = vrot.slane %v2834, 4
      %v2837 = vshll.u32 %v2701, 16
      %v2839 = vrot.slane %v2837, 5
      %v2840 = vor.u32 %v2836, %v2839
      %v2841 = vrot.slane %v2840, 4
      %v2843 = vshll.u32 %v2702, 16
      %v2845 = vrot.slane %v2843, 5
      %v2846 = vsel %vm1789, %v2841, %v2845
      %v2847 = vshrl.u32 %v2702, 16
      %v2849 = vrot.slane %v2847, 4
      %v2850 = vor.u32 %v2849, %v2845
      %v2851 = vrot.slane %v2850, 4
      %v2853 = vshll.u32 %v2703, 16
      %v2855 = vrot.slane %v2853, 5
      %v2856 = vsel %vm1789, %v2851, %v2855
      %v2858 = vshrl.u32 %v2704, 16
      %v2860 = vrot.slane %v2858, 4
      %v2861 = vshll.u32 %v2704, 16
      %v2863 = vrot.slane %v2861, 5
      %v2864 = vor.u32 %v2860, %v2863
      %v2865 = vrot.slane %v2864, 4
      %v2867 = vshll.u32 %v2705, 16
      %v2869 = vrot.slane %v2867, 5
      %v2870 = vsel %vm1789, %v2865, %v2869
      %v2871 = vshrl.u32 %v2705, 16
      %v2873 = vrot.slane %v2871, 4
      %v2874 = vor.u32 %v2873, %v2869
      %v2875 = vrot.slane %v2874, 4
      %v2877 = vshll.u32 %v2706, 16
      %v2879 = vrot.slane %v2877, 5
      %v2880 = vsel %vm1789, %v2875, %v2879
      %v2882 = vshrl.u32 %v2707, 16
      %v2884 = vrot.slane %v2882, 4
      %v2885 = vshll.u32 %v2707, 16
      %v2887 = vrot.slane %v2885, 5
      %v2888 = vor.u32 %v2884, %v2887
      %v2889 = vrot.slane %v2888, 4
      %v2891 = vshll.u32 %v2708, 16
      %v2893 = vrot.slane %v2891, 5
      %v2894 = vsel %vm1789, %v2889, %v2893
      %v2895 = vshrl.u32 %v2708, 16
      %v2897 = vrot.slane %v2895, 4
      %v2898 = vor.u32 %v2897, %v2893
      %v2899 = vrot.slane %v2898, 4
      %v2901 = vshll.u32 %v2709, 16
      %v2903 = vrot.slane %v2901, 5
      %v2904 = vsel %vm1789, %v2899, %v2903
      %v2906 = vshrl.u32 %v2710, 16
      %v2908 = vrot.slane %v2906, 4
      %v2909 = vshll.u32 %v2710, 16
      %v2911 = vrot.slane %v2909, 5
      %v2912 = vor.u32 %v2908, %v2911
      %v2913 = vrot.slane %v2912, 4
      %v2915 = vshll.u32 %v2711, 16
      %v2917 = vrot.slane %v2915, 5
      %v2918 = vsel %vm1789, %v2913, %v2917
      %v2919 = vshrl.u32 %v2711, 16
      %v2921 = vrot.slane %v2919, 4
      %v2922 = vor.u32 %v2921, %v2917
      %v2923 = vrot.slane %v2922, 4
      %v2925 = vshll.u32 %v2712, 16
      %v2927 = vrot.slane %v2925, 5
      %v2928 = vsel %vm1789, %v2923, %v2927
      %v2930 = vshrl.u32 %v2713, 16
      %v2932 = vrot.slane %v2930, 4
      %v2933 = vshll.u32 %v2713, 16
      %v2935 = vrot.slane %v2933, 5
      %v2936 = vor.u32 %v2932, %v2935
      %v2937 = vrot.slane %v2936, 4
      %v2939 = vshll.u32 %v2714, 16
      %v2941 = vrot.slane %v2939, 5
      %v2942 = vsel %vm1789, %v2937, %v2941
      %v2943 = vshrl.u32 %v2714, 16
      %v2945 = vrot.slane %v2943, 4
      %v2946 = vor.u32 %v2945, %v2941
      %v2947 = vrot.slane %v2946, 4
      %v2949 = vshll.u32 %v2715, 16
      %v2951 = vrot.slane %v2949, 5
      %v2952 = vsel %vm1789, %v2947, %v2951
      %v2954 = vshrl.u32 %v2716, 16
      %v2956 = vrot.slane %v2954, 4
      %v2957 = vshll.u32 %v2716, 16
      %v2959 = vrot.slane %v2957, 5
      %v2960 = vor.u32 %v2956, %v2959
      %v2961 = vrot.slane %v2960, 4
      %v2963 = vshll.u32 %v2717, 16
      %v2965 = vrot.slane %v2963, 5
      %v2966 = vsel %vm1789, %v2961, %v2965
      %v2967 = vshrl.u32 %v2717, 16
      %v2969 = vrot.slane %v2967, 4
      %v2970 = vor.u32 %v2969, %v2965
      %v2971 = vrot.slane %v2970, 4
      %v2973 = vshll.u32 %v2718, 16
      %v2975 = vrot.slane %v2973, 5
      %v2976 = vsel %vm1789, %v2971, %v2975
      %v2978 = vshrl.u32 %v2719, 16
      %v2980 = vrot.slane %v2978, 4
      %v2981 = vshll.u32 %v2719, 16
      %v2983 = vrot.slane %v2981, 5
      %v2984 = vor.u32 %v2980, %v2983
      %v2985 = vrot.slane %v2984, 4
      %v2987 = vshll.u32 %v2720, 16
      %v2989 = vrot.slane %v2987, 5
      %v2990 = vsel %vm1789, %v2985, %v2989
      %v2991 = vshrl.u32 %v2720, 16
      %v2993 = vrot.slane %v2991, 4
      %v2994 = vor.u32 %v2993, %v2989
      %v2995 = vrot.slane %v2994, 4
      %v2997 = vshll.u32 %v2721, 16
      %v2999 = vrot.slane %v2997, 5
      %v3000 = vsel %vm1789, %v2995, %v2999
      %v3002 = vshrl.u32 %v2722, 16
      %v3004 = vrot.slane %v3002, 4
      %v3005 = vshll.u32 %v2722, 16
      %v3007 = vrot.slane %v3005, 5
      %v3008 = vor.u32 %v3004, %v3007
      %v3009 = vrot.slane %v3008, 4
      %v3011 = vshll.u32 %v2723, 16
      %v3013 = vrot.slane %v3011, 5
      %v3014 = vsel %vm1789, %v3009, %v3013
      %v3015 = vshrl.u32 %v2723, 16
      %v3017 = vrot.slane %v3015, 4
      %v3018 = vor.u32 %v3017, %v3013
      %v3019 = vrot.slane %v3018, 4
      %v3021 = vshll.u32 %v2724, 16
      %v3023 = vrot.slane %v3021, 5
      %v3024 = vsel %vm1789, %v3019, %v3023
      %v3026 = vshrl.u32 %v2725, 16
      %v3028 = vrot.slane %v3026, 4
      %v3029 = vshll.u32 %v2725, 16
      %v3031 = vrot.slane %v3029, 5
      %v3032 = vor.u32 %v3028, %v3031
      %v3033 = vrot.slane %v3032, 4
      %v3035 = vshll.u32 %v2726, 16
      %v3037 = vrot.slane %v3035, 5
      %v3038 = vsel %vm1789, %v3033, %v3037
      %v3039 = vshrl.u32 %v2726, 16
      %v3041 = vrot.slane %v3039, 4
      %v3042 = vor.u32 %v3041, %v3037
      %v3043 = vrot.slane %v3042, 4
      %v3045 = vshll.u32 %v2727, 16
      %v3047 = vrot.slane %v3045, 5
      %v3048 = vsel %vm1789, %v3043, %v3047
      %v3050 = vshrl.u32 %v2728, 16
      %v3052 = vrot.slane %v3050, 4
      %v3053 = vshll.u32 %v2728, 16
      %v3055 = vrot.slane %v3053, 5
      %v3056 = vor.u32 %v3052, %v3055
      %v3057 = vrot.slane %v3056, 4
      %v3059 = vshll.u32 %v2729, 16
      %v3061 = vrot.slane %v3059, 5
      %v3062 = vsel %vm1789, %v3057, %v3061
      %v3063 = vshrl.u32 %v2729, 16
      %v3065 = vrot.slane %v3063, 4
      %v3066 = vor.u32 %v3065, %v3061
      %v3067 = vrot.slane %v3066, 4
      %v3069 = vshll.u32 %v2730, 16
      %v3071 = vrot.slane %v3069, 5
      %v3072 = vsel %vm1789, %v3067, %v3071
      %v3074 = vshrl.u32 %v2731, 16
      %v3076 = vrot.slane %v3074, 4
      %v3077 = vshll.u32 %v2731, 16
      %v3079 = vrot.slane %v3077, 5
      %v3080 = vor.u32 %v3076, %v3079
      %v3081 = vrot.slane %v3080, 4
      %v3083 = vshll.u32 %v2732, 16
      %v3085 = vrot.slane %v3083, 5
      %v3086 = vsel %vm1789, %v3081, %v3085
      %v3087 = vshrl.u32 %v2732, 16
      %v3089 = vrot.slane %v3087, 4
      %v3090 = vor.u32 %v3089, %v3085
      %v3091 = vrot.slane %v3090, 4
      %v3093 = vshll.u32 %v2733, 16
      %v3095 = vrot.slane %v3093, 5
      %v3096 = vsel %vm1789, %v3091, %v3095
      %v3098 = vshrl.u32 %v2734, 16
      %v3100 = vrot.slane %v3098, 4
      %v3101 = vshll.u32 %v2734, 16
      %v3103 = vrot.slane %v3101, 5
      %v3104 = vor.u32 %v3100, %v3103
      %v3105 = vrot.slane %v3104, 4
      %v3107 = vshll.u32 %v2735, 16
      %v3109 = vrot.slane %v3107, 5
      %v3110 = vsel %vm1789, %v3105, %v3109
      %v3111 = vshrl.u32 %v2735, 16
      %v3113 = vrot.slane %v3111, 4
      %v3114 = vor.u32 %v3113, %v3109
      %v3115 = vrot.slane %v3114, 4
      %v3117 = vshll.u32 %v2736, 16
      %v3119 = vrot.slane %v3117, 5
      %v3120 = vsel %vm1789, %v3115, %v3119
      %v3121 = vunpack.c.l.b16 %v2750
      %v3122 = vunpack.c.l.b16 %v2760
      %v3123 = vunpack.c.l.b16 %v2774
      %v3124 = vunpack.c.l.b16 %v2784
      %v3125 = vunpack.c.l.b16 %v2798
      %v3126 = vunpack.c.l.b16 %v2808
      %v3127 = vunpack.c.l.b16 %v2822
      %v3128 = vunpack.c.l.b16 %v2832
      %v3129 = vunpack.c.l.b16 %v2846
      %v3130 = vunpack.c.l.b16 %v2856
      %v3131 = vunpack.c.l.b16 %v2870
      %v3132 = vunpack.c.l.b16 %v2880
      %v3133 = vunpack.c.l.b16 %v2894
      %v3134 = vunpack.c.l.b16 %v2904
      %v3135 = vunpack.c.l.b16 %v2918
      %v3136 = vunpack.c.l.b16 %v2928
      %v3137 = vunpack.c.l.b16 %v2942
      %v3138 = vunpack.c.l.b16 %v2952
      %v3139 = vunpack.c.l.b16 %v2966
      %v3140 = vunpack.c.l.b16 %v2976
      %v3141 = vunpack.c.l.b16 %v2990
      %v3142 = vunpack.c.l.b16 %v3000
      %v3143 = vunpack.c.l.b16 %v3014
      %v3144 = vunpack.c.l.b16 %v3024
      %v3145 = vunpack.c.l.b16 %v3038
      %v3146 = vunpack.c.l.b16 %v3048
      %v3147 = vunpack.c.l.b16 %v3062
      %v3148 = vunpack.c.l.b16 %v3072
      %v3149 = vunpack.c.l.b16 %v3086
      %v3150 = vunpack.c.l.b16 %v3096
      %v3151 = vunpack.c.l.b16 %v3110
      %v3152 = vunpack.c.l.b16 %v3120
      %v3153 = vpack.c.b16 %v3122, %v3121
      %v3154 = vpack.c.b16 %v3124, %v3123
      %v3155 = vpack.c.b16 %v3126, %v3125
      %v3156 = vpack.c.b16 %v3128, %v3127
      %v3157 = vpack.c.b16 %v3130, %v3129
      %v3158 = vpack.c.b16 %v3132, %v3131
      %v3159 = vpack.c.b16 %v3134, %v3133
      %v3160 = vpack.c.b16 %v3136, %v3135
      %v3161 = vpack.c.b16 %v3138, %v3137
      %v3162 = vpack.c.b16 %v3140, %v3139
      %v3163 = vpack.c.b16 %v3142, %v3141
      %v3164 = vpack.c.b16 %v3144, %v3143
      %v3165 = vpack.c.b16 %v3146, %v3145
      %v3166 = vpack.c.b16 %v3148, %v3147
      %v3167 = vpack.c.b16 %v3150, %v3149
      %v3168 = vpack.c.b16 %v3152, %v3151
      %3185 = vst [vmem:[#allocation3 + $0x20] sm:$0xff] %v3153
      %3186 = vst [vmem:[#allocation3 + $0x68] sm:$0xff] %v3154
      %3187 = vst [vmem:[#allocation3 + $0xb0] sm:$0xff] %v3155
      %3188 = vst [vmem:[#allocation3 + $0xf8] sm:$0xff] %v3156
      %3189 = vst [vmem:[#allocation3 + $0x140] sm:$0xff] %v3157
      %3190 = vst [vmem:[#allocation3 + $0x188] sm:$0xff] %v3158
      %3191 = vst [vmem:[#allocation3 + $0x1d0] sm:$0xff] %v3159
      %3192 = vst [vmem:[#allocation3 + $0x218] sm:$0xff] %v3160
      %3193 = vst [vmem:[#allocation3 + $0x260] sm:$0xff] %v3161
      %3194 = vst [vmem:[#allocation3 + $0x2a8] sm:$0xff] %v3162
      %3195 = vst [vmem:[#allocation3 + $0x2f0] sm:$0xff] %v3163
      %3196 = vst [vmem:[#allocation3 + $0x338] sm:$0xff] %v3164
      %3197 = vst [vmem:[#allocation3 + $0x380] sm:$0xff] %v3165
      %3198 = vst [vmem:[#allocation3 + $0x3c8] sm:$0xff] %v3166
      %3199 = vst [vmem:[#allocation3 + $0x410] sm:$0xff] %v3167
      %3200 = vst [vmem:[#allocation3 + $0x458] sm:$0xff] %v3168
      %v3201 = vld [vmem:[%s815] sm:$0xe]
      %v3202 = vld [vmem:[%s815 + $0x4] sm:$0xf]
      %v3203 = vld [vmem:[%s815 + $0x8] sm:$0x1]
      %v3204 = vld [vmem:[%s815 + $0xc] sm:$0xe]
      %v3205 = vld [vmem:[%s815 + $0x10] sm:$0xf]
      %v3206 = vld [vmem:[%s815 + $0x14] sm:$0x1]
      %v3207 = vld [vmem:[%s815 + $0x18] sm:$0xe]
      %v3208 = vld [vmem:[%s815 + $0x1c] sm:$0xf]
      %v3209 = vld [vmem:[%s815 + $0x20] sm:$0x1]
      %v3210 = vld [vmem:[%s815 + $0x24] sm:$0xe]
      %v3211 = vld [vmem:[%s815 + $0x28] sm:$0xf]
      %v3212 = vld [vmem:[%s815 + $0x2c] sm:$0x1]
      %v3213 = vld [vmem:[%s815 + $0x30] sm:$0xe]
      %v3214 = vld [vmem:[%s815 + $0x34] sm:$0xf]
      %v3215 = vld [vmem:[%s815 + $0x38] sm:$0x1]
      %v3216 = vld [vmem:[%s815 + $0x3c] sm:$0xe]
      %v3217 = vld [vmem:[%s815 + $0x40] sm:$0xf]
      %v3218 = vld [vmem:[%s815 + $0x44] sm:$0x1]
      %v3219 = vld [vmem:[%s815 + $0x48] sm:$0xe]
      %v3220 = vld [vmem:[%s815 + $0x4c] sm:$0xf]
      %v3221 = vld [vmem:[%s815 + $0x50] sm:$0x1]
      %v3222 = vld [vmem:[%s815 + $0x54] sm:$0xe]
      %v3223 = vld [vmem:[%s815 + $0x58] sm:$0xf]
      %v3224 = vld [vmem:[%s815 + $0x5c] sm:$0x1]
      %v3225 = vld [vmem:[%s815 + $0x60] sm:$0xe]
      %v3226 = vld [vmem:[%s815 + $0x64] sm:$0xf]
      %v3227 = vld [vmem:[%s815 + $0x68] sm:$0x1]
      %v3228 = vld [vmem:[%s815 + $0x6c] sm:$0xe]
      %v3229 = vld [vmem:[%s815 + $0x70] sm:$0xf]
      %v3230 = vld [vmem:[%s815 + $0x74] sm:$0x1]
      %v3231 = vld [vmem:[%s815 + $0x78] sm:$0xe]
      %v3232 = vld [vmem:[%s815 + $0x7c] sm:$0xf]
      %v3233 = vld [vmem:[%s815 + $0x80] sm:$0x1]
      %v3234 = vld [vmem:[%s815 + $0x84] sm:$0xe]
      %v3235 = vld [vmem:[%s815 + $0x88] sm:$0xf]
      %v3236 = vld [vmem:[%s815 + $0x8c] sm:$0x1]
      %v3237 = vld [vmem:[%s815 + $0x90] sm:$0xe]
      %v3238 = vld [vmem:[%s815 + $0x94] sm:$0xf]
      %v3239 = vld [vmem:[%s815 + $0x98] sm:$0x1]
      %v3240 = vld [vmem:[%s815 + $0x9c] sm:$0xe]
      %v3241 = vld [vmem:[%s815 + $0xa0] sm:$0xf]
      %v3242 = vld [vmem:[%s815 + $0xa4] sm:$0x1]
      %v3243 = vld [vmem:[%s815 + $0xa8] sm:$0xe]
      %v3244 = vld [vmem:[%s815 + $0xac] sm:$0xf]
      %v3245 = vld [vmem:[%s815 + $0xb0] sm:$0x1]
      %v3246 = vld [vmem:[%s815 + $0xb4] sm:$0xe]
      %v3247 = vld [vmem:[%s815 + $0xb8] sm:$0xf]
      %v3248 = vld [vmem:[%s815 + $0xbc] sm:$0x1]
      %v3297 = vrot.slane %v3201, 5
      %v3298 = vrot.slane %v3297, 4
      %v3299 = vrot.slane %v3202, 5
      %v3300 = vsel %vm2352, %v3298, %v3299
      %v3301 = vrot.slane %v3299, 4
      %v3302 = vrot.slane %v3203, 5
      %v3303 = vsel %vm2352, %v3301, %v3302
      %v3304 = vrot.slane %v3204, 5
      %v3305 = vrot.slane %v3304, 4
      %v3306 = vrot.slane %v3205, 5
      %v3307 = vsel %vm2352, %v3305, %v3306
      %v3308 = vrot.slane %v3306, 4
      %v3309 = vrot.slane %v3206, 5
      %v3310 = vsel %vm2352, %v3308, %v3309
      %v3311 = vrot.slane %v3207, 5
      %v3312 = vrot.slane %v3311, 4
      %v3313 = vrot.slane %v3208, 5
      %v3314 = vsel %vm2352, %v3312, %v3313
      %v3315 = vrot.slane %v3313, 4
      %v3316 = vrot.slane %v3209, 5
      %v3317 = vsel %vm2352, %v3315, %v3316
      %v3318 = vrot.slane %v3210, 5
      %v3319 = vrot.slane %v3318, 4
      %v3320 = vrot.slane %v3211, 5
      %v3321 = vsel %vm2352, %v3319, %v3320
      %v3322 = vrot.slane %v3320, 4
      %v3323 = vrot.slane %v3212, 5
      %v3324 = vsel %vm2352, %v3322, %v3323
      %v3325 = vrot.slane %v3213, 5
      %v3326 = vrot.slane %v3325, 4
      %v3327 = vrot.slane %v3214, 5
      %v3328 = vsel %vm2352, %v3326, %v3327
      %v3329 = vrot.slane %v3327, 4
      %v3330 = vrot.slane %v3215, 5
      %v3331 = vsel %vm2352, %v3329, %v3330
      %v3332 = vrot.slane %v3216, 5
      %v3333 = vrot.slane %v3332, 4
      %v3334 = vrot.slane %v3217, 5
      %v3335 = vsel %vm2352, %v3333, %v3334
      %v3336 = vrot.slane %v3334, 4
      %v3337 = vrot.slane %v3218, 5
      %v3338 = vsel %vm2352, %v3336, %v3337
      %v3339 = vrot.slane %v3219, 5
      %v3340 = vrot.slane %v3339, 4
      %v3341 = vrot.slane %v3220, 5
      %v3342 = vsel %vm2352, %v3340, %v3341
      %v3343 = vrot.slane %v3341, 4
      %v3344 = vrot.slane %v3221, 5
      %v3345 = vsel %vm2352, %v3343, %v3344
      %v3346 = vrot.slane %v3222, 5
      %v3347 = vrot.slane %v3346, 4
      %v3348 = vrot.slane %v3223, 5
      %v3349 = vsel %vm2352, %v3347, %v3348
      %v3350 = vrot.slane %v3348, 4
      %v3351 = vrot.slane %v3224, 5
      %v3352 = vsel %vm2352, %v3350, %v3351
      %v3353 = vrot.slane %v3225, 5
      %v3354 = vrot.slane %v3353, 4
      %v3355 = vrot.slane %v3226, 5
      %v3356 = vsel %vm2352, %v3354, %v3355
      %v3357 = vrot.slane %v3355, 4
      %v3358 = vrot.slane %v3227, 5
      %v3359 = vsel %vm2352, %v3357, %v3358
      %v3360 = vrot.slane %v3228, 5
      %v3361 = vrot.slane %v3360, 4
      %v3362 = vrot.slane %v3229, 5
      %v3363 = vsel %vm2352, %v3361, %v3362
      %v3364 = vrot.slane %v3362, 4
      %v3365 = vrot.slane %v3230, 5
      %v3366 = vsel %vm2352, %v3364, %v3365
      %v3367 = vrot.slane %v3231, 5
      %v3368 = vrot.slane %v3367, 4
      %v3369 = vrot.slane %v3232, 5
      %v3370 = vsel %vm2352, %v3368, %v3369
      %v3371 = vrot.slane %v3369, 4
      %v3372 = vrot.slane %v3233, 5
      %v3373 = vsel %vm2352, %v3371, %v3372
      %v3374 = vrot.slane %v3234, 5
      %v3375 = vrot.slane %v3374, 4
      %v3376 = vrot.slane %v3235, 5
      %v3377 = vsel %vm2352, %v3375, %v3376
      %v3378 = vrot.slane %v3376, 4
      %v3379 = vrot.slane %v3236, 5
      %v3380 = vsel %vm2352, %v3378, %v3379
      %v3381 = vrot.slane %v3237, 5
      %v3382 = vrot.slane %v3381, 4
      %v3383 = vrot.slane %v3238, 5
      %v3384 = vsel %vm2352, %v3382, %v3383
      %v3385 = vrot.slane %v3383, 4
      %v3386 = vrot.slane %v3239, 5
      %v3387 = vsel %vm2352, %v3385, %v3386
      %v3388 = vrot.slane %v3240, 5
      %v3389 = vrot.slane %v3388, 4
      %v3390 = vrot.slane %v3241, 5
      %v3391 = vsel %vm2352, %v3389, %v3390
      %v3392 = vrot.slane %v3390, 4
      %v3393 = vrot.slane %v3242, 5
      %v3394 = vsel %vm2352, %v3392, %v3393
      %v3395 = vrot.slane %v3243, 5
      %v3396 = vrot.slane %v3395, 4
      %v3397 = vrot.slane %v3244, 5
      %v3398 = vsel %vm2352, %v3396, %v3397
      %v3399 = vrot.slane %v3397, 4
      %v3400 = vrot.slane %v3245, 5
      %v3401 = vsel %vm2352, %v3399, %v3400
      %v3402 = vrot.slane %v3246, 5
      %v3403 = vrot.slane %v3402, 4
      %v3404 = vrot.slane %v3247, 5
      %v3405 = vsel %vm2352, %v3403, %v3404
      %v3406 = vrot.slane %v3404, 4
      %v3407 = vrot.slane %v3248, 5
      %v3408 = vsel %vm2352, %v3406, %v3407
      %v3409 = vunpack.c.l.b16 %v3300
      %v3410 = vunpack.c.l.b16 %v3303
      %v3411 = vunpack.c.l.b16 %v3307
      %v3412 = vunpack.c.l.b16 %v3310
      %v3413 = vunpack.c.l.b16 %v3314
      %v3414 = vunpack.c.l.b16 %v3317
      %v3415 = vunpack.c.l.b16 %v3321
      %v3416 = vunpack.c.l.b16 %v3324
      %v3417 = vunpack.c.l.b16 %v3328
      %v3418 = vunpack.c.l.b16 %v3331
      %v3419 = vunpack.c.l.b16 %v3335
      %v3420 = vunpack.c.l.b16 %v3338
      %v3421 = vunpack.c.l.b16 %v3342
      %v3422 = vunpack.c.l.b16 %v3345
      %v3423 = vunpack.c.l.b16 %v3349
      %v3424 = vunpack.c.l.b16 %v3352
      %v3425 = vunpack.c.l.b16 %v3356
      %v3426 = vunpack.c.l.b16 %v3359
      %v3427 = vunpack.c.l.b16 %v3363
      %v3428 = vunpack.c.l.b16 %v3366
      %v3429 = vunpack.c.l.b16 %v3370
      %v3430 = vunpack.c.l.b16 %v3373
      %v3431 = vunpack.c.l.b16 %v3377
      %v3432 = vunpack.c.l.b16 %v3380
      %v3433 = vunpack.c.l.b16 %v3384
      %v3434 = vunpack.c.l.b16 %v3387
      %v3435 = vunpack.c.l.b16 %v3391
      %v3436 = vunpack.c.l.b16 %v3394
      %v3437 = vunpack.c.l.b16 %v3398
      %v3438 = vunpack.c.l.b16 %v3401
      %v3439 = vunpack.c.l.b16 %v3405
      %v3440 = vunpack.c.l.b16 %v3408
      %v3441 = vpack.c.b16 %v3410, %v3409
      %v3442 = vpack.c.b16 %v3412, %v3411
      %v3443 = vpack.c.b16 %v3414, %v3413
      %v3444 = vpack.c.b16 %v3416, %v3415
      %v3445 = vpack.c.b16 %v3418, %v3417
      %v3446 = vpack.c.b16 %v3420, %v3419
      %v3447 = vpack.c.b16 %v3422, %v3421
      %v3448 = vpack.c.b16 %v3424, %v3423
      %v3449 = vpack.c.b16 %v3426, %v3425
      %v3450 = vpack.c.b16 %v3428, %v3427
      %v3451 = vpack.c.b16 %v3430, %v3429
      %v3452 = vpack.c.b16 %v3432, %v3431
      %v3453 = vpack.c.b16 %v3434, %v3433
      %v3454 = vpack.c.b16 %v3436, %v3435
      %v3455 = vpack.c.b16 %v3438, %v3437
      %v3456 = vpack.c.b16 %v3440, %v3439
      %3473 = vst [vmem:[#allocation3 + $0x28] sm:$0xff] %v3441
      %3474 = vst [vmem:[#allocation3 + $0x70] sm:$0xff] %v3442
      %3475 = vst [vmem:[#allocation3 + $0xb8] sm:$0xff] %v3443
      %3476 = vst [vmem:[#allocation3 + $0x100] sm:$0xff] %v3444
      %3477 = vst [vmem:[#allocation3 + $0x148] sm:$0xff] %v3445
      %3478 = vst [vmem:[#allocation3 + $0x190] sm:$0xff] %v3446
      %3479 = vst [vmem:[#allocation3 + $0x1d8] sm:$0xff] %v3447
      %3480 = vst [vmem:[#allocation3 + $0x220] sm:$0xff] %v3448
      %3481 = vst [vmem:[#allocation3 + $0x268] sm:$0xff] %v3449
      %3482 = vst [vmem:[#allocation3 + $0x2b0] sm:$0xff] %v3450
      %3483 = vst [vmem:[#allocation3 + $0x2f8] sm:$0xff] %v3451
      %3484 = vst [vmem:[#allocation3 + $0x340] sm:$0xff] %v3452
      %3485 = vst [vmem:[#allocation3 + $0x388] sm:$0xff] %v3453
      %3486 = vst [vmem:[#allocation3 + $0x3d0] sm:$0xff] %v3454
      %3487 = vst [vmem:[#allocation3 + $0x418] sm:$0xff] %v3455
      %3488 = vst [vmem:[#allocation3 + $0x460] sm:$0xff] %v3456
      %s3489 = scalar_lea.vmem [#allocation2], 24
      %v3490 = vld [vmem:[%s3489] sm:$0xf]
      %v3491 = vld [vmem:[%s3489 + $0x4] sm:$0xf]
      %v3492 = vld [vmem:[%s3489 + $0xc] sm:$0xf]
      %v3493 = vld [vmem:[%s3489 + $0x10] sm:$0xf]
      %v3494 = vld [vmem:[%s3489 + $0x18] sm:$0xf]
      %v3495 = vld [vmem:[%s3489 + $0x1c] sm:$0xf]
      %v3496 = vld [vmem:[%s3489 + $0x24] sm:$0xf]
      %v3497 = vld [vmem:[%s3489 + $0x28] sm:$0xf]
      %v3498 = vld [vmem:[%s3489 + $0x30] sm:$0xf]
      %v3499 = vld [vmem:[%s3489 + $0x34] sm:$0xf]
      %v3500 = vld [vmem:[%s3489 + $0x3c] sm:$0xf]
      %v3501 = vld [vmem:[%s3489 + $0x40] sm:$0xf]
      %v3502 = vld [vmem:[%s3489 + $0x48] sm:$0xf]
      %v3503 = vld [vmem:[%s3489 + $0x4c] sm:$0xf]
      %v3504 = vld [vmem:[%s3489 + $0x54] sm:$0xf]
      %v3505 = vld [vmem:[%s3489 + $0x58] sm:$0xf]
      %v3506 = vld [vmem:[%s3489 + $0x60] sm:$0xf]
      %v3507 = vld [vmem:[%s3489 + $0x64] sm:$0xf]
      %v3508 = vld [vmem:[%s3489 + $0x6c] sm:$0xf]
      %v3509 = vld [vmem:[%s3489 + $0x70] sm:$0xf]
      %v3510 = vld [vmem:[%s3489 + $0x78] sm:$0xf]
      %v3511 = vld [vmem:[%s3489 + $0x7c] sm:$0xf]
      %v3512 = vld [vmem:[%s3489 + $0x84] sm:$0xf]
      %v3513 = vld [vmem:[%s3489 + $0x88] sm:$0xf]
      %v3514 = vld [vmem:[%s3489 + $0x90] sm:$0xf]
      %v3515 = vld [vmem:[%s3489 + $0x94] sm:$0xf]
      %v3516 = vld [vmem:[%s3489 + $0x9c] sm:$0xf]
      %v3517 = vld [vmem:[%s3489 + $0xa0] sm:$0xf]
      %v3518 = vld [vmem:[%s3489 + $0xa8] sm:$0xf]
      %v3519 = vld [vmem:[%s3489 + $0xac] sm:$0xf]
      %v3520 = vld [vmem:[%s3489 + $0xb4] sm:$0xf]
      %v3521 = vld [vmem:[%s3489 + $0xb8] sm:$0xf]
      %v3554 = vunpack.c.l.b16 %v3490
      %v3555 = vunpack.c.l.b16 %v3491
      %v3556 = vunpack.c.l.b16 %v3492
      %v3557 = vunpack.c.l.b16 %v3493
      %v3558 = vunpack.c.l.b16 %v3494
      %v3559 = vunpack.c.l.b16 %v3495
      %v3560 = vunpack.c.l.b16 %v3496
      %v3561 = vunpack.c.l.b16 %v3497
      %v3562 = vunpack.c.l.b16 %v3498
      %v3563 = vunpack.c.l.b16 %v3499
      %v3564 = vunpack.c.l.b16 %v3500
      %v3565 = vunpack.c.l.b16 %v3501
      %v3566 = vunpack.c.l.b16 %v3502
      %v3567 = vunpack.c.l.b16 %v3503
      %v3568 = vunpack.c.l.b16 %v3504
      %v3569 = vunpack.c.l.b16 %v3505
      %v3570 = vunpack.c.l.b16 %v3506
      %v3571 = vunpack.c.l.b16 %v3507
      %v3572 = vunpack.c.l.b16 %v3508
      %v3573 = vunpack.c.l.b16 %v3509
      %v3574 = vunpack.c.l.b16 %v3510
      %v3575 = vunpack.c.l.b16 %v3511
      %v3576 = vunpack.c.l.b16 %v3512
      %v3577 = vunpack.c.l.b16 %v3513
      %v3578 = vunpack.c.l.b16 %v3514
      %v3579 = vunpack.c.l.b16 %v3515
      %v3580 = vunpack.c.l.b16 %v3516
      %v3581 = vunpack.c.l.b16 %v3517
      %v3582 = vunpack.c.l.b16 %v3518
      %v3583 = vunpack.c.l.b16 %v3519
      %v3584 = vunpack.c.l.b16 %v3520
      %v3585 = vunpack.c.l.b16 %v3521
      %v3586 = vpack.c.b16 %v3555, %v3554
      %v3587 = vpack.c.b16 %v3557, %v3556
      %v3588 = vpack.c.b16 %v3559, %v3558
      %v3589 = vpack.c.b16 %v3561, %v3560
      %v3590 = vpack.c.b16 %v3563, %v3562
      %v3591 = vpack.c.b16 %v3565, %v3564
      %v3592 = vpack.c.b16 %v3567, %v3566
      %v3593 = vpack.c.b16 %v3569, %v3568
      %v3594 = vpack.c.b16 %v3571, %v3570
      %v3595 = vpack.c.b16 %v3573, %v3572
      %v3596 = vpack.c.b16 %v3575, %v3574
      %v3597 = vpack.c.b16 %v3577, %v3576
      %v3598 = vpack.c.b16 %v3579, %v3578
      %v3599 = vpack.c.b16 %v3581, %v3580
      %v3600 = vpack.c.b16 %v3583, %v3582
      %v3601 = vpack.c.b16 %v3585, %v3584
      %3618 = vst [vmem:[#allocation3 + $0x30] sm:$0xff] %v3586
      %3619 = vst [vmem:[#allocation3 + $0x78] sm:$0xff] %v3587
      %3620 = vst [vmem:[#allocation3 + $0xc0] sm:$0xff] %v3588
      %3621 = vst [vmem:[#allocation3 + $0x108] sm:$0xff] %v3589
      %3622 = vst [vmem:[#allocation3 + $0x150] sm:$0xff] %v3590
      %3623 = vst [vmem:[#allocation3 + $0x198] sm:$0xff] %v3591
      %3624 = vst [vmem:[#allocation3 + $0x1e0] sm:$0xff] %v3592
      %3625 = vst [vmem:[#allocation3 + $0x228] sm:$0xff] %v3593
      %3626 = vst [vmem:[#allocation3 + $0x270] sm:$0xff] %v3594
      %3627 = vst [vmem:[#allocation3 + $0x2b8] sm:$0xff] %v3595
      %3628 = vst [vmem:[#allocation3 + $0x300] sm:$0xff] %v3596
      %3629 = vst [vmem:[#allocation3 + $0x348] sm:$0xff] %v3597
      %3630 = vst [vmem:[#allocation3 + $0x390] sm:$0xff] %v3598
      %3631 = vst [vmem:[#allocation3 + $0x3d8] sm:$0xff] %v3599
      %3632 = vst [vmem:[#allocation3 + $0x420] sm:$0xff] %v3600
      %3633 = vst [vmem:[#allocation3 + $0x468] sm:$0xff] %v3601
      %v3634 = vld [vmem:[%s3489] sm:$0xf]
      %v3635 = vld [vmem:[%s3489 + $0x4] sm:$0xf]
      %v3636 = vld [vmem:[%s3489 + $0x8] sm:$0x1]
      %v3637 = vld [vmem:[%s3489 + $0xc] sm:$0xf]
      %v3638 = vld [vmem:[%s3489 + $0x10] sm:$0xf]
      %v3639 = vld [vmem:[%s3489 + $0x14] sm:$0x1]
      %v3640 = vld [vmem:[%s3489 + $0x18] sm:$0xf]
      %v3641 = vld [vmem:[%s3489 + $0x1c] sm:$0xf]
      %v3642 = vld [vmem:[%s3489 + $0x20] sm:$0x1]
      %v3643 = vld [vmem:[%s3489 + $0x24] sm:$0xf]
      %v3644 = vld [vmem:[%s3489 + $0x28] sm:$0xf]
      %v3645 = vld [vmem:[%s3489 + $0x2c] sm:$0x1]
      %v3646 = vld [vmem:[%s3489 + $0x30] sm:$0xf]
      %v3647 = vld [vmem:[%s3489 + $0x34] sm:$0xf]
      %v3648 = vld [vmem:[%s3489 + $0x38] sm:$0x1]
      %v3649 = vld [vmem:[%s3489 + $0x3c] sm:$0xf]
      %v3650 = vld [vmem:[%s3489 + $0x40] sm:$0xf]
      %v3651 = vld [vmem:[%s3489 + $0x44] sm:$0x1]
      %v3652 = vld [vmem:[%s3489 + $0x48] sm:$0xf]
      %v3653 = vld [vmem:[%s3489 + $0x4c] sm:$0xf]
      %v3654 = vld [vmem:[%s3489 + $0x50] sm:$0x1]
      %v3655 = vld [vmem:[%s3489 + $0x54] sm:$0xf]
      %v3656 = vld [vmem:[%s3489 + $0x58] sm:$0xf]
      %v3657 = vld [vmem:[%s3489 + $0x5c] sm:$0x1]
      %v3658 = vld [vmem:[%s3489 + $0x60] sm:$0xf]
      %v3659 = vld [vmem:[%s3489 + $0x64] sm:$0xf]
      %v3660 = vld [vmem:[%s3489 + $0x68] sm:$0x1]
      %v3661 = vld [vmem:[%s3489 + $0x6c] sm:$0xf]
      %v3662 = vld [vmem:[%s3489 + $0x70] sm:$0xf]
      %v3663 = vld [vmem:[%s3489 + $0x74] sm:$0x1]
      %v3664 = vld [vmem:[%s3489 + $0x78] sm:$0xf]
      %v3665 = vld [vmem:[%s3489 + $0x7c] sm:$0xf]
      %v3666 = vld [vmem:[%s3489 + $0x80] sm:$0x1]
      %v3667 = vld [vmem:[%s3489 + $0x84] sm:$0xf]
      %v3668 = vld [vmem:[%s3489 + $0x88] sm:$0xf]
      %v3669 = vld [vmem:[%s3489 + $0x8c] sm:$0x1]
      %v3670 = vld [vmem:[%s3489 + $0x90] sm:$0xf]
      %v3671 = vld [vmem:[%s3489 + $0x94] sm:$0xf]
      %v3672 = vld [vmem:[%s3489 + $0x98] sm:$0x1]
      %v3673 = vld [vmem:[%s3489 + $0x9c] sm:$0xf]
      %v3674 = vld [vmem:[%s3489 + $0xa0] sm:$0xf]
      %v3675 = vld [vmem:[%s3489 + $0xa4] sm:$0x1]
      %v3676 = vld [vmem:[%s3489 + $0xa8] sm:$0xf]
      %v3677 = vld [vmem:[%s3489 + $0xac] sm:$0xf]
      %v3678 = vld [vmem:[%s3489 + $0xb0] sm:$0x1]
      %v3679 = vld [vmem:[%s3489 + $0xb4] sm:$0xf]
      %v3680 = vld [vmem:[%s3489 + $0xb8] sm:$0xf]
      %v3681 = vld [vmem:[%s3489 + $0xbc] sm:$0x1]
      %v3683 = vshrl.u32 %v3634, 16
      %v3685 = vrot.slane %v3683, 4
      %v3686 = vshll.u32 %v3634, 16
      %v3688 = vrot.slane %v3686, 5
      %v3689 = vor.u32 %v3685, %v3688
      %v3690 = vrot.slane %v3689, 4
      %v3692 = vshll.u32 %v3635, 16
      %v3694 = vrot.slane %v3692, 5
      %v3695 = vsel %vm1789, %v3690, %v3694
      %v3696 = vshrl.u32 %v3635, 16
      %v3698 = vrot.slane %v3696, 4
      %v3699 = vor.u32 %v3698, %v3694
      %v3700 = vrot.slane %v3699, 4
      %v3702 = vshll.u32 %v3636, 16
      %v3704 = vrot.slane %v3702, 5
      %v3705 = vsel %vm1789, %v3700, %v3704
      %v3707 = vshrl.u32 %v3637, 16
      %v3709 = vrot.slane %v3707, 4
      %v3710 = vshll.u32 %v3637, 16
      %v3712 = vrot.slane %v3710, 5
      %v3713 = vor.u32 %v3709, %v3712
      %v3714 = vrot.slane %v3713, 4
      %v3716 = vshll.u32 %v3638, 16
      %v3718 = vrot.slane %v3716, 5
      %v3719 = vsel %vm1789, %v3714, %v3718
      %v3720 = vshrl.u32 %v3638, 16
      %v3722 = vrot.slane %v3720, 4
      %v3723 = vor.u32 %v3722, %v3718
      %v3724 = vrot.slane %v3723, 4
      %v3726 = vshll.u32 %v3639, 16
      %v3728 = vrot.slane %v3726, 5
      %v3729 = vsel %vm1789, %v3724, %v3728
      %v3731 = vshrl.u32 %v3640, 16
      %v3733 = vrot.slane %v3731, 4
      %v3734 = vshll.u32 %v3640, 16
      %v3736 = vrot.slane %v3734, 5
      %v3737 = vor.u32 %v3733, %v3736
      %v3738 = vrot.slane %v3737, 4
      %v3740 = vshll.u32 %v3641, 16
      %v3742 = vrot.slane %v3740, 5
      %v3743 = vsel %vm1789, %v3738, %v3742
      %v3744 = vshrl.u32 %v3641, 16
      %v3746 = vrot.slane %v3744, 4
      %v3747 = vor.u32 %v3746, %v3742
      %v3748 = vrot.slane %v3747, 4
      %v3750 = vshll.u32 %v3642, 16
      %v3752 = vrot.slane %v3750, 5
      %v3753 = vsel %vm1789, %v3748, %v3752
      %v3755 = vshrl.u32 %v3643, 16
      %v3757 = vrot.slane %v3755, 4
      %v3758 = vshll.u32 %v3643, 16
      %v3760 = vrot.slane %v3758, 5
      %v3761 = vor.u32 %v3757, %v3760
      %v3762 = vrot.slane %v3761, 4
      %v3764 = vshll.u32 %v3644, 16
      %v3766 = vrot.slane %v3764, 5
      %v3767 = vsel %vm1789, %v3762, %v3766
      %v3768 = vshrl.u32 %v3644, 16
      %v3770 = vrot.slane %v3768, 4
      %v3771 = vor.u32 %v3770, %v3766
      %v3772 = vrot.slane %v3771, 4
      %v3774 = vshll.u32 %v3645, 16
      %v3776 = vrot.slane %v3774, 5
      %v3777 = vsel %vm1789, %v3772, %v3776
      %v3779 = vshrl.u32 %v3646, 16
      %v3781 = vrot.slane %v3779, 4
      %v3782 = vshll.u32 %v3646, 16
      %v3784 = vrot.slane %v3782, 5
      %v3785 = vor.u32 %v3781, %v3784
      %v3786 = vrot.slane %v3785, 4
      %v3788 = vshll.u32 %v3647, 16
      %v3790 = vrot.slane %v3788, 5
      %v3791 = vsel %vm1789, %v3786, %v3790
      %v3792 = vshrl.u32 %v3647, 16
      %v3794 = vrot.slane %v3792, 4
      %v3795 = vor.u32 %v3794, %v3790
      %v3796 = vrot.slane %v3795, 4
      %v3798 = vshll.u32 %v3648, 16
      %v3800 = vrot.slane %v3798, 5
      %v3801 = vsel %vm1789, %v3796, %v3800
      %v3803 = vshrl.u32 %v3649, 16
      %v3805 = vrot.slane %v3803, 4
      %v3806 = vshll.u32 %v3649, 16
      %v3808 = vrot.slane %v3806, 5
      %v3809 = vor.u32 %v3805, %v3808
      %v3810 = vrot.slane %v3809, 4
      %v3812 = vshll.u32 %v3650, 16
      %v3814 = vrot.slane %v3812, 5
      %v3815 = vsel %vm1789, %v3810, %v3814
      %v3816 = vshrl.u32 %v3650, 16
      %v3818 = vrot.slane %v3816, 4
      %v3819 = vor.u32 %v3818, %v3814
      %v3820 = vrot.slane %v3819, 4
      %v3822 = vshll.u32 %v3651, 16
      %v3824 = vrot.slane %v3822, 5
      %v3825 = vsel %vm1789, %v3820, %v3824
      %v3827 = vshrl.u32 %v3652, 16
      %v3829 = vrot.slane %v3827, 4
      %v3830 = vshll.u32 %v3652, 16
      %v3832 = vrot.slane %v3830, 5
      %v3833 = vor.u32 %v3829, %v3832
      %v3834 = vrot.slane %v3833, 4
      %v3836 = vshll.u32 %v3653, 16
      %v3838 = vrot.slane %v3836, 5
      %v3839 = vsel %vm1789, %v3834, %v3838
      %v3840 = vshrl.u32 %v3653, 16
      %v3842 = vrot.slane %v3840, 4
      %v3843 = vor.u32 %v3842, %v3838
      %v3844 = vrot.slane %v3843, 4
      %v3846 = vshll.u32 %v3654, 16
      %v3848 = vrot.slane %v3846, 5
      %v3849 = vsel %vm1789, %v3844, %v3848
      %v3851 = vshrl.u32 %v3655, 16
      %v3853 = vrot.slane %v3851, 4
      %v3854 = vshll.u32 %v3655, 16
      %v3856 = vrot.slane %v3854, 5
      %v3857 = vor.u32 %v3853, %v3856
      %v3858 = vrot.slane %v3857, 4
      %v3860 = vshll.u32 %v3656, 16
      %v3862 = vrot.slane %v3860, 5
      %v3863 = vsel %vm1789, %v3858, %v3862
      %v3864 = vshrl.u32 %v3656, 16
      %v3866 = vrot.slane %v3864, 4
      %v3867 = vor.u32 %v3866, %v3862
      %v3868 = vrot.slane %v3867, 4
      %v3870 = vshll.u32 %v3657, 16
      %v3872 = vrot.slane %v3870, 5
      %v3873 = vsel %vm1789, %v3868, %v3872
      %v3875 = vshrl.u32 %v3658, 16
      %v3877 = vrot.slane %v3875, 4
      %v3878 = vshll.u32 %v3658, 16
      %v3880 = vrot.slane %v3878, 5
      %v3881 = vor.u32 %v3877, %v3880
      %v3882 = vrot.slane %v3881, 4
      %v3884 = vshll.u32 %v3659, 16
      %v3886 = vrot.slane %v3884, 5
      %v3887 = vsel %vm1789, %v3882, %v3886
      %v3888 = vshrl.u32 %v3659, 16
      %v3890 = vrot.slane %v3888, 4
      %v3891 = vor.u32 %v3890, %v3886
      %v3892 = vrot.slane %v3891, 4
      %v3894 = vshll.u32 %v3660, 16
      %v3896 = vrot.slane %v3894, 5
      %v3897 = vsel %vm1789, %v3892, %v3896
      %v3899 = vshrl.u32 %v3661, 16
      %v3901 = vrot.slane %v3899, 4
      %v3902 = vshll.u32 %v3661, 16
      %v3904 = vrot.slane %v3902, 5
      %v3905 = vor.u32 %v3901, %v3904
      %v3906 = vrot.slane %v3905, 4
      %v3908 = vshll.u32 %v3662, 16
      %v3910 = vrot.slane %v3908, 5
      %v3911 = vsel %vm1789, %v3906, %v3910
      %v3912 = vshrl.u32 %v3662, 16
      %v3914 = vrot.slane %v3912, 4
      %v3915 = vor.u32 %v3914, %v3910
      %v3916 = vrot.slane %v3915, 4
      %v3918 = vshll.u32 %v3663, 16
      %v3920 = vrot.slane %v3918, 5
      %v3921 = vsel %vm1789, %v3916, %v3920
      %v3923 = vshrl.u32 %v3664, 16
      %v3925 = vrot.slane %v3923, 4
      %v3926 = vshll.u32 %v3664, 16
      %v3928 = vrot.slane %v3926, 5
      %v3929 = vor.u32 %v3925, %v3928
      %v3930 = vrot.slane %v3929, 4
      %v3932 = vshll.u32 %v3665, 16
      %v3934 = vrot.slane %v3932, 5
      %v3935 = vsel %vm1789, %v3930, %v3934
      %v3936 = vshrl.u32 %v3665, 16
      %v3938 = vrot.slane %v3936, 4
      %v3939 = vor.u32 %v3938, %v3934
      %v3940 = vrot.slane %v3939, 4
      %v3942 = vshll.u32 %v3666, 16
      %v3944 = vrot.slane %v3942, 5
      %v3945 = vsel %vm1789, %v3940, %v3944
      %v3947 = vshrl.u32 %v3667, 16
      %v3949 = vrot.slane %v3947, 4
      %v3950 = vshll.u32 %v3667, 16
      %v3952 = vrot.slane %v3950, 5
      %v3953 = vor.u32 %v3949, %v3952
      %v3954 = vrot.slane %v3953, 4
      %v3956 = vshll.u32 %v3668, 16
      %v3958 = vrot.slane %v3956, 5
      %v3959 = vsel %vm1789, %v3954, %v3958
      %v3960 = vshrl.u32 %v3668, 16
      %v3962 = vrot.slane %v3960, 4
      %v3963 = vor.u32 %v3962, %v3958
      %v3964 = vrot.slane %v3963, 4
      %v3966 = vshll.u32 %v3669, 16
      %v3968 = vrot.slane %v3966, 5
      %v3969 = vsel %vm1789, %v3964, %v3968
      %v3971 = vshrl.u32 %v3670, 16
      %v3973 = vrot.slane %v3971, 4
      %v3974 = vshll.u32 %v3670, 16
      %v3976 = vrot.slane %v3974, 5
      %v3977 = vor.u32 %v3973, %v3976
      %v3978 = vrot.slane %v3977, 4
      %v3980 = vshll.u32 %v3671, 16
      %v3982 = vrot.slane %v3980, 5
      %v3983 = vsel %vm1789, %v3978, %v3982
      %v3984 = vshrl.u32 %v3671, 16
      %v3986 = vrot.slane %v3984, 4
      %v3987 = vor.u32 %v3986, %v3982
      %v3988 = vrot.slane %v3987, 4
      %v3990 = vshll.u32 %v3672, 16
      %v3992 = vrot.slane %v3990, 5
      %v3993 = vsel %vm1789, %v3988, %v3992
      %v3995 = vshrl.u32 %v3673, 16
      %v3997 = vrot.slane %v3995, 4
      %v3998 = vshll.u32 %v3673, 16
      %v4000 = vrot.slane %v3998, 5
      %v4001 = vor.u32 %v3997, %v4000
      %v4002 = vrot.slane %v4001, 4
      %v4004 = vshll.u32 %v3674, 16
      %v4006 = vrot.slane %v4004, 5
      %v4007 = vsel %vm1789, %v4002, %v4006
      %v4008 = vshrl.u32 %v3674, 16
      %v4010 = vrot.slane %v4008, 4
      %v4011 = vor.u32 %v4010, %v4006
      %v4012 = vrot.slane %v4011, 4
      %v4014 = vshll.u32 %v3675, 16
      %v4016 = vrot.slane %v4014, 5
      %v4017 = vsel %vm1789, %v4012, %v4016
      %v4019 = vshrl.u32 %v3676, 16
      %v4021 = vrot.slane %v4019, 4
      %v4022 = vshll.u32 %v3676, 16
      %v4024 = vrot.slane %v4022, 5
      %v4025 = vor.u32 %v4021, %v4024
      %v4026 = vrot.slane %v4025, 4
      %v4028 = vshll.u32 %v3677, 16
      %v4030 = vrot.slane %v4028, 5
      %v4031 = vsel %vm1789, %v4026, %v4030
      %v4032 = vshrl.u32 %v3677, 16
      %v4034 = vrot.slane %v4032, 4
      %v4035 = vor.u32 %v4034, %v4030
      %v4036 = vrot.slane %v4035, 4
      %v4038 = vshll.u32 %v3678, 16
      %v4040 = vrot.slane %v4038, 5
      %v4041 = vsel %vm1789, %v4036, %v4040
      %v4043 = vshrl.u32 %v3679, 16
      %v4045 = vrot.slane %v4043, 4
      %v4046 = vshll.u32 %v3679, 16
      %v4048 = vrot.slane %v4046, 5
      %v4049 = vor.u32 %v4045, %v4048
      %v4050 = vrot.slane %v4049, 4
      %v4052 = vshll.u32 %v3680, 16
      %v4054 = vrot.slane %v4052, 5
      %v4055 = vsel %vm1789, %v4050, %v4054
      %v4056 = vshrl.u32 %v3680, 16
      %v4058 = vrot.slane %v4056, 4
      %v4059 = vor.u32 %v4058, %v4054
      %v4060 = vrot.slane %v4059, 4
      %v4062 = vshll.u32 %v3681, 16
      %v4064 = vrot.slane %v4062, 5
      %v4065 = vsel %vm1789, %v4060, %v4064
      %v4066 = vunpack.c.l.b16 %v3695
      %v4067 = vunpack.c.l.b16 %v3705
      %v4068 = vunpack.c.l.b16 %v3719
      %v4069 = vunpack.c.l.b16 %v3729
      %v4070 = vunpack.c.l.b16 %v3743
      %v4071 = vunpack.c.l.b16 %v3753
      %v4072 = vunpack.c.l.b16 %v3767
      %v4073 = vunpack.c.l.b16 %v3777
      %v4074 = vunpack.c.l.b16 %v3791
      %v4075 = vunpack.c.l.b16 %v3801
      %v4076 = vunpack.c.l.b16 %v3815
      %v4077 = vunpack.c.l.b16 %v3825
      %v4078 = vunpack.c.l.b16 %v3839
      %v4079 = vunpack.c.l.b16 %v3849
      %v4080 = vunpack.c.l.b16 %v3863
      %v4081 = vunpack.c.l.b16 %v3873
      %v4082 = vunpack.c.l.b16 %v3887
      %v4083 = vunpack.c.l.b16 %v3897
      %v4084 = vunpack.c.l.b16 %v3911
      %v4085 = vunpack.c.l.b16 %v3921
      %v4086 = vunpack.c.l.b16 %v3935
      %v4087 = vunpack.c.l.b16 %v3945
      %v4088 = vunpack.c.l.b16 %v3959
      %v4089 = vunpack.c.l.b16 %v3969
      %v4090 = vunpack.c.l.b16 %v3983
      %v4091 = vunpack.c.l.b16 %v3993
      %v4092 = vunpack.c.l.b16 %v4007
      %v4093 = vunpack.c.l.b16 %v4017
      %v4094 = vunpack.c.l.b16 %v4031
      %v4095 = vunpack.c.l.b16 %v4041
      %v4096 = vunpack.c.l.b16 %v4055
      %v4097 = vunpack.c.l.b16 %v4065
      %v4098 = vpack.c.b16 %v4067, %v4066
      %v4099 = vpack.c.b16 %v4069, %v4068
      %v4100 = vpack.c.b16 %v4071, %v4070
      %v4101 = vpack.c.b16 %v4073, %v4072
      %v4102 = vpack.c.b16 %v4075, %v4074
      %v4103 = vpack.c.b16 %v4077, %v4076
      %v4104 = vpack.c.b16 %v4079, %v4078
      %v4105 = vpack.c.b16 %v4081, %v4080
      %v4106 = vpack.c.b16 %v4083, %v4082
      %v4107 = vpack.c.b16 %v4085, %v4084
      %v4108 = vpack.c.b16 %v4087, %v4086
      %v4109 = vpack.c.b16 %v4089, %v4088
      %v4110 = vpack.c.b16 %v4091, %v4090
      %v4111 = vpack.c.b16 %v4093, %v4092
      %v4112 = vpack.c.b16 %v4095, %v4094
      %v4113 = vpack.c.b16 %v4097, %v4096
      %4130 = vst [vmem:[#allocation3 + $0x38] sm:$0xff] %v4098
      %4131 = vst [vmem:[#allocation3 + $0x80] sm:$0xff] %v4099
      %4132 = vst [vmem:[#allocation3 + $0xc8] sm:$0xff] %v4100
      %4133 = vst [vmem:[#allocation3 + $0x110] sm:$0xff] %v4101
      %4134 = vst [vmem:[#allocation3 + $0x158] sm:$0xff] %v4102
      %4135 = vst [vmem:[#allocation3 + $0x1a0] sm:$0xff] %v4103
      %4136 = vst [vmem:[#allocation3 + $0x1e8] sm:$0xff] %v4104
      %4137 = vst [vmem:[#allocation3 + $0x230] sm:$0xff] %v4105
      %4138 = vst [vmem:[#allocation3 + $0x278] sm:$0xff] %v4106
      %4139 = vst [vmem:[#allocation3 + $0x2c0] sm:$0xff] %v4107
      %4140 = vst [vmem:[#allocation3 + $0x308] sm:$0xff] %v4108
      %4141 = vst [vmem:[#allocation3 + $0x350] sm:$0xff] %v4109
      %4142 = vst [vmem:[#allocation3 + $0x398] sm:$0xff] %v4110
      %4143 = vst [vmem:[#allocation3 + $0x3e0] sm:$0xff] %v4111
      %4144 = vst [vmem:[#allocation3 + $0x428] sm:$0xff] %v4112
      %4145 = vst [vmem:[#allocation3 + $0x470] sm:$0xff] %v4113
      %v4146 = vld [vmem:[%s3489] sm:$0xe]
      %v4147 = vld [vmem:[%s3489 + $0x4] sm:$0xf]
      %v4148 = vld [vmem:[%s3489 + $0x8] sm:$0x1]
      %v4149 = vld [vmem:[%s3489 + $0xc] sm:$0xe]
      %v4150 = vld [vmem:[%s3489 + $0x10] sm:$0xf]
      %v4151 = vld [vmem:[%s3489 + $0x14] sm:$0x1]
      %v4152 = vld [vmem:[%s3489 + $0x18] sm:$0xe]
      %v4153 = vld [vmem:[%s3489 + $0x1c] sm:$0xf]
      %v4154 = vld [vmem:[%s3489 + $0x20] sm:$0x1]
      %v4155 = vld [vmem:[%s3489 + $0x24] sm:$0xe]
      %v4156 = vld [vmem:[%s3489 + $0x28] sm:$0xf]
      %v4157 = vld [vmem:[%s3489 + $0x2c] sm:$0x1]
      %v4158 = vld [vmem:[%s3489 + $0x30] sm:$0xe]
      %v4159 = vld [vmem:[%s3489 + $0x34] sm:$0xf]
      %v4160 = vld [vmem:[%s3489 + $0x38] sm:$0x1]
      %v4161 = vld [vmem:[%s3489 + $0x3c] sm:$0xe]
      %v4162 = vld [vmem:[%s3489 + $0x40] sm:$0xf]
      %v4163 = vld [vmem:[%s3489 + $0x44] sm:$0x1]
      %v4164 = vld [vmem:[%s3489 + $0x48] sm:$0xe]
      %v4165 = vld [vmem:[%s3489 + $0x4c] sm:$0xf]
      %v4166 = vld [vmem:[%s3489 + $0x50] sm:$0x1]
      %v4167 = vld [vmem:[%s3489 + $0x54] sm:$0xe]
      %v4168 = vld [vmem:[%s3489 + $0x58] sm:$0xf]
      %v4169 = vld [vmem:[%s3489 + $0x5c] sm:$0x1]
      %v4170 = vld [vmem:[%s3489 + $0x60] sm:$0xe]
      %v4171 = vld [vmem:[%s3489 + $0x64] sm:$0xf]
      %v4172 = vld [vmem:[%s3489 + $0x68] sm:$0x1]
      %v4173 = vld [vmem:[%s3489 + $0x6c] sm:$0xe]
      %v4174 = vld [vmem:[%s3489 + $0x70] sm:$0xf]
      %v4175 = vld [vmem:[%s3489 + $0x74] sm:$0x1]
      %v4176 = vld [vmem:[%s3489 + $0x78] sm:$0xe]
      %v4177 = vld [vmem:[%s3489 + $0x7c] sm:$0xf]
      %v4178 = vld [vmem:[%s3489 + $0x80] sm:$0x1]
      %v4179 = vld [vmem:[%s3489 + $0x84] sm:$0xe]
      %v4180 = vld [vmem:[%s3489 + $0x88] sm:$0xf]
      %v4181 = vld [vmem:[%s3489 + $0x8c] sm:$0x1]
      %v4182 = vld [vmem:[%s3489 + $0x90] sm:$0xe]
      %v4183 = vld [vmem:[%s3489 + $0x94] sm:$0xf]
      %v4184 = vld [vmem:[%s3489 + $0x98] sm:$0x1]
      %v4185 = vld [vmem:[%s3489 + $0x9c] sm:$0xe]
      %v4186 = vld [vmem:[%s3489 + $0xa0] sm:$0xf]
      %v4187 = vld [vmem:[%s3489 + $0xa4] sm:$0x1]
      %v4188 = vld [vmem:[%s3489 + $0xa8] sm:$0xe]
      %v4189 = vld [vmem:[%s3489 + $0xac] sm:$0xf]
      %v4190 = vld [vmem:[%s3489 + $0xb0] sm:$0x1]
      %v4191 = vld [vmem:[%s3489 + $0xb4] sm:$0xe]
      %v4192 = vld [vmem:[%s3489 + $0xb8] sm:$0xf]
      %v4193 = vld [vmem:[%s3489 + $0xbc] sm:$0x1]
      %v4242 = vrot.slane %v4146, 5
      %v4243 = vrot.slane %v4242, 4
      %v4244 = vrot.slane %v4147, 5
      %v4245 = vsel %vm2352, %v4243, %v4244
      %v4246 = vrot.slane %v4244, 4
      %v4247 = vrot.slane %v4148, 5
      %v4248 = vsel %vm2352, %v4246, %v4247
      %v4249 = vrot.slane %v4149, 5
      %v4250 = vrot.slane %v4249, 4
      %v4251 = vrot.slane %v4150, 5
      %v4252 = vsel %vm2352, %v4250, %v4251
      %v4253 = vrot.slane %v4251, 4
      %v4254 = vrot.slane %v4151, 5
      %v4255 = vsel %vm2352, %v4253, %v4254
      %v4256 = vrot.slane %v4152, 5
      %v4257 = vrot.slane %v4256, 4
      %v4258 = vrot.slane %v4153, 5
      %v4259 = vsel %vm2352, %v4257, %v4258
      %v4260 = vrot.slane %v4258, 4
      %v4261 = vrot.slane %v4154, 5
      %v4262 = vsel %vm2352, %v4260, %v4261
      %v4263 = vrot.slane %v4155, 5
      %v4264 = vrot.slane %v4263, 4
      %v4265 = vrot.slane %v4156, 5
      %v4266 = vsel %vm2352, %v4264, %v4265
      %v4267 = vrot.slane %v4265, 4
      %v4268 = vrot.slane %v4157, 5
      %v4269 = vsel %vm2352, %v4267, %v4268
      %v4270 = vrot.slane %v4158, 5
      %v4271 = vrot.slane %v4270, 4
      %v4272 = vrot.slane %v4159, 5
      %v4273 = vsel %vm2352, %v4271, %v4272
      %v4274 = vrot.slane %v4272, 4
      %v4275 = vrot.slane %v4160, 5
      %v4276 = vsel %vm2352, %v4274, %v4275
      %v4277 = vrot.slane %v4161, 5
      %v4278 = vrot.slane %v4277, 4
      %v4279 = vrot.slane %v4162, 5
      %v4280 = vsel %vm2352, %v4278, %v4279
      %v4281 = vrot.slane %v4279, 4
      %v4282 = vrot.slane %v4163, 5
      %v4283 = vsel %vm2352, %v4281, %v4282
      %v4284 = vrot.slane %v4164, 5
      %v4285 = vrot.slane %v4284, 4
      %v4286 = vrot.slane %v4165, 5
      %v4287 = vsel %vm2352, %v4285, %v4286
      %v4288 = vrot.slane %v4286, 4
      %v4289 = vrot.slane %v4166, 5
      %v4290 = vsel %vm2352, %v4288, %v4289
      %v4291 = vrot.slane %v4167, 5
      %v4292 = vrot.slane %v4291, 4
      %v4293 = vrot.slane %v4168, 5
      %v4294 = vsel %vm2352, %v4292, %v4293
      %v4295 = vrot.slane %v4293, 4
      %v4296 = vrot.slane %v4169, 5
      %v4297 = vsel %vm2352, %v4295, %v4296
      %v4298 = vrot.slane %v4170, 5
      %v4299 = vrot.slane %v4298, 4
      %v4300 = vrot.slane %v4171, 5
      %v4301 = vsel %vm2352, %v4299, %v4300
      %v4302 = vrot.slane %v4300, 4
      %v4303 = vrot.slane %v4172, 5
      %v4304 = vsel %vm2352, %v4302, %v4303
      %v4305 = vrot.slane %v4173, 5
      %v4306 = vrot.slane %v4305, 4
      %v4307 = vrot.slane %v4174, 5
      %v4308 = vsel %vm2352, %v4306, %v4307
      %v4309 = vrot.slane %v4307, 4
      %v4310 = vrot.slane %v4175, 5
      %v4311 = vsel %vm2352, %v4309, %v4310
      %v4312 = vrot.slane %v4176, 5
      %v4313 = vrot.slane %v4312, 4
      %v4314 = vrot.slane %v4177, 5
      %v4315 = vsel %vm2352, %v4313, %v4314
      %v4316 = vrot.slane %v4314, 4
      %v4317 = vrot.slane %v4178, 5
      %v4318 = vsel %vm2352, %v4316, %v4317
      %v4319 = vrot.slane %v4179, 5
      %v4320 = vrot.slane %v4319, 4
      %v4321 = vrot.slane %v4180, 5
      %v4322 = vsel %vm2352, %v4320, %v4321
      %v4323 = vrot.slane %v4321, 4
      %v4324 = vrot.slane %v4181, 5
      %v4325 = vsel %vm2352, %v4323, %v4324
      %v4326 = vrot.slane %v4182, 5
      %v4327 = vrot.slane %v4326, 4
      %v4328 = vrot.slane %v4183, 5
      %v4329 = vsel %vm2352, %v4327, %v4328
      %v4330 = vrot.slane %v4328, 4
      %v4331 = vrot.slane %v4184, 5
      %v4332 = vsel %vm2352, %v4330, %v4331
      %v4333 = vrot.slane %v4185, 5
      %v4334 = vrot.slane %v4333, 4
      %v4335 = vrot.slane %v4186, 5
      %v4336 = vsel %vm2352, %v4334, %v4335
      %v4337 = vrot.slane %v4335, 4
      %v4338 = vrot.slane %v4187, 5
      %v4339 = vsel %vm2352, %v4337, %v4338
      %v4340 = vrot.slane %v4188, 5
      %v4341 = vrot.slane %v4340, 4
      %v4342 = vrot.slane %v4189, 5
      %v4343 = vsel %vm2352, %v4341, %v4342
      %v4344 = vrot.slane %v4342, 4
      %v4345 = vrot.slane %v4190, 5
      %v4346 = vsel %vm2352, %v4344, %v4345
      %v4347 = vrot.slane %v4191, 5
      %v4348 = vrot.slane %v4347, 4
      %v4349 = vrot.slane %v4192, 5
      %v4350 = vsel %vm2352, %v4348, %v4349
      %v4351 = vrot.slane %v4349, 4
      %v4352 = vrot.slane %v4193, 5
      %v4353 = vsel %vm2352, %v4351, %v4352
      %v4354 = vunpack.c.l.b16 %v4245
      %v4355 = vunpack.c.l.b16 %v4248
      %v4356 = vunpack.c.l.b16 %v4252
      %v4357 = vunpack.c.l.b16 %v4255
      %v4358 = vunpack.c.l.b16 %v4259
      %v4359 = vunpack.c.l.b16 %v4262
      %v4360 = vunpack.c.l.b16 %v4266
      %v4361 = vunpack.c.l.b16 %v4269
      %v4362 = vunpack.c.l.b16 %v4273
      %v4363 = vunpack.c.l.b16 %v4276
      %v4364 = vunpack.c.l.b16 %v4280
      %v4365 = vunpack.c.l.b16 %v4283
      %v4366 = vunpack.c.l.b16 %v4287
      %v4367 = vunpack.c.l.b16 %v4290
      %v4368 = vunpack.c.l.b16 %v4294
      %v4369 = vunpack.c.l.b16 %v4297
      %v4370 = vunpack.c.l.b16 %v4301
      %v4371 = vunpack.c.l.b16 %v4304
      %v4372 = vunpack.c.l.b16 %v4308
      %v4373 = vunpack.c.l.b16 %v4311
      %v4374 = vunpack.c.l.b16 %v4315
      %v4375 = vunpack.c.l.b16 %v4318
      %v4376 = vunpack.c.l.b16 %v4322
      %v4377 = vunpack.c.l.b16 %v4325
      %v4378 = vunpack.c.l.b16 %v4329
      %v4379 = vunpack.c.l.b16 %v4332
      %v4380 = vunpack.c.l.b16 %v4336
      %v4381 = vunpack.c.l.b16 %v4339
      %v4382 = vunpack.c.l.b16 %v4343
      %v4383 = vunpack.c.l.b16 %v4346
      %v4384 = vunpack.c.l.b16 %v4350
      %v4385 = vunpack.c.l.b16 %v4353
      %v4386 = vpack.c.b16 %v4355, %v4354
      %v4387 = vpack.c.b16 %v4357, %v4356
      %v4388 = vpack.c.b16 %v4359, %v4358
      %v4389 = vpack.c.b16 %v4361, %v4360
      %v4390 = vpack.c.b16 %v4363, %v4362
      %v4391 = vpack.c.b16 %v4365, %v4364
      %v4392 = vpack.c.b16 %v4367, %v4366
      %v4393 = vpack.c.b16 %v4369, %v4368
      %v4394 = vpack.c.b16 %v4371, %v4370
      %v4395 = vpack.c.b16 %v4373, %v4372
      %v4396 = vpack.c.b16 %v4375, %v4374
      %v4397 = vpack.c.b16 %v4377, %v4376
      %v4398 = vpack.c.b16 %v4379, %v4378
      %v4399 = vpack.c.b16 %v4381, %v4380
      %v4400 = vpack.c.b16 %v4383, %v4382
      %v4401 = vpack.c.b16 %v4385, %v4384
      %4418 = vst [vmem:[#allocation3 + $0x40] sm:$0xff] %v4386
      %4419 = vst [vmem:[#allocation3 + $0x88] sm:$0xff] %v4387
      %4420 = vst [vmem:[#allocation3 + $0xd0] sm:$0xff] %v4388
      %4421 = vst [vmem:[#allocation3 + $0x118] sm:$0xff] %v4389
      %4422 = vst [vmem:[#allocation3 + $0x160] sm:$0xff] %v4390
      %4423 = vst [vmem:[#allocation3 + $0x1a8] sm:$0xff] %v4391
      %4424 = vst [vmem:[#allocation3 + $0x1f0] sm:$0xff] %v4392
      %4425 = vst [vmem:[#allocation3 + $0x238] sm:$0xff] %v4393
      %4426 = vst [vmem:[#allocation3 + $0x280] sm:$0xff] %v4394
      %4427 = vst [vmem:[#allocation3 + $0x2c8] sm:$0xff] %v4395
      %4428 = vst [vmem:[#allocation3 + $0x310] sm:$0xff] %v4396
      %4429 = vst [vmem:[#allocation3 + $0x358] sm:$0xff] %v4397
      %4430 = vst [vmem:[#allocation3 + $0x3a0] sm:$0xff] %v4398
      %4431 = vst [vmem:[#allocation3 + $0x3e8] sm:$0xff] %v4399
      %4432 = vst [vmem:[#allocation3 + $0x430] sm:$0xff] %v4400
      %4433 = vst [vmem:[#allocation3 + $0x478] sm:$0xff] %v4401
      %v4434 = vld [vmem:[#allocation3] sm:$0xff]
      %v4435 = vld [vmem:[#allocation3 + $0x8] sm:$0xff]
      %v4436 = vld [vmem:[#allocation3 + $0x10] sm:$0xff]
      %v4437 = vld [vmem:[#allocation3 + $0x18] sm:$0xff]
      %v4438 = vld [vmem:[#allocation3 + $0x20] sm:$0xff]
      %v4439 = vld [vmem:[#allocation3 + $0x28] sm:$0xff]
      %v4440 = vld [vmem:[#allocation3 + $0x30] sm:$0xff]
      %v4441 = vld [vmem:[#allocation3 + $0x38] sm:$0xff]
      %v4442 = vld [vmem:[#allocation3 + $0x40] sm:$0xff]
      %v4443 = vld [vmem:[#allocation3 + $0x48] sm:$0xff]
      %v4444 = vld [vmem:[#allocation3 + $0x50] sm:$0xff]
      %v4445 = vld [vmem:[#allocation3 + $0x58] sm:$0xff]
      %v4446 = vld [vmem:[#allocation3 + $0x60] sm:$0xff]
      %v4447 = vld [vmem:[#allocation3 + $0x68] sm:$0xff]
      %v4448 = vld [vmem:[#allocation3 + $0x70] sm:$0xff]
      %v4449 = vld [vmem:[#allocation3 + $0x78] sm:$0xff]
      %v4450 = vld [vmem:[#allocation3 + $0x80] sm:$0xff]
      %v4451 = vld [vmem:[#allocation3 + $0x88] sm:$0xff]
      %v4452 = vld [vmem:[#allocation3 + $0x90] sm:$0xff]
      %v4453 = vld [vmem:[#allocation3 + $0x98] sm:$0xff]
      %v4454 = vld [vmem:[#allocation3 + $0xa0] sm:$0xff]
      %v4455 = vld [vmem:[#allocation3 + $0xa8] sm:$0xff]
      %v4456 = vld [vmem:[#allocation3 + $0xb0] sm:$0xff]
      %v4457 = vld [vmem:[#allocation3 + $0xb8] sm:$0xff]
      %v4458 = vld [vmem:[#allocation3 + $0xc0] sm:$0xff]
      %v4459 = vld [vmem:[#allocation3 + $0xc8] sm:$0xff]
      %v4460 = vld [vmem:[#allocation3 + $0xd0] sm:$0xff]
      %v4461 = vld [vmem:[#allocation3 + $0xd8] sm:$0xff]
      %v4462 = vld [vmem:[#allocation3 + $0xe0] sm:$0xff]
      %v4463 = vld [vmem:[#allocation3 + $0xe8] sm:$0xff]
      %v4464 = vld [vmem:[#allocation3 + $0xf0] sm:$0xff]
      %v4465 = vld [vmem:[#allocation3 + $0xf8] sm:$0xff]
      %v4466 = vld [vmem:[#allocation3 + $0x100] sm:$0xff]
      %v4467 = vld [vmem:[#allocation3 + $0x108] sm:$0xff]
      %v4468 = vld [vmem:[#allocation3 + $0x110] sm:$0xff]
      %v4469 = vld [vmem:[#allocation3 + $0x118] sm:$0xff]
      %v4470 = vld [vmem:[#allocation3 + $0x120] sm:$0xff]
      %v4471 = vld [vmem:[#allocation3 + $0x128] sm:$0xff]
      %v4472 = vld [vmem:[#allocation3 + $0x130] sm:$0xff]
      %v4473 = vld [vmem:[#allocation3 + $0x138] sm:$0xff]
      %v4474 = vld [vmem:[#allocation3 + $0x140] sm:$0xff]
      %v4475 = vld [vmem:[#allocation3 + $0x148] sm:$0xff]
      %v4476 = vld [vmem:[#allocation3 + $0x150] sm:$0xff]
      %v4477 = vld [vmem:[#allocation3 + $0x158] sm:$0xff]
      %v4478 = vld [vmem:[#allocation3 + $0x160] sm:$0xff]
      %v4479 = vld [vmem:[#allocation3 + $0x168] sm:$0xff]
      %v4480 = vld [vmem:[#allocation3 + $0x170] sm:$0xff]
      %v4481 = vld [vmem:[#allocation3 + $0x178] sm:$0xff]
      %v4482 = vld [vmem:[#allocation3 + $0x180] sm:$0xff]
      %v4483 = vld [vmem:[#allocation3 + $0x188] sm:$0xff]
      %v4484 = vld [vmem:[#allocation3 + $0x190] sm:$0xff]
      %v4485 = vld [vmem:[#allocation3 + $0x198] sm:$0xff]
      %v4486 = vld [vmem:[#allocation3 + $0x1a0] sm:$0xff]
      %v4487 = vld [vmem:[#allocation3 + $0x1a8] sm:$0xff]
      %v4488 = vld [vmem:[#allocation3 + $0x1b0] sm:$0xff]
      %v4489 = vld [vmem:[#allocation3 + $0x1b8] sm:$0xff]
      %v4490 = vld [vmem:[#allocation3 + $0x1c0] sm:$0xff]
      %v4491 = vld [vmem:[#allocation3 + $0x1c8] sm:$0xff]
      %v4492 = vld [vmem:[#allocation3 + $0x1d0] sm:$0xff]
      %v4493 = vld [vmem:[#allocation3 + $0x1d8] sm:$0xff]
      %v4494 = vld [vmem:[#allocation3 + $0x1e0] sm:$0xff]
      %v4495 = vld [vmem:[#allocation3 + $0x1e8] sm:$0xff]
      %v4496 = vld [vmem:[#allocation3 + $0x1f0] sm:$0xff]
      %v4497 = vld [vmem:[#allocation3 + $0x1f8] sm:$0xff]
      %v4498 = vld [vmem:[#allocation3 + $0x200] sm:$0xff]
      %v4499 = vld [vmem:[#allocation3 + $0x208] sm:$0xff]
      %v4500 = vld [vmem:[#allocation3 + $0x210] sm:$0xff]
      %v4501 = vld [vmem:[#allocation3 + $0x218] sm:$0xff]
      %v4502 = vld [vmem:[#allocation3 + $0x220] sm:$0xff]
      %v4503 = vld [vmem:[#allocation3 + $0x228] sm:$0xff]
      %v4504 = vld [vmem:[#allocation3 + $0x230] sm:$0xff]
      %v4505 = vld [vmem:[#allocation3 + $0x238] sm:$0xff]
      %v4506 = vld [vmem:[#allocation3 + $0x240] sm:$0xff]
      %v4507 = vld [vmem:[#allocation3 + $0x248] sm:$0xff]
      %v4508 = vld [vmem:[#allocation3 + $0x250] sm:$0xff]
      %v4509 = vld [vmem:[#allocation3 + $0x258] sm:$0xff]
      %v4510 = vld [vmem:[#allocation3 + $0x260] sm:$0xff]
      %v4511 = vld [vmem:[#allocation3 + $0x268] sm:$0xff]
      %v4512 = vld [vmem:[#allocation3 + $0x270] sm:$0xff]
      %v4513 = vld [vmem:[#allocation3 + $0x278] sm:$0xff]
      %v4514 = vld [vmem:[#allocation3 + $0x280] sm:$0xff]
      %v4515 = vld [vmem:[#allocation3 + $0x288] sm:$0xff]
      %v4516 = vld [vmem:[#allocation3 + $0x290] sm:$0xff]
      %v4517 = vld [vmem:[#allocation3 + $0x298] sm:$0xff]
      %v4518 = vld [vmem:[#allocation3 + $0x2a0] sm:$0xff]
      %v4519 = vld [vmem:[#allocation3 + $0x2a8] sm:$0xff]
      %v4520 = vld [vmem:[#allocation3 + $0x2b0] sm:$0xff]
      %v4521 = vld [vmem:[#allocation3 + $0x2b8] sm:$0xff]
      %v4522 = vld [vmem:[#allocation3 + $0x2c0] sm:$0xff]
      %v4523 = vld [vmem:[#allocation3 + $0x2c8] sm:$0xff]
      %v4524 = vld [vmem:[#allocation3 + $0x2d0] sm:$0xff]
      %v4525 = vld [vmem:[#allocation3 + $0x2d8] sm:$0xff]
      %v4526 = vld [vmem:[#allocation3 + $0x2e0] sm:$0xff]
      %v4527 = vld [vmem:[#allocation3 + $0x2e8] sm:$0xff]
      %v4528 = vld [vmem:[#allocation3 + $0x2f0] sm:$0xff]
      %v4529 = vld [vmem:[#allocation3 + $0x2f8] sm:$0xff]
      %v4530 = vld [vmem:[#allocation3 + $0x300] sm:$0xff]
      %v4531 = vld [vmem:[#allocation3 + $0x308] sm:$0xff]
      %v4532 = vld [vmem:[#allocation3 + $0x310] sm:$0xff]
      %v4533 = vld [vmem:[#allocation3 + $0x318] sm:$0xff]
      %v4534 = vld [vmem:[#allocation3 + $0x320] sm:$0xff]
      %v4535 = vld [vmem:[#allocation3 + $0x328] sm:$0xff]
      %v4536 = vld [vmem:[#allocation3 + $0x330] sm:$0xff]
      %v4537 = vld [vmem:[#allocation3 + $0x338] sm:$0xff]
      %v4538 = vld [vmem:[#allocation3 + $0x340] sm:$0xff]
      %v4539 = vld [vmem:[#allocation3 + $0x348] sm:$0xff]
      %v4540 = vld [vmem:[#allocation3 + $0x350] sm:$0xff]
      %v4541 = vld [vmem:[#allocation3 + $0x358] sm:$0xff]
      %v4542 = vld [vmem:[#allocation3 + $0x360] sm:$0xff]
      %v4543 = vld [vmem:[#allocation3 + $0x368] sm:$0xff]
      %v4544 = vld [vmem:[#allocation3 + $0x370] sm:$0xff]
      %v4545 = vld [vmem:[#allocation3 + $0x378] sm:$0xff]
      %v4546 = vld [vmem:[#allocation3 + $0x380] sm:$0xff]
      %v4547 = vld [vmem:[#allocation3 + $0x388] sm:$0xff]
      %v4548 = vld [vmem:[#allocation3 + $0x390] sm:$0xff]
      %v4549 = vld [vmem:[#allocation3 + $0x398] sm:$0xff]
      %v4550 = vld [vmem:[#allocation3 + $0x3a0] sm:$0xff]
      %v4551 = vld [vmem:[#allocation3 + $0x3a8] sm:$0xff]
      %v4552 = vld [vmem:[#allocation3 + $0x3b0] sm:$0xff]
      %v4553 = vld [vmem:[#allocation3 + $0x3b8] sm:$0xff]
      %v4554 = vld [vmem:[#allocation3 + $0x3c0] sm:$0xff]
      %v4555 = vld [vmem:[#allocation3 + $0x3c8] sm:$0xff]
      %v4556 = vld [vmem:[#allocation3 + $0x3d0] sm:$0xff]
      %v4557 = vld [vmem:[#allocation3 + $0x3d8] sm:$0xff]
      %v4558 = vld [vmem:[#allocation3 + $0x3e0] sm:$0xff]
      %v4559 = vld [vmem:[#allocation3 + $0x3e8] sm:$0xff]
      %v4560 = vld [vmem:[#allocation3 + $0x3f0] sm:$0xff]
      %v4561 = vld [vmem:[#allocation3 + $0x3f8] sm:$0xff]
      %v4562 = vld [vmem:[#allocation3 + $0x400] sm:$0xff]
      %v4563 = vld [vmem:[#allocation3 + $0x408] sm:$0xff]
      %v4564 = vld [vmem:[#allocation3 + $0x410] sm:$0xff]
      %v4565 = vld [vmem:[#allocation3 + $0x418] sm:$0xff]
      %v4566 = vld [vmem:[#allocation3 + $0x420] sm:$0xff]
      %v4567 = vld [vmem:[#allocation3 + $0x428] sm:$0xff]
      %v4568 = vld [vmem:[#allocation3 + $0x430] sm:$0xff]
      %v4569 = vld [vmem:[#allocation3 + $0x438] sm:$0xff]
      %v4570 = vld [vmem:[#allocation3 + $0x440] sm:$0xff]
      %v4571 = vld [vmem:[#allocation3 + $0x448] sm:$0xff]
      %v4572 = vld [vmem:[#allocation3 + $0x450] sm:$0xff]
      %v4573 = vld [vmem:[#allocation3 + $0x458] sm:$0xff]
      %v4574 = vld [vmem:[#allocation3 + $0x460] sm:$0xff]
      %v4575 = vld [vmem:[#allocation3 + $0x468] sm:$0xff]
      %v4576 = vld [vmem:[#allocation3 + $0x470] sm:$0xff]
      %v4577 = vld [vmem:[#allocation3 + $0x478] sm:$0xff]
      %v4578 = vld [vmem:[%s3] sm:$0xf]
      %v4579 = vld [vmem:[%s3 + $0x4] sm:$0xf]
      %v4580 = vld [vmem:[%s3 + $0x8] sm:$0xf]
      %v4581 = vld [vmem:[%s3 + $0xc] sm:$0xf]
      %v4582 = vld [vmem:[%s3 + $0x10] sm:$0xf]
      %v4583 = vld [vmem:[%s3 + $0x14] sm:$0xf]
      %v4584 = vld [vmem:[%s3 + $0x18] sm:$0xf]
      %v4585 = vld [vmem:[%s3 + $0x1c] sm:$0xf]
      %v4586 = vld [vmem:[%s3 + $0x20] sm:$0xf]
      %v4587 = vld [vmem:[%s3 + $0x24] sm:$0xf]
      %v4588 = vld [vmem:[%s3 + $0x28] sm:$0xf]
      %v4589 = vld [vmem:[%s3 + $0x2c] sm:$0xf]
      %v4590 = vld [vmem:[%s3 + $0x30] sm:$0xf]
      %v4591 = vld [vmem:[%s3 + $0x34] sm:$0xf]
      %v4592 = vld [vmem:[%s3 + $0x38] sm:$0xf]
      %v4593 = vld [vmem:[%s3 + $0x3c] sm:$0xf]
      %v4594 = vld [vmem:[%s3 + $0x40] sm:$0xf]
      %v4595 = vld [vmem:[%s3 + $0x44] sm:$0xf]
      %v4596 = vld [vmem:[%s3 + $0x48] sm:$0xf]
      %v4597 = vld [vmem:[%s3 + $0x4c] sm:$0xf]
      %v4598 = vld [vmem:[%s3 + $0x50] sm:$0xf]
      %v4599 = vld [vmem:[%s3 + $0x54] sm:$0xf]
      %v4600 = vld [vmem:[%s3 + $0x58] sm:$0xf]
      %v4601 = vld [vmem:[%s3 + $0x5c] sm:$0xf]
      %v4602 = vld [vmem:[%s3 + $0x60] sm:$0xf]
      %v4603 = vld [vmem:[%s3 + $0x64] sm:$0xf]
      %v4604 = vld [vmem:[%s3 + $0x68] sm:$0xf]
      %v4605 = vld [vmem:[%s3 + $0x6c] sm:$0xf]
      %v4606 = vld [vmem:[%s3 + $0x70] sm:$0xf]
      %v4607 = vld [vmem:[%s3 + $0x74] sm:$0xf]
      %v4608 = vld [vmem:[%s3 + $0x78] sm:$0xf]
      %v4609 = vld [vmem:[%s3 + $0x7c] sm:$0xf]
      %v4610 = vld [vmem:[%s3 + $0x80] sm:$0xf]
      %v4611 = vld [vmem:[%s3 + $0x84] sm:$0xf]
      %v4612 = vld [vmem:[%s3 + $0x88] sm:$0xf]
      %v4613 = vld [vmem:[%s3 + $0x8c] sm:$0xf]
      %v4614 = vld [vmem:[%s3 + $0x90] sm:$0xf]
      %v4615 = vld [vmem:[%s3 + $0x94] sm:$0xf]
      %v4616 = vld [vmem:[%s3 + $0x98] sm:$0xf]
      %v4617 = vld [vmem:[%s3 + $0x9c] sm:$0xf]
      %v4618 = vld [vmem:[%s3 + $0xa0] sm:$0xf]
      %v4619 = vld [vmem:[%s3 + $0xa4] sm:$0xf]
      %v4620 = vld [vmem:[%s3 + $0xa8] sm:$0xf]
      %v4621 = vld [vmem:[%s3 + $0xac] sm:$0xf]
      %v4622 = vld [vmem:[%s3 + $0xb0] sm:$0xf]
      %v4623 = vld [vmem:[%s3 + $0xb4] sm:$0xf]
      %v4624 = vld [vmem:[%s3 + $0xb8] sm:$0xf]
      %v4625 = vld [vmem:[%s3 + $0xbc] sm:$0xf]
      %v4626 = vld [vmem:[%s3 + $0xc0] sm:$0xf]
      %v4627 = vld [vmem:[%s3 + $0xc4] sm:$0xf]
      %v4628 = vld [vmem:[%s3 + $0xc8] sm:$0xf]
      %v4629 = vld [vmem:[%s3 + $0xcc] sm:$0xf]
      %v4630 = vld [vmem:[%s3 + $0xd0] sm:$0xf]
      %v4631 = vld [vmem:[%s3 + $0xd4] sm:$0xf]
      %v4632 = vld [vmem:[%s3 + $0xd8] sm:$0xf]
      %v4633 = vld [vmem:[%s3 + $0xdc] sm:$0xf]
      %v4634 = vld [vmem:[%s3 + $0xe0] sm:$0xf]
      %v4635 = vld [vmem:[%s3 + $0xe4] sm:$0xf]
      %v4636 = vld [vmem:[%s3 + $0xe8] sm:$0xf]
      %v4637 = vld [vmem:[%s3 + $0xec] sm:$0xf]
      %v4638 = vld [vmem:[%s3 + $0xf0] sm:$0xf]
      %v4639 = vld [vmem:[%s3 + $0xf4] sm:$0xf]
      %v4640 = vld [vmem:[%s3 + $0xf8] sm:$0xf]
      %v4641 = vld [vmem:[%s3 + $0xfc] sm:$0xf]
      %v4642 = vld [vmem:[%s3 + $0x100] sm:$0xf]
      %v4643 = vld [vmem:[%s3 + $0x104] sm:$0xf]
      %v4644 = vld [vmem:[%s3 + $0x108] sm:$0xf]
      %v4645 = vld [vmem:[%s3 + $0x10c] sm:$0xf]
      %v4646 = vld [vmem:[%s3 + $0x110] sm:$0xf]
      %v4647 = vld [vmem:[%s3 + $0x114] sm:$0xf]
      %v4648 = vld [vmem:[%s3 + $0x118] sm:$0xf]
      %v4649 = vld [vmem:[%s3 + $0x11c] sm:$0xf]
      %v4650 = vld [vmem:[%s3 + $0x120] sm:$0xf]
      %v4651 = vld [vmem:[%s3 + $0x124] sm:$0xf]
      %v4652 = vld [vmem:[%s3 + $0x128] sm:$0xf]
      %v4653 = vld [vmem:[%s3 + $0x12c] sm:$0xf]
      %v4654 = vld [vmem:[%s3 + $0x130] sm:$0xf]
      %v4655 = vld [vmem:[%s3 + $0x134] sm:$0xf]
      %v4656 = vld [vmem:[%s3 + $0x138] sm:$0xf]
      %v4657 = vld [vmem:[%s3 + $0x13c] sm:$0xf]
      %v4658 = vld [vmem:[%s3 + $0x140] sm:$0xf]
      %v4659 = vld [vmem:[%s3 + $0x144] sm:$0xf]
      %v4660 = vld [vmem:[%s3 + $0x148] sm:$0xf]
      %v4661 = vld [vmem:[%s3 + $0x14c] sm:$0xf]
      %v4662 = vld [vmem:[%s3 + $0x150] sm:$0xf]
      %v4663 = vld [vmem:[%s3 + $0x154] sm:$0xf]
      %v4664 = vld [vmem:[%s3 + $0x158] sm:$0xf]
      %v4665 = vld [vmem:[%s3 + $0x15c] sm:$0xf]
      %v4666 = vld [vmem:[%s3 + $0x160] sm:$0xf]
      %v4667 = vld [vmem:[%s3 + $0x164] sm:$0xf]
      %v4668 = vld [vmem:[%s3 + $0x168] sm:$0xf]
      %v4669 = vld [vmem:[%s3 + $0x16c] sm:$0xf]
      %v4670 = vld [vmem:[%s3 + $0x170] sm:$0xf]
      %v4671 = vld [vmem:[%s3 + $0x174] sm:$0xf]
      %v4672 = vld [vmem:[%s3 + $0x178] sm:$0xf]
      %v4673 = vld [vmem:[%s3 + $0x17c] sm:$0xf]
      %v4674 = vld [vmem:[%s3 + $0x180] sm:$0xf]
      %v4675 = vld [vmem:[%s3 + $0x184] sm:$0xf]
      %v4676 = vld [vmem:[%s3 + $0x188] sm:$0xf]
      %v4677 = vld [vmem:[%s3 + $0x18c] sm:$0xf]
      %v4678 = vld [vmem:[%s3 + $0x190] sm:$0xf]
      %v4679 = vld [vmem:[%s3 + $0x194] sm:$0xf]
      %v4680 = vld [vmem:[%s3 + $0x198] sm:$0xf]
      %v4681 = vld [vmem:[%s3 + $0x19c] sm:$0xf]
      %v4682 = vld [vmem:[%s3 + $0x1a0] sm:$0xf]
      %v4683 = vld [vmem:[%s3 + $0x1a4] sm:$0xf]
      %v4684 = vld [vmem:[%s3 + $0x1a8] sm:$0xf]
      %v4685 = vld [vmem:[%s3 + $0x1ac] sm:$0xf]
      %v4686 = vld [vmem:[%s3 + $0x1b0] sm:$0xf]
      %v4687 = vld [vmem:[%s3 + $0x1b4] sm:$0xf]
      %v4688 = vld [vmem:[%s3 + $0x1b8] sm:$0xf]
      %v4689 = vld [vmem:[%s3 + $0x1bc] sm:$0xf]
      %v4690 = vld [vmem:[%s3 + $0x1c0] sm:$0xf]
      %v4691 = vld [vmem:[%s3 + $0x1c4] sm:$0xf]
      %v4692 = vld [vmem:[%s3 + $0x1c8] sm:$0xf]
      %v4693 = vld [vmem:[%s3 + $0x1cc] sm:$0xf]
      %v4694 = vld [vmem:[%s3 + $0x1d0] sm:$0xf]
      %v4695 = vld [vmem:[%s3 + $0x1d4] sm:$0xf]
      %v4696 = vld [vmem:[%s3 + $0x1d8] sm:$0xf]
      %v4697 = vld [vmem:[%s3 + $0x1dc] sm:$0xf]
      %v4698 = vld [vmem:[%s3 + $0x1e0] sm:$0xf]
      %v4699 = vld [vmem:[%s3 + $0x1e4] sm:$0xf]
      %v4700 = vld [vmem:[%s3 + $0x1e8] sm:$0xf]
      %v4701 = vld [vmem:[%s3 + $0x1ec] sm:$0xf]
      %v4702 = vld [vmem:[%s3 + $0x1f0] sm:$0xf]
      %v4703 = vld [vmem:[%s3 + $0x1f4] sm:$0xf]
      %v4704 = vld [vmem:[%s3 + $0x1f8] sm:$0xf]
      %v4705 = vld [vmem:[%s3 + $0x1fc] sm:$0xf]
      %v4706 = vld [vmem:[%s3 + $0x200] sm:$0xf]
      %v4707 = vld [vmem:[%s3 + $0x204] sm:$0xf]
      %v4708 = vld [vmem:[%s3 + $0x208] sm:$0xf]
      %v4709 = vld [vmem:[%s3 + $0x20c] sm:$0xf]
      %v4710 = vld [vmem:[%s3 + $0x210] sm:$0xf]
      %v4711 = vld [vmem:[%s3 + $0x214] sm:$0xf]
      %v4712 = vld [vmem:[%s3 + $0x218] sm:$0xf]
      %v4713 = vld [vmem:[%s3 + $0x21c] sm:$0xf]
      %v4714 = vld [vmem:[%s3 + $0x220] sm:$0xf]
      %v4715 = vld [vmem:[%s3 + $0x224] sm:$0xf]
      %v4716 = vld [vmem:[%s3 + $0x228] sm:$0xf]
      %v4717 = vld [vmem:[%s3 + $0x22c] sm:$0xf]
      %v4718 = vld [vmem:[%s3 + $0x230] sm:$0xf]
      %v4719 = vld [vmem:[%s3 + $0x234] sm:$0xf]
      %v4720 = vld [vmem:[%s3 + $0x238] sm:$0xf]
      %v4721 = vld [vmem:[%s3 + $0x23c] sm:$0xf]
      %v4722 = vld [vmem:[%s4] sm:$0x1]
      %v4724 = vlaneseq
      %v4725 = vshrl.u32 %v4724, 7
      %v4726 = vsub.s32 0, %v4725
      %v4727 = vrot.slane %v4722, %v4726
      %v4873 = vunpack.c.l.b16 %v4578
      %v4874 = vunpack.c.l.b16 %v4579
      %v4875 = vunpack.c.l.b16 %v4580
      %v4876 = vunpack.c.l.b16 %v4581
      %v4877 = vunpack.c.l.b16 %v4582
      %v4878 = vunpack.c.l.b16 %v4583
      %v4879 = vunpack.c.l.b16 %v4584
      %v4880 = vunpack.c.l.b16 %v4585
      %v4881 = vunpack.c.l.b16 %v4586
      %v4882 = vunpack.c.l.b16 %v4587
      %v4883 = vunpack.c.l.b16 %v4588
      %v4884 = vunpack.c.l.b16 %v4589
      %v4885 = vunpack.c.l.b16 %v4590
      %v4886 = vunpack.c.l.b16 %v4591
      %v4887 = vunpack.c.l.b16 %v4592
      %v4888 = vunpack.c.l.b16 %v4593
      %v4889 = vunpack.c.l.b16 %v4594
      %v4890 = vunpack.c.l.b16 %v4595
      %v4891 = vunpack.c.l.b16 %v4596
      %v4892 = vunpack.c.l.b16 %v4597
      %v4893 = vunpack.c.l.b16 %v4598
      %v4894 = vunpack.c.l.b16 %v4599
      %v4895 = vunpack.c.l.b16 %v4600
      %v4896 = vunpack.c.l.b16 %v4601
      %v4897 = vunpack.c.l.b16 %v4602
      %v4898 = vunpack.c.l.b16 %v4603
      %v4899 = vunpack.c.l.b16 %v4604
      %v4900 = vunpack.c.l.b16 %v4605
      %v4901 = vunpack.c.l.b16 %v4606
      %v4902 = vunpack.c.l.b16 %v4607
      %v4903 = vunpack.c.l.b16 %v4608
      %v4904 = vunpack.c.l.b16 %v4609
      %v4905 = vunpack.c.l.b16 %v4610
      %v4906 = vunpack.c.l.b16 %v4611
      %v4907 = vunpack.c.l.b16 %v4612
      %v4908 = vunpack.c.l.b16 %v4613
      %v4909 = vunpack.c.l.b16 %v4614
      %v4910 = vunpack.c.l.b16 %v4615
      %v4911 = vunpack.c.l.b16 %v4616
      %v4912 = vunpack.c.l.b16 %v4617
      %v4913 = vunpack.c.l.b16 %v4618
      %v4914 = vunpack.c.l.b16 %v4619
      %v4915 = vunpack.c.l.b16 %v4620
      %v4916 = vunpack.c.l.b16 %v4621
      %v4917 = vunpack.c.l.b16 %v4622
      %v4918 = vunpack.c.l.b16 %v4623
      %v4919 = vunpack.c.l.b16 %v4624
      %v4920 = vunpack.c.l.b16 %v4625
      %v4921 = vunpack.c.l.b16 %v4626
      %v4922 = vunpack.c.l.b16 %v4627
      %v4923 = vunpack.c.l.b16 %v4628
      %v4924 = vunpack.c.l.b16 %v4629
      %v4925 = vunpack.c.l.b16 %v4630
      %v4926 = vunpack.c.l.b16 %v4631
      %v4927 = vunpack.c.l.b16 %v4632
      %v4928 = vunpack.c.l.b16 %v4633
      %v4929 = vunpack.c.l.b16 %v4634
      %v4930 = vunpack.c.l.b16 %v4635
      %v4931 = vunpack.c.l.b16 %v4636
      %v4932 = vunpack.c.l.b16 %v4637
      %v4933 = vunpack.c.l.b16 %v4638
      %v4934 = vunpack.c.l.b16 %v4639
      %v4935 = vunpack.c.l.b16 %v4640
      %v4936 = vunpack.c.l.b16 %v4641
      %v4937 = vunpack.c.l.b16 %v4642
      %v4938 = vunpack.c.l.b16 %v4643
      %v4939 = vunpack.c.l.b16 %v4644
      %v4940 = vunpack.c.l.b16 %v4645
      %v4941 = vunpack.c.l.b16 %v4646
      %v4942 = vunpack.c.l.b16 %v4647
      %v4943 = vunpack.c.l.b16 %v4648
      %v4944 = vunpack.c.l.b16 %v4649
      %v4945 = vunpack.c.l.b16 %v4650
      %v4946 = vunpack.c.l.b16 %v4651
      %v4947 = vunpack.c.l.b16 %v4652
      %v4948 = vunpack.c.l.b16 %v4653
      %v4949 = vunpack.c.l.b16 %v4654
      %v4950 = vunpack.c.l.b16 %v4655
      %v4951 = vunpack.c.l.b16 %v4656
      %v4952 = vunpack.c.l.b16 %v4657
      %v4953 = vunpack.c.l.b16 %v4658
      %v4954 = vunpack.c.l.b16 %v4659
      %v4955 = vunpack.c.l.b16 %v4660
      %v4956 = vunpack.c.l.b16 %v4661
      %v4957 = vunpack.c.l.b16 %v4662
      %v4958 = vunpack.c.l.b16 %v4663
      %v4959 = vunpack.c.l.b16 %v4664
      %v4960 = vunpack.c.l.b16 %v4665
      %v4961 = vunpack.c.l.b16 %v4666
      %v4962 = vunpack.c.l.b16 %v4667
      %v4963 = vunpack.c.l.b16 %v4668
      %v4964 = vunpack.c.l.b16 %v4669
      %v4965 = vunpack.c.l.b16 %v4670
      %v4966 = vunpack.c.l.b16 %v4671
      %v4967 = vunpack.c.l.b16 %v4672
      %v4968 = vunpack.c.l.b16 %v4673
      %v4969 = vunpack.c.l.b16 %v4674
      %v4970 = vunpack.c.l.b16 %v4675
      %v4971 = vunpack.c.l.b16 %v4676
      %v4972 = vunpack.c.l.b16 %v4677
      %v4973 = vunpack.c.l.b16 %v4678
      %v4974 = vunpack.c.l.b16 %v4679
      %v4975 = vunpack.c.l.b16 %v4680
      %v4976 = vunpack.c.l.b16 %v4681
      %v4977 = vunpack.c.l.b16 %v4682
      %v4978 = vunpack.c.l.b16 %v4683
      %v4979 = vunpack.c.l.b16 %v4684
      %v4980 = vunpack.c.l.b16 %v4685
      %v4981 = vunpack.c.l.b16 %v4686
      %v4982 = vunpack.c.l.b16 %v4687
      %v4983 = vunpack.c.l.b16 %v4688
      %v4984 = vunpack.c.l.b16 %v4689
      %v4985 = vunpack.c.l.b16 %v4690
      %v4986 = vunpack.c.l.b16 %v4691
      %v4987 = vunpack.c.l.b16 %v4692
      %v4988 = vunpack.c.l.b16 %v4693
      %v4989 = vunpack.c.l.b16 %v4694
      %v4990 = vunpack.c.l.b16 %v4695
      %v4991 = vunpack.c.l.b16 %v4696
      %v4992 = vunpack.c.l.b16 %v4697
      %v4993 = vunpack.c.l.b16 %v4698
      %v4994 = vunpack.c.l.b16 %v4699
      %v4995 = vunpack.c.l.b16 %v4700
      %v4996 = vunpack.c.l.b16 %v4701
      %v4997 = vunpack.c.l.b16 %v4702
      %v4998 = vunpack.c.l.b16 %v4703
      %v4999 = vunpack.c.l.b16 %v4704
      %v5000 = vunpack.c.l.b16 %v4705
      %v5001 = vunpack.c.l.b16 %v4706
      %v5002 = vunpack.c.l.b16 %v4707
      %v5003 = vunpack.c.l.b16 %v4708
      %v5004 = vunpack.c.l.b16 %v4709
      %v5005 = vunpack.c.l.b16 %v4710
      %v5006 = vunpack.c.l.b16 %v4711
      %v5007 = vunpack.c.l.b16 %v4712
      %v5008 = vunpack.c.l.b16 %v4713
      %v5009 = vunpack.c.l.b16 %v4714
      %v5010 = vunpack.c.l.b16 %v4715
      %v5011 = vunpack.c.l.b16 %v4716
      %v5012 = vunpack.c.l.b16 %v4717
      %v5013 = vunpack.c.l.b16 %v4718
      %v5014 = vunpack.c.l.b16 %v4719
      %v5015 = vunpack.c.l.b16 %v4720
      %v5016 = vunpack.c.l.b16 %v4721
      %v5017 = vpack.c.b16 %v4874, %v4873
      %v5018 = vpack.c.b16 %v4876, %v4875
      %v5019 = vpack.c.b16 %v4878, %v4877
      %v5020 = vpack.c.b16 %v4880, %v4879
      %v5021 = vpack.c.b16 %v4882, %v4881
      %v5022 = vpack.c.b16 %v4884, %v4883
      %v5023 = vpack.c.b16 %v4886, %v4885
      %v5024 = vpack.c.b16 %v4888, %v4887
      %v5025 = vpack.c.b16 %v4890, %v4889
      %v5026 = vpack.c.b16 %v4892, %v4891
      %v5027 = vpack.c.b16 %v4894, %v4893
      %v5028 = vpack.c.b16 %v4896, %v4895
      %v5029 = vpack.c.b16 %v4898, %v4897
      %v5030 = vpack.c.b16 %v4900, %v4899
      %v5031 = vpack.c.b16 %v4902, %v4901
      %v5032 = vpack.c.b16 %v4904, %v4903
      %v5033 = vpack.c.b16 %v4906, %v4905
      %v5034 = vpack.c.b16 %v4908, %v4907
      %v5035 = vpack.c.b16 %v4910, %v4909
      %v5036 = vpack.c.b16 %v4912, %v4911
      %v5037 = vpack.c.b16 %v4914, %v4913
      %v5038 = vpack.c.b16 %v4916, %v4915
      %v5039 = vpack.c.b16 %v4918, %v4917
      %v5040 = vpack.c.b16 %v4920, %v4919
      %v5041 = vpack.c.b16 %v4922, %v4921
      %v5042 = vpack.c.b16 %v4924, %v4923
      %v5043 = vpack.c.b16 %v4926, %v4925
      %v5044 = vpack.c.b16 %v4928, %v4927
      %v5045 = vpack.c.b16 %v4930, %v4929
      %v5046 = vpack.c.b16 %v4932, %v4931
      %v5047 = vpack.c.b16 %v4934, %v4933
      %v5048 = vpack.c.b16 %v4936, %v4935
      %v5049 = vpack.c.b16 %v4938, %v4937
      %v5050 = vpack.c.b16 %v4940, %v4939
      %v5051 = vpack.c.b16 %v4942, %v4941
      %v5052 = vpack.c.b16 %v4944, %v4943
      %v5053 = vpack.c.b16 %v4946, %v4945
      %v5054 = vpack.c.b16 %v4948, %v4947
      %v5055 = vpack.c.b16 %v4950, %v4949
      %v5056 = vpack.c.b16 %v4952, %v4951
      %v5057 = vpack.c.b16 %v4954, %v4953
      %v5058 = vpack.c.b16 %v4956, %v4955
      %v5059 = vpack.c.b16 %v4958, %v4957
      %v5060 = vpack.c.b16 %v4960, %v4959
      %v5061 = vpack.c.b16 %v4962, %v4961
      %v5062 = vpack.c.b16 %v4964, %v4963
      %v5063 = vpack.c.b16 %v4966, %v4965
      %v5064 = vpack.c.b16 %v4968, %v4967
      %v5065 = vpack.c.b16 %v4970, %v4969
      %v5066 = vpack.c.b16 %v4972, %v4971
      %v5067 = vpack.c.b16 %v4974, %v4973
      %v5068 = vpack.c.b16 %v4976, %v4975
      %v5069 = vpack.c.b16 %v4978, %v4977
      %v5070 = vpack.c.b16 %v4980, %v4979
      %v5071 = vpack.c.b16 %v4982, %v4981
      %v5072 = vpack.c.b16 %v4984, %v4983
      %v5073 = vpack.c.b16 %v4986, %v4985
      %v5074 = vpack.c.b16 %v4988, %v4987
      %v5075 = vpack.c.b16 %v4990, %v4989
      %v5076 = vpack.c.b16 %v4992, %v4991
      %v5077 = vpack.c.b16 %v4994, %v4993
      %v5078 = vpack.c.b16 %v4996, %v4995
      %v5079 = vpack.c.b16 %v4998, %v4997
      %v5080 = vpack.c.b16 %v5000, %v4999
      %v5081 = vpack.c.b16 %v5002, %v5001
      %v5082 = vpack.c.b16 %v5004, %v5003
      %v5083 = vpack.c.b16 %v5006, %v5005
      %v5084 = vpack.c.b16 %v5008, %v5007
      %v5085 = vpack.c.b16 %v5010, %v5009
      %v5086 = vpack.c.b16 %v5012, %v5011
      %v5087 = vpack.c.b16 %v5014, %v5013
      %v5088 = vpack.c.b16 %v5016, %v5015
      %5161 = vmatprep.subr.bf16.mxu0 0
      %5162 = vmatpush1.bf16.msra.mxu0 %v5017
      %5163 = vmatprep.subr.bf16.mxu0 0
      %5164 = vmatpush1.bf16.msra.mxu0 %v5018
      %5165 = vmatprep.subr.bf16.mxu0 0
      %5166 = vmatpush1.bf16.msra.mxu0 %v5019
      %5167 = vmatprep.subr.bf16.mxu0 0
      %5168 = vmatpush1.bf16.msra.mxu0 %v5020
      %5169 = vmatprep.subr.bf16.mxu0 0
      %5170 = vmatpush1.bf16.msra.mxu0 %v5021
      %5171 = vmatprep.subr.bf16.mxu0 0
      %5172 = vmatpush1.bf16.msra.mxu0 %v5022
      %5173 = vmatprep.subr.bf16.mxu0 0
      %5174 = vmatpush1.bf16.msra.mxu0 %v5023
      %5175 = vmatprep.subr.bf16.mxu0 0
      %5176 = vmatpush1.bf16.msra.mxu0 %v5024
      %5177 = vmatprep.subr.bf16.mxu0 0
      %5178 = vmatpush1.bf16.msra.mxu0 %v5025
      %5179 = vmatprep.subr.bf16.mxu0 0
      %5180 = vmatpush1.bf16.msra.mxu0 %v5026
      %5181 = vmatprep.subr.bf16.mxu0 0
      %5182 = vmatpush1.bf16.msra.mxu0 %v5027
      %5183 = vmatprep.subr.bf16.mxu0 0
      %5184 = vmatpush1.bf16.msra.mxu0 %v5028
      %5185 = vmatprep.subr.bf16.mxu0 0
      %5186 = vmatpush1.bf16.msra.mxu0 %v5029
      %5187 = vmatprep.subr.bf16.mxu0 0
      %5188 = vmatpush1.bf16.msra.mxu0 %v5030
      %5189 = vmatprep.subr.bf16.mxu0 0
      %5190 = vmatpush1.bf16.msra.mxu0 %v5031
      %5191 = vmatprep.subr.bf16.mxu0 0
      %5192 = vmatpush1.bf16.msra.mxu0 %v5032
      %5193 = vmatprep.mubr.bf16.mxu0 %v4435
      %5194 = vmatmul.mubr.bf16.gmra.mrb[0].mxu0 %v4434
      %v5195 = vpop.f32.mrb[0].mxu0
      %v5196 = vadd.f32 %v4727, %v5195
      %v5197 = vpop.f32.mrb[0].mxu0
      %v5198 = vpop.f32.mrb[0].mxu0
      %v5199 = vadd.f32 %v4727, %v5198
      %v5200 = vpop.f32.mrb[0].mxu0
      %5201 = vmatprep.mubr.bf16.mxu0 %v4444
      %5202 = vmatmul.mubr.bf16.gmra.mrb[0].mxu0 %v4443
      %v5203 = vpop.f32.mrb[0].mxu0
      %v5204 = vadd.f32 %v4727, %v5203
      %v5205 = vpop.f32.mrb[0].mxu0
      %v5206 = vpop.f32.mrb[0].mxu0
      %v5207 = vadd.f32 %v4727, %v5206
      %v5208 = vpop.f32.mrb[0].mxu0
      %5209 = vmatprep.mubr.bf16.mxu0 %v4453
      %5210 = vmatmul.mubr.bf16.gmra.mrb[0].mxu0 %v4452
      %v5211 = vpop.f32.mrb[0].mxu0
      %v5212 = vadd.f32 %v4727, %v5211
      %v5213 = vpop.f32.mrb[0].mxu0
      %v5214 = vpop.f32.mrb[0].mxu0
      %v5215 = vadd.f32 %v4727, %v5214
      %v5216 = vpop.f32.mrb[0].mxu0
      %5217 = vmatprep.mubr.bf16.mxu0 %v4462
      %5218 = vmatmul.mubr.bf16.gmra.mrb[0].mxu0 %v4461
      %v5219 = vpop.f32.mrb[0].mxu0
      %v5220 = vadd.f32 %v4727, %v5219
      %v5221 = vpop.f32.mrb[0].mxu0
      %v5222 = vpop.f32.mrb[0].mxu0
      %v5223 = vadd.f32 %v4727, %v5222
      %v5224 = vpop.f32.mrb[0].mxu0
      %5225 = vmatprep.mubr.bf16.mxu0 %v4471
      %5226 = vmatmul.mubr.bf16.gmra.mrb[0].mxu0 %v4470
      %v5227 = vpop.f32.mrb[0].mxu0
      %v5228 = vadd.f32 %v4727, %v5227
      %v5229 = vpop.f32.mrb[0].mxu0
      %v5230 = vpop.f32.mrb[0].mxu0
      %v5231 = vadd.f32 %v4727, %v5230
      %v5232 = vpop.f32.mrb[0].mxu0
      %5233 = vmatprep.mubr.bf16.mxu0 %v4480
      %5234 = vmatmul.mubr.bf16.gmra.mrb[0].mxu0 %v4479
      %v5235 = vpop.f32.mrb[0].mxu0
      %v5236 = vadd.f32 %v4727, %v5235
      %v5237 = vpop.f32.mrb[0].mxu0
      %v5238 = vpop.f32.mrb[0].mxu0
      %v5239 = vadd.f32 %v4727, %v5238
      %v5240 = vpop.f32.mrb[0].mxu0
      %5241 = vmatprep.mubr.bf16.mxu0 %v4489
      %5242 = vmatmul.mubr.bf16.gmra.mrb[0].mxu0 %v4488
      %v5243 = vpop.f32.mrb[0].mxu0
      %v5244 = vadd.f32 %v4727, %v5243
      %v5245 = vpop.f32.mrb[0].mxu0
      %v5246 = vpop.f32.mrb[0].mxu0
      %v5247 = vadd.f32 %v4727, %v5246
      %v5248 = vpop.f32.mrb[0].mxu0
      %5249 = vmatprep.mubr.bf16.mxu0 %v4498
      %5250 = vmatmul.mubr.bf16.gmra.mrb[0].mxu0 %v4497
      %v5251 = vpop.f32.mrb[0].mxu0
      %v5252 = vadd.f32 %v4727, %v5251
      %v5253 = vpop.f32.mrb[0].mxu0
      %v5254 = vpop.f32.mrb[0].mxu0
      %v5255 = vadd.f32 %v4727, %v5254
      %v5256 = vpop.f32.mrb[0].mxu0
      %5257 = vmatprep.mubr.bf16.mxu0 %v4507
      %5258 = vmatmul.mubr.bf16.gmra.mrb[0].mxu0 %v4506
      %v5259 = vpop.f32.mrb[0].mxu0
      %v5260 = vadd.f32 %v4727, %v5259
      %v5261 = vpop.f32.mrb[0].mxu0
      %v5262 = vpop.f32.mrb[0].mxu0
      %v5263 = vadd.f32 %v4727, %v5262
      %v5264 = vpop.f32.mrb[0].mxu0
      %5265 = vmatprep.mubr.bf16.mxu0 %v4516
      %5266 = vmatmul.mubr.bf16.gmra.mrb[0].mxu0 %v4515
      %v5267 = vpop.f32.mrb[0].mxu0
      %v5268 = vadd.f32 %v4727, %v5267
      %v5269 = vpop.f32.mrb[0].mxu0
      %v5270 = vpop.f32.mrb[0].mxu0
      %v5271 = vadd.f32 %v4727, %v5270
      %v5272 = vpop.f32.mrb[0].mxu0
      %5273 = vmatprep.mubr.bf16.mxu0 %v4525
      %5274 = vmatmul.mubr.bf16.gmra.mrb[0].mxu0 %v4524
      %v5275 = vpop.f32.mrb[0].mxu0
      %v5276 = vadd.f32 %v4727, %v5275
      %v5277 = vpop.f32.mrb[0].mxu0
      %v5278 = vpop.f32.mrb[0].mxu0
      %v5279 = vadd.f32 %v4727, %v5278
      %v5280 = vpop.f32.mrb[0].mxu0
      %5281 = vmatprep.mubr.bf16.mxu0 %v4534
      %5282 = vmatmul.mubr.bf16.gmra.mrb[0].mxu0 %v4533
      %v5283 = vpop.f32.mrb[0].mxu0
      %v5284 = vadd.f32 %v4727, %v5283
      %v5285 = vpop.f32.mrb[0].mxu0
      %v5286 = vpop.f32.mrb[0].mxu0
      %v5287 = vadd.f32 %v4727, %v5286
      %v5288 = vpop.f32.mrb[0].mxu0
      %5289 = vmatprep.mubr.bf16.mxu0 %v4543
      %5290 = vmatmul.mubr.bf16.gmra.mrb[0].mxu0 %v4542
      %v5291 = vpop.f32.mrb[0].mxu0
      %v5292 = vadd.f32 %v4727, %v5291
      %v5293 = vpop.f32.mrb[0].mxu0
      %v5294 = vpop.f32.mrb[0].mxu0
      %v5295 = vadd.f32 %v4727, %v5294
      %v5296 = vpop.f32.mrb[0].mxu0
      %5297 = vmatprep.mubr.bf16.mxu0 %v4552
      %5298 = vmatmul.mubr.bf16.gmra.mrb[0].mxu0 %v4551
      %v5299 = vpop.f32.mrb[0].mxu0
      %v5300 = vadd.f32 %v4727, %v5299
      %v5301 = vpop.f32.mrb[0].mxu0
      %v5302 = vpop.f32.mrb[0].mxu0
      %v5303 = vadd.f32 %v4727, %v5302
      %v5304 = vpop.f32.mrb[0].mxu0
      %5305 = vmatprep.mubr.bf16.mxu0 %v4561
      %5306 = vmatmul.mubr.bf16.gmra.mrb[0].mxu0 %v4560
      %v5307 = vpop.f32.mrb[0].mxu0
      %v5308 = vadd.f32 %v4727, %v5307
      %v5309 = vpop.f32.mrb[0].mxu0
      %v5310 = vpop.f32.mrb[0].mxu0
      %v5311 = vadd.f32 %v4727, %v5310
      %v5312 = vpop.f32.mrb[0].mxu0
      %5313 = vmatprep.mubr.bf16.mxu0 %v4570
      %5314 = vmatmul.mubr.bf16.gmra.mrb[0].mxu0 %v4569
      %v5315 = vpop.f32.mrb[0].mxu0
      %v5316 = vadd.f32 %v4727, %v5315
      %v5317 = vpop.f32.mrb[0].mxu0
      %v5318 = vpop.f32.mrb[0].mxu0
      %v5319 = vadd.f32 %v4727, %v5318
      %v5320 = vpop.f32.mrb[0].mxu0
      %5321 = vdwg.mxu0
      %5322 = vmatprep.subr.bf16.mxu0 0
      %5323 = vmatpush1.bf16.msra.mxu0 %v5033
      %5324 = vmatprep.subr.bf16.mxu0 0
      %5325 = vmatpush1.bf16.msra.mxu0 %v5034
      %5326 = vmatprep.subr.bf16.mxu0 0
      %5327 = vmatpush1.bf16.msra.mxu0 %v5035
      %5328 = vmatprep.subr.bf16.mxu0 0
      %5329 = vmatpush1.bf16.msra.mxu0 %v5036
      %5330 = vmatprep.subr.bf16.mxu0 0
      %5331 = vmatpush1.bf16.msra.mxu0 %v5037
      %5332 = vmatprep.subr.bf16.mxu0 0
      %5333 = vmatpush1.bf16.msra.mxu0 %v5038
      %5334 = vmatprep.subr.bf16.mxu0 0
      %5335 = vmatpush1.bf16.msra.mxu0 %v5039
      %5336 = vmatprep.subr.bf16.mxu0 0
      %5337 = vmatpush1.bf16.msra.mxu0 %v5040
      %5338 = vmatprep.subr.bf16.mxu0 0
      %5339 = vmatpush1.bf16.msra.mxu0 %v5041
      %5340 = vmatprep.subr.bf16.mxu0 0
      %5341 = vmatpush1.bf16.msra.mxu0 %v5042
      %5342 = vmatprep.subr.bf16.mxu0 0
      %5343 = vmatpush1.bf16.msra.mxu0 %v5043
      %5344 = vmatprep.subr.bf16.mxu0 0
      %5345 = vmatpush1.bf16.msra.mxu0 %v5044
      %5346 = vmatprep.subr.bf16.mxu0 0
      %5347 = vmatpush1.bf16.msra.mxu0 %v5045
      %5348 = vmatprep.subr.bf16.mxu0 0
      %5349 = vmatpush1.bf16.msra.mxu0 %v5046
      %5350 = vmatprep.subr.bf16.mxu0 0
      %5351 = vmatpush1.bf16.msra.mxu0 %v5047
      %5352 = vmatprep.subr.bf16.mxu0 0
      %5353 = vmatpush1.bf16.msra.mxu0 %v5048
      %5354 = vmatprep.mubr.bf16.mxu0 %v4437
      %5355 = vmatmul.mubr.bf16.gmra.mrb[0].mxu0 %v4436
      %v5356 = vpop.f32.mrb[0].mxu0
      %v5357 = vadd.f32 %v5196, %v5356
      %v5358 = vpop.f32.mrb[0].mxu0
      %v5359 = vpop.f32.mrb[0].mxu0
      %v5360 = vadd.f32 %v5199, %v5359
      %v5361 = vpop.f32.mrb[0].mxu0
      %5362 = vmatprep.mubr.bf16.mxu0 %v4446
      %5363 = vmatmul.mubr.bf16.gmra.mrb[0].mxu0 %v4445
      %v5364 = vpop.f32.mrb[0].mxu0
      %v5365 = vadd.f32 %v5204, %v5364
      %v5366 = vpop.f32.mrb[0].mxu0
      %v5367 = vpop.f32.mrb[0].mxu0
      %v5368 = vadd.f32 %v5207, %v5367
      %v5369 = vpop.f32.mrb[0].mxu0
      %5370 = vmatprep.mubr.bf16.mxu0 %v4455
      %5371 = vmatmul.mubr.bf16.gmra.mrb[0].mxu0 %v4454
      %v5372 = vpop.f32.mrb[0].mxu0
      %v5373 = vadd.f32 %v5212, %v5372
      %v5374 = vpop.f32.mrb[0].mxu0
      %v5375 = vpop.f32.mrb[0].mxu0
      %v5376 = vadd.f32 %v5215, %v5375
      %v5377 = vpop.f32.mrb[0].mxu0
      %5378 = vmatprep.mubr.bf16.mxu0 %v4464
      %5379 = vmatmul.mubr.bf16.gmra.mrb[0].mxu0 %v4463
      %v5380 = vpop.f32.mrb[0].mxu0
      %v5381 = vadd.f32 %v5220, %v5380
      %v5382 = vpop.f32.mrb[0].mxu0
      %v5383 = vpop.f32.mrb[0].mxu0
      %v5384 = vadd.f32 %v5223, %v5383
      %v5385 = vpop.f32.mrb[0].mxu0
      %5386 = vmatprep.mubr.bf16.mxu0 %v4473
      %5387 = vmatmul.mubr.bf16.gmra.mrb[0].mxu0 %v4472
      %v5388 = vpop.f32.mrb[0].mxu0
      %v5389 = vadd.f32 %v5228, %v5388
      %v5390 = vpop.f32.mrb[0].mxu0
      %v5391 = vpop.f32.mrb[0].mxu0
      %v5392 = vadd.f32 %v5231, %v5391
      %v5393 = vpop.f32.mrb[0].mxu0
      %5394 = vmatprep.mubr.bf16.mxu0 %v4482
      %5395 = vmatmul.mubr.bf16.gmra.mrb[0].mxu0 %v4481
      %v5396 = vpop.f32.mrb[0].mxu0
      %v5397 = vadd.f32 %v5236, %v5396
      %v5398 = vpop.f32.mrb[0].mxu0
      %v5399 = vpop.f32.mrb[0].mxu0
      %v5400 = vadd.f32 %v5239, %v5399
      %v5401 = vpop.f32.mrb[0].mxu0
      %5402 = vmatprep.mubr.bf16.mxu0 %v4491
      %5403 = vmatmul.mubr.bf16.gmra.mrb[0].mxu0 %v4490
      %v5404 = vpop.f32.mrb[0].mxu0
      %v5405 = vadd.f32 %v5244, %v5404
      %v5406 = vpop.f32.mrb[0].mxu0
      %v5407 = vpop.f32.mrb[0].mxu0
      %v5408 = vadd.f32 %v5247, %v5407
      %v5409 = vpop.f32.mrb[0].mxu0
      %5410 = vmatprep.mubr.bf16.mxu0 %v4500
      %5411 = vmatmul.mubr.bf16.gmra.mrb[0].mxu0 %v4499
      %v5412 = vpop.f32.mrb[0].mxu0
      %v5413 = vadd.f32 %v5252, %v5412
      %v5414 = vpop.f32.mrb[0].mxu0
      %v5415 = vpop.f32.mrb[0].mxu0
      %v5416 = vadd.f32 %v5255, %v5415
      %v5417 = vpop.f32.mrb[0].mxu0
      %5418 = vmatprep.mubr.bf16.mxu0 %v4509
      %5419 = vmatmul.mubr.bf16.gmra.mrb[0].mxu0 %v4508
      %v5420 = vpop.f32.mrb[0].mxu0
      %v5421 = vadd.f32 %v5260, %v5420
      %v5422 = vpop.f32.mrb[0].mxu0
      %v5423 = vpop.f32.mrb[0].mxu0
      %v5424 = vadd.f32 %v5263, %v5423
      %v5425 = vpop.f32.mrb[0].mxu0
      %5426 = vmatprep.mubr.bf16.mxu0 %v4518
      %5427 = vmatmul.mubr.bf16.gmra.mrb[0].mxu0 %v4517
      %v5428 = vpop.f32.mrb[0].mxu0
      %v5429 = vadd.f32 %v5268, %v5428
      %v5430 = vpop.f32.mrb[0].mxu0
      %v5431 = vpop.f32.mrb[0].mxu0
      %v5432 = vadd.f32 %v5271, %v5431
      %v5433 = vpop.f32.mrb[0].mxu0
      %5434 = vmatprep.mubr.bf16.mxu0 %v4527
      %5435 = vmatmul.mubr.bf16.gmra.mrb[0].mxu0 %v4526
      %v5436 = vpop.f32.mrb[0].mxu0
      %v5437 = vadd.f32 %v5276, %v5436
      %v5438 = vpop.f32.mrb[0].mxu0
      %v5439 = vpop.f32.mrb[0].mxu0
      %v5440 = vadd.f32 %v5279, %v5439
      %v5441 = vpop.f32.mrb[0].mxu0
      %5442 = vmatprep.mubr.bf16.mxu0 %v4536
      %5443 = vmatmul.mubr.bf16.gmra.mrb[0].mxu0 %v4535
      %v5444 = vpop.f32.mrb[0].mxu0
      %v5445 = vadd.f32 %v5284, %v5444
      %v5446 = vpop.f32.mrb[0].mxu0
      %v5447 = vpop.f32.mrb[0].mxu0
      %v5448 = vadd.f32 %v5287, %v5447
      %v5449 = vpop.f32.mrb[0].mxu0
      %5450 = vmatprep.mubr.bf16.mxu0 %v4545
      %5451 = vmatmul.mubr.bf16.gmra.mrb[0].mxu0 %v4544
      %v5452 = vpop.f32.mrb[0].mxu0
      %v5453 = vadd.f32 %v5292, %v5452
      %v5454 = vpop.f32.mrb[0].mxu0
      %v5455 = vpop.f32.mrb[0].mxu0
      %v5456 = vadd.f32 %v5295, %v5455
      %v5457 = vpop.f32.mrb[0].mxu0
      %5458 = vmatprep.mubr.bf16.mxu0 %v4554
      %5459 = vmatmul.mubr.bf16.gmra.mrb[0].mxu0 %v4553
      %v5460 = vpop.f32.mrb[0].mxu0
      %v5461 = vadd.f32 %v5300, %v5460
      %v5462 = vpop.f32.mrb[0].mxu0
      %v5463 = vpop.f32.mrb[0].mxu0
      %v5464 = vadd.f32 %v5303, %v5463
      %v5465 = vpop.f32.mrb[0].mxu0
      %5466 = vmatprep.mubr.bf16.mxu0 %v4563
      %5467 = vmatmul.mubr.bf16.gmra.mrb[0].mxu0 %v4562
      %v5468 = vpop.f32.mrb[0].mxu0
      %v5469 = vadd.f32 %v5308, %v5468
      %v5470 = vpop.f32.mrb[0].mxu0
      %v5471 = vpop.f32.mrb[0].mxu0
      %v5472 = vadd.f32 %v5311, %v5471
      %v5473 = vpop.f32.mrb[0].mxu0
      %5474 = vmatprep.mubr.bf16.mxu0 %v4572
      %5475 = vmatmul.mubr.bf16.gmra.mrb[0].mxu0 %v4571
      %v5476 = vpop.f32.mrb[0].mxu0
      %v5477 = vadd.f32 %v5316, %v5476
      %v5478 = vpop.f32.mrb[0].mxu0
      %v5479 = vpop.f32.mrb[0].mxu0
      %v5480 = vadd.f32 %v5319, %v5479
      %v5481 = vpop.f32.mrb[0].mxu0
      %5482 = vdwg.mxu0
      %5483 = vmatprep.subr.bf16.mxu0 0
      %5484 = vmatpush1.bf16.msra.mxu0 %v5049
      %5485 = vmatprep.subr.bf16.mxu0 0
      %5486 = vmatpush1.bf16.msra.mxu0 %v5050
      %5487 = vmatprep.subr.bf16.mxu0 0
      %5488 = vmatpush1.bf16.msra.mxu0 %v5051
      %5489 = vmatprep.subr.bf16.mxu0 0
      %5490 = vmatpush1.bf16.msra.mxu0 %v5052
      %5491 = vmatprep.subr.bf16.mxu0 0
      %5492 = vmatpush1.bf16.msra.mxu0 %v5053
      %5493 = vmatprep.subr.bf16.mxu0 0
      %5494 = vmatpush1.bf16.msra.mxu0 %v5054
      %5495 = vmatprep.subr.bf16.mxu0 0
      %5496 = vmatpush1.bf16.msra.mxu0 %v5055
      %5497 = vmatprep.subr.bf16.mxu0 0
      %5498 = vmatpush1.bf16.msra.mxu0 %v5056
      %5499 = vmatprep.subr.bf16.mxu0 0
      %5500 = vmatpush1.bf16.msra.mxu0 %v5057
      %5501 = vmatprep.subr.bf16.mxu0 0
      %5502 = vmatpush1.bf16.msra.mxu0 %v5058
      %5503 = vmatprep.subr.bf16.mxu0 0
      %5504 = vmatpush1.bf16.msra.mxu0 %v5059
      %5505 = vmatprep.subr.bf16.mxu0 0
      %5506 = vmatpush1.bf16.msra.mxu0 %v5060
      %5507 = vmatprep.subr.bf16.mxu0 0
      %5508 = vmatpush1.bf16.msra.mxu0 %v5061
      %5509 = vmatprep.subr.bf16.mxu0 0
      %5510 = vmatpush1.bf16.msra.mxu0 %v5062
      %5511 = vmatprep.subr.bf16.mxu0 0
      %5512 = vmatpush1.bf16.msra.mxu0 %v5063
      %5513 = vmatprep.subr.bf16.mxu0 0
      %5514 = vmatpush1.bf16.msra.mxu0 %v5064
      %5515 = vmatprep.mubr.bf16.mxu0 %v4439
      %5516 = vmatmul.mubr.bf16.gmra.mrb[0].mxu0 %v4438
      %v5517 = vpop.f32.mrb[0].mxu0
      %v5518 = vadd.f32 %v5357, %v5517
      %v5519 = vpop.f32.mrb[0].mxu0
      %v5520 = vpop.f32.mrb[0].mxu0
      %v5521 = vadd.f32 %v5360, %v5520
      %v5522 = vpop.f32.mrb[0].mxu0
      %5523 = vmatprep.mubr.bf16.mxu0 %v4448
      %5524 = vmatmul.mubr.bf16.gmra.mrb[0].mxu0 %v4447
      %v5525 = vpop.f32.mrb[0].mxu0
      %v5526 = vadd.f32 %v5365, %v5525
      %v5527 = vpop.f32.mrb[0].mxu0
      %v5528 = vpop.f32.mrb[0].mxu0
      %v5529 = vadd.f32 %v5368, %v5528
      %v5530 = vpop.f32.mrb[0].mxu0
      %5531 = vmatprep.mubr.bf16.mxu0 %v4457
      %5532 = vmatmul.mubr.bf16.gmra.mrb[0].mxu0 %v4456
      %v5533 = vpop.f32.mrb[0].mxu0
      %v5534 = vadd.f32 %v5373, %v5533
      %v5535 = vpop.f32.mrb[0].mxu0
      %v5536 = vpop.f32.mrb[0].mxu0
      %v5537 = vadd.f32 %v5376, %v5536
      %v5538 = vpop.f32.mrb[0].mxu0
      %5539 = vmatprep.mubr.bf16.mxu0 %v4466
      %5540 = vmatmul.mubr.bf16.gmra.mrb[0].mxu0 %v4465
      %v5541 = vpop.f32.mrb[0].mxu0
      %v5542 = vadd.f32 %v5381, %v5541
      %v5543 = vpop.f32.mrb[0].mxu0
      %v5544 = vpop.f32.mrb[0].mxu0
      %v5545 = vadd.f32 %v5384, %v5544
      %v5546 = vpop.f32.mrb[0].mxu0
      %5547 = vmatprep.mubr.bf16.mxu0 %v4475
      %5548 = vmatmul.mubr.bf16.gmra.mrb[0].mxu0 %v4474
      %v5549 = vpop.f32.mrb[0].mxu0
      %v5550 = vadd.f32 %v5389, %v5549
      %v5551 = vpop.f32.mrb[0].mxu0
      %v5552 = vpop.f32.mrb[0].mxu0
      %v5553 = vadd.f32 %v5392, %v5552
      %v5554 = vpop.f32.mrb[0].mxu0
      %5555 = vmatprep.mubr.bf16.mxu0 %v4484
      %5556 = vmatmul.mubr.bf16.gmra.mrb[0].mxu0 %v4483
      %v5557 = vpop.f32.mrb[0].mxu0
      %v5558 = vadd.f32 %v5397, %v5557
      %v5559 = vpop.f32.mrb[0].mxu0
      %v5560 = vpop.f32.mrb[0].mxu0
      %v5561 = vadd.f32 %v5400, %v5560
      %v5562 = vpop.f32.mrb[0].mxu0
      %5563 = vmatprep.mubr.bf16.mxu0 %v4493
      %5564 = vmatmul.mubr.bf16.gmra.mrb[0].mxu0 %v4492
      %v5565 = vpop.f32.mrb[0].mxu0
      %v5566 = vadd.f32 %v5405, %v5565
      %v5567 = vpop.f32.mrb[0].mxu0
      %v5568 = vpop.f32.mrb[0].mxu0
      %v5569 = vadd.f32 %v5408, %v5568
      %v5570 = vpop.f32.mrb[0].mxu0
      %5571 = vmatprep.mubr.bf16.mxu0 %v4502
      %5572 = vmatmul.mubr.bf16.gmra.mrb[0].mxu0 %v4501
      %v5573 = vpop.f32.mrb[0].mxu0
      %v5574 = vadd.f32 %v5413, %v5573
      %v5575 = vpop.f32.mrb[0].mxu0
      %v5576 = vpop.f32.mrb[0].mxu0
      %v5577 = vadd.f32 %v5416, %v5576
      %v5578 = vpop.f32.mrb[0].mxu0
      %5579 = vmatprep.mubr.bf16.mxu0 %v4511
      %5580 = vmatmul.mubr.bf16.gmra.mrb[0].mxu0 %v4510
      %v5581 = vpop.f32.mrb[0].mxu0
      %v5582 = vadd.f32 %v5421, %v5581
      %v5583 = vpop.f32.mrb[0].mxu0
      %v5584 = vpop.f32.mrb[0].mxu0
      %v5585 = vadd.f32 %v5424, %v5584
      %v5586 = vpop.f32.mrb[0].mxu0
      %5587 = vmatprep.mubr.bf16.mxu0 %v4520
      %5588 = vmatmul.mubr.bf16.gmra.mrb[0].mxu0 %v4519
      %v5589 = vpop.f32.mrb[0].mxu0
      %v5590 = vadd.f32 %v5429, %v5589
      %v5591 = vpop.f32.mrb[0].mxu0
      %v5592 = vpop.f32.mrb[0].mxu0
      %v5593 = vadd.f32 %v5432, %v5592
      %v5594 = vpop.f32.mrb[0].mxu0
      %5595 = vmatprep.mubr.bf16.mxu0 %v4529
      %5596 = vmatmul.mubr.bf16.gmra.mrb[0].mxu0 %v4528
      %v5597 = vpop.f32.mrb[0].mxu0
      %v5598 = vadd.f32 %v5437, %v5597
      %v5599 = vpop.f32.mrb[0].mxu0
      %v5600 = vpop.f32.mrb[0].mxu0
      %v5601 = vadd.f32 %v5440, %v5600
      %v5602 = vpop.f32.mrb[0].mxu0
      %5603 = vmatprep.mubr.bf16.mxu0 %v4538
      %5604 = vmatmul.mubr.bf16.gmra.mrb[0].mxu0 %v4537
      %v5605 = vpop.f32.mrb[0].mxu0
      %v5606 = vadd.f32 %v5445, %v5605
      %v5607 = vpop.f32.mrb[0].mxu0
      %v5608 = vpop.f32.mrb[0].mxu0
      %v5609 = vadd.f32 %v5448, %v5608
      %v5610 = vpop.f32.mrb[0].mxu0
      %5611 = vmatprep.mubr.bf16.mxu0 %v4547
      %5612 = vmatmul.mubr.bf16.gmra.mrb[0].mxu0 %v4546
      %v5613 = vpop.f32.mrb[0].mxu0
      %v5614 = vadd.f32 %v5453, %v5613
      %v5615 = vpop.f32.mrb[0].mxu0
      %v5616 = vpop.f32.mrb[0].mxu0
      %v5617 = vadd.f32 %v5456, %v5616
      %v5618 = vpop.f32.mrb[0].mxu0
      %5619 = vmatprep.mubr.bf16.mxu0 %v4556
      %5620 = vmatmul.mubr.bf16.gmra.mrb[0].mxu0 %v4555
      %v5621 = vpop.f32.mrb[0].mxu0
      %v5622 = vadd.f32 %v5461, %v5621
      %v5623 = vpop.f32.mrb[0].mxu0
      %v5624 = vpop.f32.mrb[0].mxu0
      %v5625 = vadd.f32 %v5464, %v5624
      %v5626 = vpop.f32.mrb[0].mxu0
      %5627 = vmatprep.mubr.bf16.mxu0 %v4565
      %5628 = vmatmul.mubr.bf16.gmra.mrb[0].mxu0 %v4564
      %v5629 = vpop.f32.mrb[0].mxu0
      %v5630 = vadd.f32 %v5469, %v5629
      %v5631 = vpop.f32.mrb[0].mxu0
      %v5632 = vpop.f32.mrb[0].mxu0
      %v5633 = vadd.f32 %v5472, %v5632
      %v5634 = vpop.f32.mrb[0].mxu0
      %5635 = vmatprep.mubr.bf16.mxu0 %v4574
      %5636 = vmatmul.mubr.bf16.gmra.mrb[0].mxu0 %v4573
      %v5637 = vpop.f32.mrb[0].mxu0
      %v5638 = vadd.f32 %v5477, %v5637
      %v5639 = vpop.f32.mrb[0].mxu0
      %v5640 = vpop.f32.mrb[0].mxu0
      %v5641 = vadd.f32 %v5480, %v5640
      %v5642 = vpop.f32.mrb[0].mxu0
      %5643 = vdwg.mxu0
      %5644 = vmatprep.subr.bf16.mxu0 0
      %5645 = vmatpush1.bf16.msra.mxu0 %v5065
      %5646 = vmatprep.subr.bf16.mxu0 0
      %5647 = vmatpush1.bf16.msra.mxu0 %v5066
      %5648 = vmatprep.subr.bf16.mxu0 0
      %5649 = vmatpush1.bf16.msra.mxu0 %v5067
      %5650 = vmatprep.subr.bf16.mxu0 0
      %5651 = vmatpush1.bf16.msra.mxu0 %v5068
      %5652 = vmatprep.subr.bf16.mxu0 0
      %5653 = vmatpush1.bf16.msra.mxu0 %v5069
      %5654 = vmatprep.subr.bf16.mxu0 0
      %5655 = vmatpush1.bf16.msra.mxu0 %v5070
      %5656 = vmatprep.subr.bf16.mxu0 0
      %5657 = vmatpush1.bf16.msra.mxu0 %v5071
      %5658 = vmatprep.subr.bf16.mxu0 0
      %5659 = vmatpush1.bf16.msra.mxu0 %v5072
      %5660 = vmatprep.subr.bf16.mxu0 0
      %5661 = vmatpush1.bf16.msra.mxu0 %v5073
      %5662 = vmatprep.subr.bf16.mxu0 0
      %5663 = vmatpush1.bf16.msra.mxu0 %v5074
      %5664 = vmatprep.subr.bf16.mxu0 0
      %5665 = vmatpush1.bf16.msra.mxu0 %v5075
      %5666 = vmatprep.subr.bf16.mxu0 0
      %5667 = vmatpush1.bf16.msra.mxu0 %v5076
      %5668 = vmatprep.subr.bf16.mxu0 0
      %5669 = vmatpush1.bf16.msra.mxu0 %v5077
      %5670 = vmatprep.subr.bf16.mxu0 0
      %5671 = vmatpush1.bf16.msra.mxu0 %v5078
      %5672 = vmatprep.subr.bf16.mxu0 0
      %5673 = vmatpush1.bf16.msra.mxu0 %v5079
      %5674 = vmatprep.subr.bf16.mxu0 0
      %5675 = vmatpush1.bf16.msra.mxu0 %v5080
      %5676 = vmatprep.mubr.bf16.mxu0 %v4441
      %5677 = vmatmul.mubr.bf16.gmra.mrb[0].mxu0 %v4440
      %v5678 = vpop.f32.mrb[0].mxu0
      %v5679 = vadd.f32 %v5518, %v5678
      %v5680 = vpop.f32.mrb[0].mxu0
      %v5681 = vpop.f32.mrb[0].mxu0
      %v5682 = vadd.f32 %v5521, %v5681
      %v5683 = vpop.f32.mrb[0].mxu0
      %5684 = vmatprep.mubr.bf16.mxu0 %v4450
      %5685 = vmatmul.mubr.bf16.gmra.mrb[0].mxu0 %v4449
      %v5686 = vpop.f32.mrb[0].mxu0
      %v5687 = vadd.f32 %v5526, %v5686
      %v5688 = vpop.f32.mrb[0].mxu0
      %v5689 = vpop.f32.mrb[0].mxu0
      %v5690 = vadd.f32 %v5529, %v5689
      %v5691 = vpop.f32.mrb[0].mxu0
      %5692 = vmatprep.mubr.bf16.mxu0 %v4459
      %5693 = vmatmul.mubr.bf16.gmra.mrb[0].mxu0 %v4458
      %v5694 = vpop.f32.mrb[0].mxu0
      %v5695 = vadd.f32 %v5534, %v5694
      %v5696 = vpop.f32.mrb[0].mxu0
      %v5697 = vpop.f32.mrb[0].mxu0
      %v5698 = vadd.f32 %v5537, %v5697
      %v5699 = vpop.f32.mrb[0].mxu0
      %5700 = vmatprep.mubr.bf16.mxu0 %v4468
      %5701 = vmatmul.mubr.bf16.gmra.mrb[0].mxu0 %v4467
      %v5702 = vpop.f32.mrb[0].mxu0
      %v5703 = vadd.f32 %v5542, %v5702
      %v5704 = vpop.f32.mrb[0].mxu0
      %v5705 = vpop.f32.mrb[0].mxu0
      %v5706 = vadd.f32 %v5545, %v5705
      %v5707 = vpop.f32.mrb[0].mxu0
      %5708 = vmatprep.mubr.bf16.mxu0 %v4477
      %5709 = vmatmul.mubr.bf16.gmra.mrb[0].mxu0 %v4476
      %v5710 = vpop.f32.mrb[0].mxu0
      %v5711 = vadd.f32 %v5550, %v5710
      %v5712 = vpop.f32.mrb[0].mxu0
      %v5713 = vpop.f32.mrb[0].mxu0
      %v5714 = vadd.f32 %v5553, %v5713
      %v5715 = vpop.f32.mrb[0].mxu0
      %5716 = vmatprep.mubr.bf16.mxu0 %v4486
      %5717 = vmatmul.mubr.bf16.gmra.mrb[0].mxu0 %v4485
      %v5718 = vpop.f32.mrb[0].mxu0
      %v5719 = vadd.f32 %v5558, %v5718
      %v5720 = vpop.f32.mrb[0].mxu0
      %v5721 = vpop.f32.mrb[0].mxu0
      %v5722 = vadd.f32 %v5561, %v5721
      %v5723 = vpop.f32.mrb[0].mxu0
      %5724 = vmatprep.mubr.bf16.mxu0 %v4495
      %5725 = vmatmul.mubr.bf16.gmra.mrb[0].mxu0 %v4494
      %v5726 = vpop.f32.mrb[0].mxu0
      %v5727 = vadd.f32 %v5566, %v5726
      %v5728 = vpop.f32.mrb[0].mxu0
      %v5729 = vpop.f32.mrb[0].mxu0
      %v5730 = vadd.f32 %v5569, %v5729
      %v5731 = vpop.f32.mrb[0].mxu0
      %5732 = vmatprep.mubr.bf16.mxu0 %v4504
      %5733 = vmatmul.mubr.bf16.gmra.mrb[0].mxu0 %v4503
      %v5734 = vpop.f32.mrb[0].mxu0
      %v5735 = vadd.f32 %v5574, %v5734
      %v5736 = vpop.f32.mrb[0].mxu0
      %v5737 = vpop.f32.mrb[0].mxu0
      %v5738 = vadd.f32 %v5577, %v5737
      %v5739 = vpop.f32.mrb[0].mxu0
      %5740 = vmatprep.mubr.bf16.mxu0 %v4513
      %5741 = vmatmul.mubr.bf16.gmra.mrb[0].mxu0 %v4512
      %v5742 = vpop.f32.mrb[0].mxu0
      %v5743 = vadd.f32 %v5582, %v5742
      %v5744 = vpop.f32.mrb[0].mxu0
      %v5745 = vpop.f32.mrb[0].mxu0
      %v5746 = vadd.f32 %v5585, %v5745
      %v5747 = vpop.f32.mrb[0].mxu0
      %5748 = vmatprep.mubr.bf16.mxu0 %v4522
      %5749 = vmatmul.mubr.bf16.gmra.mrb[0].mxu0 %v4521
      %v5750 = vpop.f32.mrb[0].mxu0
      %v5751 = vadd.f32 %v5590, %v5750
      %v5752 = vpop.f32.mrb[0].mxu0
      %v5753 = vpop.f32.mrb[0].mxu0
      %v5754 = vadd.f32 %v5593, %v5753
      %v5755 = vpop.f32.mrb[0].mxu0
      %5756 = vmatprep.mubr.bf16.mxu0 %v4531
      %5757 = vmatmul.mubr.bf16.gmra.mrb[0].mxu0 %v4530
      %v5758 = vpop.f32.mrb[0].mxu0
      %v5759 = vadd.f32 %v5598, %v5758
      %v5760 = vpop.f32.mrb[0].mxu0
      %v5761 = vpop.f32.mrb[0].mxu0
      %v5762 = vadd.f32 %v5601, %v5761
      %v5763 = vpop.f32.mrb[0].mxu0
      %5764 = vmatprep.mubr.bf16.mxu0 %v4540
      %5765 = vmatmul.mubr.bf16.gmra.mrb[0].mxu0 %v4539
      %v5766 = vpop.f32.mrb[0].mxu0
      %v5767 = vadd.f32 %v5606, %v5766
      %v5768 = vpop.f32.mrb[0].mxu0
      %v5769 = vpop.f32.mrb[0].mxu0
      %v5770 = vadd.f32 %v5609, %v5769
      %v5771 = vpop.f32.mrb[0].mxu0
      %5772 = vmatprep.mubr.bf16.mxu0 %v4549
      %5773 = vmatmul.mubr.bf16.gmra.mrb[0].mxu0 %v4548
      %v5774 = vpop.f32.mrb[0].mxu0
      %v5775 = vadd.f32 %v5614, %v5774
      %v5776 = vpop.f32.mrb[0].mxu0
      %v5777 = vpop.f32.mrb[0].mxu0
      %v5778 = vadd.f32 %v5617, %v5777
      %v5779 = vpop.f32.mrb[0].mxu0
      %5780 = vmatprep.mubr.bf16.mxu0 %v4558
      %5781 = vmatmul.mubr.bf16.gmra.mrb[0].mxu0 %v4557
      %v5782 = vpop.f32.mrb[0].mxu0
      %v5783 = vadd.f32 %v5622, %v5782
      %v5784 = vpop.f32.mrb[0].mxu0
      %v5785 = vpop.f32.mrb[0].mxu0
      %v5786 = vadd.f32 %v5625, %v5785
      %v5787 = vpop.f32.mrb[0].mxu0
      %5788 = vmatprep.mubr.bf16.mxu0 %v4567
      %5789 = vmatmul.mubr.bf16.gmra.mrb[0].mxu0 %v4566
      %v5790 = vpop.f32.mrb[0].mxu0
      %v5791 = vadd.f32 %v5630, %v5790
      %v5792 = vpop.f32.mrb[0].mxu0
      %v5793 = vpop.f32.mrb[0].mxu0
      %v5794 = vadd.f32 %v5633, %v5793
      %v5795 = vpop.f32.mrb[0].mxu0
      %5796 = vmatprep.mubr.bf16.mxu0 %v4576
      %5797 = vmatmul.mubr.bf16.gmra.mrb[0].mxu0 %v4575
      %v5798 = vpop.f32.mrb[0].mxu0
      %v5799 = vadd.f32 %v5638, %v5798
      %v5800 = vpop.f32.mrb[0].mxu0
      %v5801 = vpop.f32.mrb[0].mxu0
      %v5802 = vadd.f32 %v5641, %v5801
      %v5803 = vpop.f32.mrb[0].mxu0
      %5804 = vdwg.mxu0
      %5805 = vmatprep.subr.bf16.mxu0 0
      %5806 = vmatpush1.bf16.msra.mxu0 %v5081
      %5807 = vmatprep.subr.bf16.mxu0 0
      %5808 = vmatpush1.bf16.msra.mxu0 %v5082
      %5809 = vmatprep.subr.bf16.mxu0 0
      %5810 = vmatpush1.bf16.msra.mxu0 %v5083
      %5811 = vmatprep.subr.bf16.mxu0 0
      %5812 = vmatpush1.bf16.msra.mxu0 %v5084
      %5813 = vmatprep.subr.bf16.mxu0 0
      %5814 = vmatpush1.bf16.msra.mxu0 %v5085
      %5815 = vmatprep.subr.bf16.mxu0 0
      %5816 = vmatpush1.bf16.msra.mxu0 %v5086
      %5817 = vmatprep.subr.bf16.mxu0 0
      %5818 = vmatpush1.bf16.msra.mxu0 %v5087
      %5819 = vmatprep.subr.bf16.mxu0 0
      %5820 = vmatpush1.bf16.msra.mxu0 %v5088
      %5821 = vmatprep.subr.bf16.mxu0 0
      %5822 = vmatpush1.bf16.msra.mxu0 0
      %5823 = vmatprep.subr.bf16.mxu0 0
      %5824 = vmatpush1.bf16.msra.mxu0 0
      %5825 = vmatprep.subr.bf16.mxu0 0
      %5826 = vmatpush1.bf16.msra.mxu0 0
      %5827 = vmatprep.subr.bf16.mxu0 0
      %5828 = vmatpush1.bf16.msra.mxu0 0
      %5829 = vmatprep.subr.bf16.mxu0 0
      %5830 = vmatpush1.bf16.msra.mxu0 0
      %5831 = vmatprep.subr.bf16.mxu0 0
      %5832 = vmatpush1.bf16.msra.mxu0 0
      %5833 = vmatprep.subr.bf16.mxu0 0
      %5834 = vmatpush1.bf16.msra.mxu0 0
      %5835 = vmatprep.subr.bf16.mxu0 0
      %5836 = vmatpush1.bf16.msra.mxu0 0
      %5837 = vmatprep.mubr.bf16.mxu0 0
      %5838 = vmatmul.mubr.bf16.gmra.mrb[0].mxu0 %v4442
      %v5839 = vpop.f32.mrb[0].mxu0
      %v5840 = vadd.f32 %v5679, %v5839
      %v5841 = vpop.f32.mrb[0].mxu0
      %v5842 = vpop.f32.mrb[0].mxu0
      %v5843 = vadd.f32 %v5682, %v5842
      %v5844 = vpop.f32.mrb[0].mxu0
      %5845 = vmatprep.mubr.bf16.mxu0 0
      %5846 = vmatmul.mubr.bf16.gmra.mrb[0].mxu0 %v4451
      %v5847 = vpop.f32.mrb[0].mxu0
      %v5848 = vadd.f32 %v5687, %v5847
      %v5849 = vpop.f32.mrb[0].mxu0
      %v5850 = vpop.f32.mrb[0].mxu0
      %v5851 = vadd.f32 %v5690, %v5850
      %v5852 = vpop.f32.mrb[0].mxu0
      %5853 = vmatprep.mubr.bf16.mxu0 0
      %5854 = vmatmul.mubr.bf16.gmra.mrb[0].mxu0 %v4460
      %v5855 = vpop.f32.mrb[0].mxu0
      %v5856 = vadd.f32 %v5695, %v5855
      %v5857 = vpop.f32.mrb[0].mxu0
      %v5858 = vpop.f32.mrb[0].mxu0
      %v5859 = vadd.f32 %v5698, %v5858
      %v5860 = vpop.f32.mrb[0].mxu0
      %5861 = vmatprep.mubr.bf16.mxu0 0
      %5862 = vmatmul.mubr.bf16.gmra.mrb[0].mxu0 %v4469
      %v5863 = vpop.f32.mrb[0].mxu0
      %v5864 = vadd.f32 %v5703, %v5863
      %v5865 = vpop.f32.mrb[0].mxu0
      %v5866 = vpop.f32.mrb[0].mxu0
      %v5867 = vadd.f32 %v5706, %v5866
      %v5868 = vpop.f32.mrb[0].mxu0
      %5869 = vmatprep.mubr.bf16.mxu0 0
      %5870 = vmatmul.mubr.bf16.gmra.mrb[0].mxu0 %v4478
      %v5871 = vpop.f32.mrb[0].mxu0
      %v5872 = vadd.f32 %v5711, %v5871
      %v5873 = vpop.f32.mrb[0].mxu0
      %v5874 = vpop.f32.mrb[0].mxu0
      %v5875 = vadd.f32 %v5714, %v5874
      %v5876 = vpop.f32.mrb[0].mxu0
      %5877 = vmatprep.mubr.bf16.mxu0 0
      %5878 = vmatmul.mubr.bf16.gmra.mrb[0].mxu0 %v4487
      %v5879 = vpop.f32.mrb[0].mxu0
      %v5880 = vadd.f32 %v5719, %v5879
      %v5881 = vpop.f32.mrb[0].mxu0
      %v5882 = vpop.f32.mrb[0].mxu0
      %v5883 = vadd.f32 %v5722, %v5882
      %v5884 = vpop.f32.mrb[0].mxu0
      %5885 = vmatprep.mubr.bf16.mxu0 0
      %5886 = vmatmul.mubr.bf16.gmra.mrb[0].mxu0 %v4496
      %v5887 = vpop.f32.mrb[0].mxu0
      %v5888 = vadd.f32 %v5727, %v5887
      %v5889 = vpop.f32.mrb[0].mxu0
      %v5890 = vpop.f32.mrb[0].mxu0
      %v5891 = vadd.f32 %v5730, %v5890
      %v5892 = vpop.f32.mrb[0].mxu0
      %5893 = vmatprep.mubr.bf16.mxu0 0
      %5894 = vmatmul.mubr.bf16.gmra.mrb[0].mxu0 %v4505
      %v5895 = vpop.f32.mrb[0].mxu0
      %v5896 = vadd.f32 %v5735, %v5895
      %v5897 = vpop.f32.mrb[0].mxu0
      %v5898 = vpop.f32.mrb[0].mxu0
      %v5899 = vadd.f32 %v5738, %v5898
      %v5900 = vpop.f32.mrb[0].mxu0
      %5901 = vmatprep.mubr.bf16.mxu0 0
      %5902 = vmatmul.mubr.bf16.gmra.mrb[0].mxu0 %v4514
      %v5903 = vpop.f32.mrb[0].mxu0
      %v5904 = vadd.f32 %v5743, %v5903
      %v5905 = vpop.f32.mrb[0].mxu0
      %v5906 = vpop.f32.mrb[0].mxu0
      %v5907 = vadd.f32 %v5746, %v5906
      %v5908 = vpop.f32.mrb[0].mxu0
      %5909 = vmatprep.mubr.bf16.mxu0 0
      %5910 = vmatmul.mubr.bf16.gmra.mrb[0].mxu0 %v4523
      %v5911 = vpop.f32.mrb[0].mxu0
      %v5912 = vadd.f32 %v5751, %v5911
      %v5913 = vpop.f32.mrb[0].mxu0
      %v5914 = vpop.f32.mrb[0].mxu0
      %v5915 = vadd.f32 %v5754, %v5914
      %v5916 = vpop.f32.mrb[0].mxu0
      %5917 = vmatprep.mubr.bf16.mxu0 0
      %5918 = vmatmul.mubr.bf16.gmra.mrb[0].mxu0 %v4532
      %v5919 = vpop.f32.mrb[0].mxu0
      %v5920 = vadd.f32 %v5759, %v5919
      %v5921 = vpop.f32.mrb[0].mxu0
      %v5922 = vpop.f32.mrb[0].mxu0
      %v5923 = vadd.f32 %v5762, %v5922
      %v5924 = vpop.f32.mrb[0].mxu0
      %5925 = vmatprep.mubr.bf16.mxu0 0
      %5926 = vmatmul.mubr.bf16.gmra.mrb[0].mxu0 %v4541
      %v5927 = vpop.f32.mrb[0].mxu0
      %v5928 = vadd.f32 %v5767, %v5927
      %v5929 = vpop.f32.mrb[0].mxu0
      %v5930 = vpop.f32.mrb[0].mxu0
      %v5931 = vadd.f32 %v5770, %v5930
      %v5932 = vpop.f32.mrb[0].mxu0
      %5933 = vmatprep.mubr.bf16.mxu0 0
      %5934 = vmatmul.mubr.bf16.gmra.mrb[0].mxu0 %v4550
      %v5935 = vpop.f32.mrb[0].mxu0
      %v5936 = vadd.f32 %v5775, %v5935
      %v5937 = vpop.f32.mrb[0].mxu0
      %v5938 = vpop.f32.mrb[0].mxu0
      %v5939 = vadd.f32 %v5778, %v5938
      %v5940 = vpop.f32.mrb[0].mxu0
      %5941 = vmatprep.mubr.bf16.mxu0 0
      %5942 = vmatmul.mubr.bf16.gmra.mrb[0].mxu0 %v4559
      %v5943 = vpop.f32.mrb[0].mxu0
      %v5944 = vadd.f32 %v5783, %v5943
      %v5945 = vpop.f32.mrb[0].mxu0
      %v5946 = vpop.f32.mrb[0].mxu0
      %v5947 = vadd.f32 %v5786, %v5946
      %v5948 = vpop.f32.mrb[0].mxu0
      %5949 = vmatprep.mubr.bf16.mxu0 0
      %5950 = vmatmul.mubr.bf16.gmra.mrb[0].mxu0 %v4568
      %v5951 = vpop.f32.mrb[0].mxu0
      %v5952 = vadd.f32 %v5791, %v5951
      %v5953 = vpop.f32.mrb[0].mxu0
      %v5954 = vpop.f32.mrb[0].mxu0
      %v5955 = vadd.f32 %v5794, %v5954
      %v5956 = vpop.f32.mrb[0].mxu0
      %5957 = vmatprep.mubr.bf16.mxu0 0
      %5958 = vmatmul.mubr.bf16.gmra.mrb[0].mxu0 %v4577
      %v5959 = vpop.f32.mrb[0].mxu0
      %v5960 = vadd.f32 %v5799, %v5959
      %v5961 = vpop.f32.mrb[0].mxu0
      %v5962 = vpop.f32.mrb[0].mxu0
      %v5963 = vadd.f32 %v5802, %v5962
      %v5964 = vpop.f32.mrb[0].mxu0
      %5965 = vdwg.mxu0
      %v5966 = vxor.u32 %v5840, 2147483648
      %v5967 = vxor.u32 %v5843, 2147483648
      %v5968 = vxor.u32 %v5848, 2147483648
      %v5969 = vxor.u32 %v5851, 2147483648
      %v5970 = vxor.u32 %v5856, 2147483648
      %v5971 = vxor.u32 %v5859, 2147483648
      %v5972 = vxor.u32 %v5864, 2147483648
      %v5973 = vxor.u32 %v5867, 2147483648
      %v5974 = vxor.u32 %v5872, 2147483648
      %v5975 = vxor.u32 %v5875, 2147483648
      %v5976 = vxor.u32 %v5880, 2147483648
      %v5977 = vxor.u32 %v5883, 2147483648
      %v5978 = vxor.u32 %v5888, 2147483648
      %v5979 = vxor.u32 %v5891, 2147483648
      %v5980 = vxor.u32 %v5896, 2147483648
      %v5981 = vxor.u32 %v5899, 2147483648
      %v5982 = vxor.u32 %v5904, 2147483648
      %v5983 = vxor.u32 %v5907, 2147483648
      %v5984 = vxor.u32 %v5912, 2147483648
      %v5985 = vxor.u32 %v5915, 2147483648
      %v5986 = vxor.u32 %v5920, 2147483648
      %v5987 = vxor.u32 %v5923, 2147483648
      %v5988 = vxor.u32 %v5928, 2147483648
      %v5989 = vxor.u32 %v5931, 2147483648
      %v5990 = vxor.u32 %v5936, 2147483648
      %v5991 = vxor.u32 %v5939, 2147483648
      %v5992 = vxor.u32 %v5944, 2147483648
      %v5993 = vxor.u32 %v5947, 2147483648
      %v5994 = vxor.u32 %v5952, 2147483648
      %v5995 = vxor.u32 %v5955, 2147483648
      %v5996 = vxor.u32 %v5960, 2147483648
      %v5997 = vxor.u32 %v5963, 2147483648
      %v5998 = vmul.f32 %v5966, 1.442695
      %v5999 = vpow.pop %v5998
      %v6000 = vmul.f32 %v5967, 1.442695
      %v6001 = vpow.pop %v6000
      %v6002 = vmul.f32 %v5968, 1.442695
      %v6003 = vpow.pop %v6002
      %v6004 = vmul.f32 %v5969, 1.442695
      %v6005 = vpow.pop %v6004
      %v6006 = vmul.f32 %v5970, 1.442695
      %v6007 = vpow.pop %v6006
      %v6008 = vmul.f32 %v5971, 1.442695
      %v6009 = vpow.pop %v6008
      %v6010 = vmul.f32 %v5972, 1.442695
      %v6011 = vpow.pop %v6010
      %v6012 = vmul.f32 %v5973, 1.442695
      %v6013 = vpow.pop %v6012
      %v6014 = vmul.f32 %v5974, 1.442695
      %v6015 = vpow.pop %v6014
      %v6016 = vmul.f32 %v5975, 1.442695
      %v6017 = vpow.pop %v6016
      %v6018 = vmul.f32 %v5976, 1.442695
      %v6019 = vpow.pop %v6018
      %v6020 = vmul.f32 %v5977, 1.442695
      %v6021 = vpow.pop %v6020
      %v6022 = vmul.f32 %v5978, 1.442695
      %v6023 = vpow.pop %v6022
      %v6024 = vmul.f32 %v5979, 1.442695
      %v6025 = vpow.pop %v6024
      %v6026 = vmul.f32 %v5980, 1.442695
      %v6027 = vpow.pop %v6026
      %v6028 = vmul.f32 %v5981, 1.442695
      %v6029 = vpow.pop %v6028
      %v6030 = vmul.f32 %v5982, 1.442695
      %v6031 = vpow.pop %v6030
      %v6032 = vmul.f32 %v5983, 1.442695
      %v6033 = vpow.pop %v6032
      %v6034 = vmul.f32 %v5984, 1.442695
      %v6035 = vpow.pop %v6034
      %v6036 = vmul.f32 %v5985, 1.442695
      %v6037 = vpow.pop %v6036
      %v6038 = vmul.f32 %v5986, 1.442695
      %v6039 = vpow.pop %v6038
      %v6040 = vmul.f32 %v5987, 1.442695
      %v6041 = vpow.pop %v6040
      %v6042 = vmul.f32 %v5988, 1.442695
      %v6043 = vpow.pop %v6042
      %v6044 = vmul.f32 %v5989, 1.442695
      %v6045 = vpow.pop %v6044
      %v6046 = vmul.f32 %v5990, 1.442695
      %v6047 = vpow.pop %v6046
      %v6048 = vmul.f32 %v5991, 1.442695
      %v6049 = vpow.pop %v6048
      %v6050 = vmul.f32 %v5992, 1.442695
      %v6051 = vpow.pop %v6050
      %v6052 = vmul.f32 %v5993, 1.442695
      %v6053 = vpow.pop %v6052
      %v6054 = vmul.f32 %v5994, 1.442695
      %v6055 = vpow.pop %v6054
      %v6056 = vmul.f32 %v5995, 1.442695
      %v6057 = vpow.pop %v6056
      %v6058 = vmul.f32 %v5996, 1.442695
      %v6059 = vpow.pop %v6058
      %v6060 = vmul.f32 %v5997, 1.442695
      %v6061 = vpow.pop %v6060
      %v6062 = vadd.f32 %v5999, 1.0
      %v6063 = vadd.f32 %v6001, 1.0
      %v6064 = vadd.f32 %v6003, 1.0
      %v6065 = vadd.f32 %v6005, 1.0
      %v6066 = vadd.f32 %v6007, 1.0
      %v6067 = vadd.f32 %v6009, 1.0
      %v6068 = vadd.f32 %v6011, 1.0
      %v6069 = vadd.f32 %v6013, 1.0
      %v6070 = vadd.f32 %v6015, 1.0
      %v6071 = vadd.f32 %v6017, 1.0
      %v6072 = vadd.f32 %v6019, 1.0
      %v6073 = vadd.f32 %v6021, 1.0
      %v6074 = vadd.f32 %v6023, 1.0
      %v6075 = vadd.f32 %v6025, 1.0
      %v6076 = vadd.f32 %v6027, 1.0
      %v6077 = vadd.f32 %v6029, 1.0
      %v6078 = vadd.f32 %v6031, 1.0
      %v6079 = vadd.f32 %v6033, 1.0
      %v6080 = vadd.f32 %v6035, 1.0
      %v6081 = vadd.f32 %v6037, 1.0
      %v6082 = vadd.f32 %v6039, 1.0
      %v6083 = vadd.f32 %v6041, 1.0
      %v6084 = vadd.f32 %v6043, 1.0
      %v6085 = vadd.f32 %v6045, 1.0
      %v6086 = vadd.f32 %v6047, 1.0
      %v6087 = vadd.f32 %v6049, 1.0
      %v6088 = vadd.f32 %v6051, 1.0
      %v6089 = vadd.f32 %v6053, 1.0
      %v6090 = vadd.f32 %v6055, 1.0
      %v6091 = vadd.f32 %v6057, 1.0
      %v6092 = vadd.f32 %v6059, 1.0
      %v6093 = vadd.f32 %v6061, 1.0
      %v6094 = vrcp.pop %v6062
      %v6095 = vmul.f32 1.0, %v6094
      %v6096 = vrcp.pop %v6063
      %v6097 = vmul.f32 1.0, %v6096
      %v6098 = vrcp.pop %v6064
      %v6099 = vmul.f32 1.0, %v6098
      %v6100 = vrcp.pop %v6065
      %v6101 = vmul.f32 1.0, %v6100
      %v6102 = vrcp.pop %v6066
      %v6103 = vmul.f32 1.0, %v6102
      %v6104 = vrcp.pop %v6067
      %v6105 = vmul.f32 1.0, %v6104
      %v6106 = vrcp.pop %v6068
      %v6107 = vmul.f32 1.0, %v6106
      %v6108 = vrcp.pop %v6069
      %v6109 = vmul.f32 1.0, %v6108
      %v6110 = vrcp.pop %v6070
      %v6111 = vmul.f32 1.0, %v6110
      %v6112 = vrcp.pop %v6071
      %v6113 = vmul.f32 1.0, %v6112
      %v6114 = vrcp.pop %v6072
      %v6115 = vmul.f32 1.0, %v6114
      %v6116 = vrcp.pop %v6073
      %v6117 = vmul.f32 1.0, %v6116
      %v6118 = vrcp.pop %v6074
      %v6119 = vmul.f32 1.0, %v6118
      %v6120 = vrcp.pop %v6075
      %v6121 = vmul.f32 1.0, %v6120
      %v6122 = vrcp.pop %v6076
      %v6123 = vmul.f32 1.0, %v6122
      %v6124 = vrcp.pop %v6077
      %v6125 = vmul.f32 1.0, %v6124
      %v6126 = vrcp.pop %v6078
      %v6127 = vmul.f32 1.0, %v6126
      %v6128 = vrcp.pop %v6079
      %v6129 = vmul.f32 1.0, %v6128
      %v6130 = vrcp.pop %v6080
      %v6131 = vmul.f32 1.0, %v6130
      %v6132 = vrcp.pop %v6081
      %v6133 = vmul.f32 1.0, %v6132
      %v6134 = vrcp.pop %v6082
      %v6135 = vmul.f32 1.0, %v6134
      %v6136 = vrcp.pop %v6083
      %v6137 = vmul.f32 1.0, %v6136
      %v6138 = vrcp.pop %v6084
      %v6139 = vmul.f32 1.0, %v6138
      %v6140 = vrcp.pop %v6085
      %v6141 = vmul.f32 1.0, %v6140
      %v6142 = vrcp.pop %v6086
      %v6143 = vmul.f32 1.0, %v6142
      %v6144 = vrcp.pop %v6087
      %v6145 = vmul.f32 1.0, %v6144
      %v6146 = vrcp.pop %v6088
      %v6147 = vmul.f32 1.0, %v6146
      %v6148 = vrcp.pop %v6089
      %v6149 = vmul.f32 1.0, %v6148
      %v6150 = vrcp.pop %v6090
      %v6151 = vmul.f32 1.0, %v6150
      %v6152 = vrcp.pop %v6091
      %v6153 = vmul.f32 1.0, %v6152
      %v6154 = vrcp.pop %v6092
      %v6155 = vmul.f32 1.0, %v6154
      %v6156 = vrcp.pop %v6093
      %v6157 = vmul.f32 1.0, %v6156
      %v6158 = vtanh.pop %v5840
      %v6159 = vtanh.pop %v5843
      %v6160 = vtanh.pop %v5848
      %v6161 = vtanh.pop %v5851
      %v6162 = vtanh.pop %v5856
      %v6163 = vtanh.pop %v5859
      %v6164 = vtanh.pop %v5864
      %v6165 = vtanh.pop %v5867
      %v6166 = vtanh.pop %v5872
      %v6167 = vtanh.pop %v5875
      %v6168 = vtanh.pop %v5880
      %v6169 = vtanh.pop %v5883
      %v6170 = vtanh.pop %v5888
      %v6171 = vtanh.pop %v5891
      %v6172 = vtanh.pop %v5896
      %v6173 = vtanh.pop %v5899
      %v6174 = vtanh.pop %v5904
      %v6175 = vtanh.pop %v5907
      %v6176 = vtanh.pop %v5912
      %v6177 = vtanh.pop %v5915
      %v6178 = vtanh.pop %v5920
      %v6179 = vtanh.pop %v5923
      %v6180 = vtanh.pop %v5928
      %v6181 = vtanh.pop %v5931
      %v6182 = vtanh.pop %v5936
      %v6183 = vtanh.pop %v5939
      %v6184 = vtanh.pop %v5944
      %v6185 = vtanh.pop %v5947
      %v6186 = vtanh.pop %v5952
      %v6187 = vtanh.pop %v5955
      %v6188 = vtanh.pop %v5960
      %v6189 = vtanh.pop %v5963
      %v6190 = vld [vmem:[%s295] sm:$0xff]
      %v6191 = vld [vmem:[%s295 + $0x8] sm:$0xff]
      %v6192 = vld [vmem:[%s295 + $0x10] sm:$0xff]
      %v6193 = vld [vmem:[%s295 + $0x18] sm:$0xff]
      %v6194 = vld [vmem:[%s295 + $0x20] sm:$0xff]
      %v6195 = vld [vmem:[%s295 + $0x28] sm:$0xff]
      %v6196 = vld [vmem:[%s295 + $0x30] sm:$0xff]
      %v6197 = vld [vmem:[%s295 + $0x38] sm:$0xff]
      %v6198 = vld [vmem:[%s295 + $0x40] sm:$0xff]
      %v6199 = vld [vmem:[%s295 + $0x48] sm:$0xff]
      %v6200 = vld [vmem:[%s295 + $0x50] sm:$0xff]
      %v6201 = vld [vmem:[%s295 + $0x58] sm:$0xff]
      %v6202 = vld [vmem:[%s295 + $0x60] sm:$0xff]
      %v6203 = vld [vmem:[%s295 + $0x68] sm:$0xff]
      %v6204 = vld [vmem:[%s295 + $0x70] sm:$0xff]
      %v6205 = vld [vmem:[%s295 + $0x78] sm:$0xff]
      %v6206 = vld [vmem:[%s295 + $0x80] sm:$0xff]
      %v6207 = vld [vmem:[%s295 + $0x88] sm:$0xff]
      %v6208 = vld [vmem:[%s295 + $0x90] sm:$0xff]
      %v6209 = vld [vmem:[%s295 + $0x98] sm:$0xff]
      %v6210 = vld [vmem:[%s295 + $0xa0] sm:$0xff]
      %v6211 = vld [vmem:[%s295 + $0xa8] sm:$0xff]
      %v6212 = vld [vmem:[%s295 + $0xb0] sm:$0xff]
      %v6213 = vld [vmem:[%s295 + $0xb8] sm:$0xff]
      %v6214 = vld [vmem:[%s295 + $0xc0] sm:$0xff]
      %v6215 = vld [vmem:[%s295 + $0xc8] sm:$0xff]
      %v6216 = vld [vmem:[%s295 + $0xd0] sm:$0xff]
      %v6217 = vld [vmem:[%s295 + $0xd8] sm:$0xff]
      %v6218 = vld [vmem:[%s295 + $0xe0] sm:$0xff]
      %v6219 = vld [vmem:[%s295 + $0xe8] sm:$0xff]
      %v6220 = vld [vmem:[%s295 + $0xf0] sm:$0xff]
      %v6221 = vld [vmem:[%s295 + $0xf8] sm:$0xff]
      %6254 = vrot.lane.b32.xlu0 %v6190, 32
      %v6255 = vpop.permute.xlu0 %6254
      %6256 = vrot.lane.b32.xlu0 %v6191, 32
      %v6257 = vpop.permute.xlu0 %6256
      %6258 = vrot.lane.b32.xlu0 %v6192, 32
      %v6259 = vpop.permute.xlu0 %6258
      %6260 = vrot.lane.b32.xlu0 %v6193, 32
      %v6261 = vpop.permute.xlu0 %6260
      %6262 = vrot.lane.b32.xlu0 %v6194, 32
      %v6263 = vpop.permute.xlu0 %6262
      %6264 = vrot.lane.b32.xlu0 %v6195, 32
      %v6265 = vpop.permute.xlu0 %6264
      %6266 = vrot.lane.b32.xlu0 %v6196, 32
      %v6267 = vpop.permute.xlu0 %6266
      %6268 = vrot.lane.b32.xlu0 %v6197, 32
      %v6269 = vpop.permute.xlu0 %6268
      %6270 = vrot.lane.b32.xlu0 %v6198, 32
      %v6271 = vpop.permute.xlu0 %6270
      %6272 = vrot.lane.b32.xlu0 %v6199, 32
      %v6273 = vpop.permute.xlu0 %6272
      %6274 = vrot.lane.b32.xlu0 %v6200, 32
      %v6275 = vpop.permute.xlu0 %6274
      %6276 = vrot.lane.b32.xlu0 %v6201, 32
      %v6277 = vpop.permute.xlu0 %6276
      %6278 = vrot.lane.b32.xlu0 %v6202, 32
      %v6279 = vpop.permute.xlu0 %6278
      %6280 = vrot.lane.b32.xlu0 %v6203, 32
      %v6281 = vpop.permute.xlu0 %6280
      %6282 = vrot.lane.b32.xlu0 %v6204, 32
      %v6283 = vpop.permute.xlu0 %6282
      %6284 = vrot.lane.b32.xlu0 %v6205, 32
      %v6285 = vpop.permute.xlu0 %6284
      %6286 = vrot.lane.b32.xlu0 %v6206, 32
      %v6287 = vpop.permute.xlu0 %6286
      %6288 = vrot.lane.b32.xlu0 %v6207, 32
      %v6289 = vpop.permute.xlu0 %6288
      %6290 = vrot.lane.b32.xlu0 %v6208, 32
      %v6291 = vpop.permute.xlu0 %6290
      %6292 = vrot.lane.b32.xlu0 %v6209, 32
      %v6293 = vpop.permute.xlu0 %6292
      %6294 = vrot.lane.b32.xlu0 %v6210, 32
      %v6295 = vpop.permute.xlu0 %6294
      %6296 = vrot.lane.b32.xlu0 %v6211, 32
      %v6297 = vpop.permute.xlu0 %6296
      %6298 = vrot.lane.b32.xlu0 %v6212, 32
      %v6299 = vpop.permute.xlu0 %6298
      %6300 = vrot.lane.b32.xlu0 %v6213, 32
      %v6301 = vpop.permute.xlu0 %6300
      %6302 = vrot.lane.b32.xlu0 %v6214, 32
      %v6303 = vpop.permute.xlu0 %6302
      %6304 = vrot.lane.b32.xlu0 %v6215, 32
      %v6305 = vpop.permute.xlu0 %6304
      %6306 = vrot.lane.b32.xlu0 %v6216, 32
      %v6307 = vpop.permute.xlu0 %6306
      %6308 = vrot.lane.b32.xlu0 %v6217, 32
      %v6309 = vpop.permute.xlu0 %6308
      %6310 = vrot.lane.b32.xlu0 %v6218, 32
      %v6311 = vpop.permute.xlu0 %6310
      %6312 = vrot.lane.b32.xlu0 %v6219, 32
      %v6313 = vpop.permute.xlu0 %6312
      %6314 = vrot.lane.b32.xlu0 %v6220, 32
      %v6315 = vpop.permute.xlu0 %6314
      %6316 = vrot.lane.b32.xlu0 %v6221, 32
      %v6317 = vpop.permute.xlu0 %6316
      %v6350 = vmul.f32 %v6095, %v6255
      %v6351 = vmul.f32 %v6097, %v6257
      %v6352 = vmul.f32 %v6099, %v6259
      %v6353 = vmul.f32 %v6101, %v6261
      %v6354 = vmul.f32 %v6103, %v6263
      %v6355 = vmul.f32 %v6105, %v6265
      %v6356 = vmul.f32 %v6107, %v6267
      %v6357 = vmul.f32 %v6109, %v6269
      %v6358 = vmul.f32 %v6111, %v6271
      %v6359 = vmul.f32 %v6113, %v6273
      %v6360 = vmul.f32 %v6115, %v6275
      %v6361 = vmul.f32 %v6117, %v6277
      %v6362 = vmul.f32 %v6119, %v6279
      %v6363 = vmul.f32 %v6121, %v6281
      %v6364 = vmul.f32 %v6123, %v6283
      %v6365 = vmul.f32 %v6125, %v6285
      %v6366 = vmul.f32 %v6127, %v6287
      %v6367 = vmul.f32 %v6129, %v6289
      %v6368 = vmul.f32 %v6131, %v6291
      %v6369 = vmul.f32 %v6133, %v6293
      %v6370 = vmul.f32 %v6135, %v6295
      %v6371 = vmul.f32 %v6137, %v6297
      %v6372 = vmul.f32 %v6139, %v6299
      %v6373 = vmul.f32 %v6141, %v6301
      %v6374 = vmul.f32 %v6143, %v6303
      %v6375 = vmul.f32 %v6145, %v6305
      %v6376 = vmul.f32 %v6147, %v6307
      %v6377 = vmul.f32 %v6149, %v6309
      %v6378 = vmul.f32 %v6151, %v6311
      %v6379 = vmul.f32 %v6153, %v6313
      %v6380 = vmul.f32 %v6155, %v6315
      %v6381 = vmul.f32 %v6157, %v6317
      %6414 = vrot.lane.b32.xlu0 %v6158, 32
      %v6415 = vpop.permute.xlu0 %6414
      %6416 = vrot.lane.b32.xlu0 %v6159, 32
      %v6417 = vpop.permute.xlu0 %6416
      %6418 = vrot.lane.b32.xlu0 %v6160, 32
      %v6419 = vpop.permute.xlu0 %6418
      %6420 = vrot.lane.b32.xlu0 %v6161, 32
      %v6421 = vpop.permute.xlu0 %6420
      %6422 = vrot.lane.b32.xlu0 %v6162, 32
      %v6423 = vpop.permute.xlu0 %6422
      %6424 = vrot.lane.b32.xlu0 %v6163, 32
      %v6425 = vpop.permute.xlu0 %6424
      %6426 = vrot.lane.b32.xlu0 %v6164, 32
      %v6427 = vpop.permute.xlu0 %6426
      %6428 = vrot.lane.b32.xlu0 %v6165, 32
      %v6429 = vpop.permute.xlu0 %6428
      %6430 = vrot.lane.b32.xlu0 %v6166, 32
      %v6431 = vpop.permute.xlu0 %6430
      %6432 = vrot.lane.b32.xlu0 %v6167, 32
      %v6433 = vpop.permute.xlu0 %6432
      %6434 = vrot.lane.b32.xlu0 %v6168, 32
      %v6435 = vpop.permute.xlu0 %6434
      %6436 = vrot.lane.b32.xlu0 %v6169, 32
      %v6437 = vpop.permute.xlu0 %6436
      %6438 = vrot.lane.b32.xlu0 %v6170, 32
      %v6439 = vpop.permute.xlu0 %6438
      %6440 = vrot.lane.b32.xlu0 %v6171, 32
      %v6441 = vpop.permute.xlu0 %6440
      %6442 = vrot.lane.b32.xlu0 %v6172, 32
      %v6443 = vpop.permute.xlu0 %6442
      %6444 = vrot.lane.b32.xlu0 %v6173, 32
      %v6445 = vpop.permute.xlu0 %6444
      %6446 = vrot.lane.b32.xlu0 %v6174, 32
      %v6447 = vpop.permute.xlu0 %6446
      %6448 = vrot.lane.b32.xlu0 %v6175, 32
      %v6449 = vpop.permute.xlu0 %6448
      %6450 = vrot.lane.b32.xlu0 %v6176, 32
      %v6451 = vpop.permute.xlu0 %6450
      %6452 = vrot.lane.b32.xlu0 %v6177, 32
      %v6453 = vpop.permute.xlu0 %6452
      %6454 = vrot.lane.b32.xlu0 %v6178, 32
      %v6455 = vpop.permute.xlu0 %6454
      %6456 = vrot.lane.b32.xlu0 %v6179, 32
      %v6457 = vpop.permute.xlu0 %6456
      %6458 = vrot.lane.b32.xlu0 %v6180, 32
      %v6459 = vpop.permute.xlu0 %6458
      %6460 = vrot.lane.b32.xlu0 %v6181, 32
      %v6461 = vpop.permute.xlu0 %6460
      %6462 = vrot.lane.b32.xlu0 %v6182, 32
      %v6463 = vpop.permute.xlu0 %6462
      %6464 = vrot.lane.b32.xlu0 %v6183, 32
      %v6465 = vpop.permute.xlu0 %6464
      %6466 = vrot.lane.b32.xlu0 %v6184, 32
      %v6467 = vpop.permute.xlu0 %6466
      %6468 = vrot.lane.b32.xlu0 %v6185, 32
      %v6469 = vpop.permute.xlu0 %6468
      %6470 = vrot.lane.b32.xlu0 %v6186, 32
      %v6471 = vpop.permute.xlu0 %6470
      %6472 = vrot.lane.b32.xlu0 %v6187, 32
      %v6473 = vpop.permute.xlu0 %6472
      %6474 = vrot.lane.b32.xlu0 %v6188, 32
      %v6475 = vpop.permute.xlu0 %6474
      %6476 = vrot.lane.b32.xlu0 %v6189, 32
      %v6477 = vpop.permute.xlu0 %6476
      %v6510 = vmul.f32 %v6095, %v6415
      %v6511 = vmul.f32 %v6097, %v6417
      %v6512 = vmul.f32 %v6099, %v6419
      %v6513 = vmul.f32 %v6101, %v6421
      %v6514 = vmul.f32 %v6103, %v6423
      %v6515 = vmul.f32 %v6105, %v6425
      %v6516 = vmul.f32 %v6107, %v6427
      %v6517 = vmul.f32 %v6109, %v6429
      %v6518 = vmul.f32 %v6111, %v6431
      %v6519 = vmul.f32 %v6113, %v6433
      %v6520 = vmul.f32 %v6115, %v6435
      %v6521 = vmul.f32 %v6117, %v6437
      %v6522 = vmul.f32 %v6119, %v6439
      %v6523 = vmul.f32 %v6121, %v6441
      %v6524 = vmul.f32 %v6123, %v6443
      %v6525 = vmul.f32 %v6125, %v6445
      %v6526 = vmul.f32 %v6127, %v6447
      %v6527 = vmul.f32 %v6129, %v6449
      %v6528 = vmul.f32 %v6131, %v6451
      %v6529 = vmul.f32 %v6133, %v6453
      %v6530 = vmul.f32 %v6135, %v6455
      %v6531 = vmul.f32 %v6137, %v6457
      %v6532 = vmul.f32 %v6139, %v6459
      %v6533 = vmul.f32 %v6141, %v6461
      %v6534 = vmul.f32 %v6143, %v6463
      %v6535 = vmul.f32 %v6145, %v6465
      %v6536 = vmul.f32 %v6147, %v6467
      %v6537 = vmul.f32 %v6149, %v6469
      %v6538 = vmul.f32 %v6151, %v6471
      %v6539 = vmul.f32 %v6153, %v6473
      %v6540 = vmul.f32 %v6155, %v6475
      %v6541 = vmul.f32 %v6157, %v6477
      %6574 = vrot.lane.b32.xlu0 %v6510, 32
      %v6575 = vpop.permute.xlu0 %6574
      %6576 = vrot.lane.b32.xlu0 %v6511, 32
      %v6577 = vpop.permute.xlu0 %6576
      %6578 = vrot.lane.b32.xlu0 %v6512, 32
      %v6579 = vpop.permute.xlu0 %6578
      %6580 = vrot.lane.b32.xlu0 %v6513, 32
      %v6581 = vpop.permute.xlu0 %6580
      %6582 = vrot.lane.b32.xlu0 %v6514, 32
      %v6583 = vpop.permute.xlu0 %6582
      %6584 = vrot.lane.b32.xlu0 %v6515, 32
      %v6585 = vpop.permute.xlu0 %6584
      %6586 = vrot.lane.b32.xlu0 %v6516, 32
      %v6587 = vpop.permute.xlu0 %6586
      %6588 = vrot.lane.b32.xlu0 %v6517, 32
      %v6589 = vpop.permute.xlu0 %6588
      %6590 = vrot.lane.b32.xlu0 %v6518, 32
      %v6591 = vpop.permute.xlu0 %6590
      %6592 = vrot.lane.b32.xlu0 %v6519, 32
      %v6593 = vpop.permute.xlu0 %6592
      %6594 = vrot.lane.b32.xlu0 %v6520, 32
      %v6595 = vpop.permute.xlu0 %6594
      %6596 = vrot.lane.b32.xlu0 %v6521, 32
      %v6597 = vpop.permute.xlu0 %6596
      %6598 = vrot.lane.b32.xlu0 %v6522, 32
      %v6599 = vpop.permute.xlu0 %6598
      %6600 = vrot.lane.b32.xlu0 %v6523, 32
      %v6601 = vpop.permute.xlu0 %6600
      %6602 = vrot.lane.b32.xlu0 %v6524, 32
      %v6603 = vpop.permute.xlu0 %6602
      %6604 = vrot.lane.b32.xlu0 %v6525, 32
      %v6605 = vpop.permute.xlu0 %6604
      %6606 = vrot.lane.b32.xlu0 %v6526, 32
      %v6607 = vpop.permute.xlu0 %6606
      %6608 = vrot.lane.b32.xlu0 %v6527, 32
      %v6609 = vpop.permute.xlu0 %6608
      %6610 = vrot.lane.b32.xlu0 %v6528, 32
      %v6611 = vpop.permute.xlu0 %6610
      %6612 = vrot.lane.b32.xlu0 %v6529, 32
      %v6613 = vpop.permute.xlu0 %6612
      %6614 = vrot.lane.b32.xlu0 %v6530, 32
      %v6615 = vpop.permute.xlu0 %6614
      %6616 = vrot.lane.b32.xlu0 %v6531, 32
      %v6617 = vpop.permute.xlu0 %6616
      %6618 = vrot.lane.b32.xlu0 %v6532, 32
      %v6619 = vpop.permute.xlu0 %6618
      %6620 = vrot.lane.b32.xlu0 %v6533, 32
      %v6621 = vpop.permute.xlu0 %6620
      %6622 = vrot.lane.b32.xlu0 %v6534, 32
      %v6623 = vpop.permute.xlu0 %6622
      %6624 = vrot.lane.b32.xlu0 %v6535, 32
      %v6625 = vpop.permute.xlu0 %6624
      %6626 = vrot.lane.b32.xlu0 %v6536, 32
      %v6627 = vpop.permute.xlu0 %6626
      %6628 = vrot.lane.b32.xlu0 %v6537, 32
      %v6629 = vpop.permute.xlu0 %6628
      %6630 = vrot.lane.b32.xlu0 %v6538, 32
      %v6631 = vpop.permute.xlu0 %6630
      %6632 = vrot.lane.b32.xlu0 %v6539, 32
      %v6633 = vpop.permute.xlu0 %6632
      %6634 = vrot.lane.b32.xlu0 %v6540, 32
      %v6635 = vpop.permute.xlu0 %6634
      %6636 = vrot.lane.b32.xlu0 %v6541, 32
      %v6637 = vpop.permute.xlu0 %6636
      %v6670 = vadd.f32 %v6350, %v6575
      %v6671 = vadd.f32 %v6351, %v6577
      %v6672 = vadd.f32 %v6352, %v6579
      %v6673 = vadd.f32 %v6353, %v6581
      %v6674 = vadd.f32 %v6354, %v6583
      %v6675 = vadd.f32 %v6355, %v6585
      %v6676 = vadd.f32 %v6356, %v6587
      %v6677 = vadd.f32 %v6357, %v6589
      %v6678 = vadd.f32 %v6358, %v6591
      %v6679 = vadd.f32 %v6359, %v6593
      %v6680 = vadd.f32 %v6360, %v6595
      %v6681 = vadd.f32 %v6361, %v6597
      %v6682 = vadd.f32 %v6362, %v6599
      %v6683 = vadd.f32 %v6363, %v6601
      %v6684 = vadd.f32 %v6364, %v6603
      %v6685 = vadd.f32 %v6365, %v6605
      %v6686 = vadd.f32 %v6366, %v6607
      %v6687 = vadd.f32 %v6367, %v6609
      %v6688 = vadd.f32 %v6368, %v6611
      %v6689 = vadd.f32 %v6369, %v6613
      %v6690 = vadd.f32 %v6370, %v6615
      %v6691 = vadd.f32 %v6371, %v6617
      %v6692 = vadd.f32 %v6372, %v6619
      %v6693 = vadd.f32 %v6373, %v6621
      %v6694 = vadd.f32 %v6374, %v6623
      %v6695 = vadd.f32 %v6375, %v6625
      %v6696 = vadd.f32 %v6376, %v6627
      %v6697 = vadd.f32 %v6377, %v6629
      %v6698 = vadd.f32 %v6378, %v6631
      %v6699 = vadd.f32 %v6379, %v6633
      %v6700 = vadd.f32 %v6380, %v6635
      %v6701 = vadd.f32 %v6381, %v6637
      %v6702 = vtanh.pop %v6670
      %v6703 = vtanh.pop %v6671
      %v6704 = vtanh.pop %v6672
      %v6705 = vtanh.pop %v6673
      %v6706 = vtanh.pop %v6674
      %v6707 = vtanh.pop %v6675
      %v6708 = vtanh.pop %v6676
      %v6709 = vtanh.pop %v6677
      %v6710 = vtanh.pop %v6678
      %v6711 = vtanh.pop %v6679
      %v6712 = vtanh.pop %v6680
      %v6713 = vtanh.pop %v6681
      %v6714 = vtanh.pop %v6682
      %v6715 = vtanh.pop %v6683
      %v6716 = vtanh.pop %v6684
      %v6717 = vtanh.pop %v6685
      %v6718 = vtanh.pop %v6686
      %v6719 = vtanh.pop %v6687
      %v6720 = vtanh.pop %v6688
      %v6721 = vtanh.pop %v6689
      %v6722 = vtanh.pop %v6690
      %v6723 = vtanh.pop %v6691
      %v6724 = vtanh.pop %v6692
      %v6725 = vtanh.pop %v6693
      %v6726 = vtanh.pop %v6694
      %v6727 = vtanh.pop %v6695
      %v6728 = vtanh.pop %v6696
      %v6729 = vtanh.pop %v6697
      %v6730 = vtanh.pop %v6698
      %v6731 = vtanh.pop %v6699
      %v6732 = vtanh.pop %v6700
      %v6733 = vtanh.pop %v6701
      %6766 = vrot.lane.b32.xlu0 %v6702, 32
      %v6767 = vpop.permute.xlu0 %6766
      %6768 = vrot.lane.b32.xlu0 %v6703, 32
      %v6769 = vpop.permute.xlu0 %6768
      %6770 = vrot.lane.b32.xlu0 %v6704, 32
      %v6771 = vpop.permute.xlu0 %6770
      %6772 = vrot.lane.b32.xlu0 %v6705, 32
      %v6773 = vpop.permute.xlu0 %6772
      %6774 = vrot.lane.b32.xlu0 %v6706, 32
      %v6775 = vpop.permute.xlu0 %6774
      %6776 = vrot.lane.b32.xlu0 %v6707, 32
      %v6777 = vpop.permute.xlu0 %6776
      %6778 = vrot.lane.b32.xlu0 %v6708, 32
      %v6779 = vpop.permute.xlu0 %6778
      %6780 = vrot.lane.b32.xlu0 %v6709, 32
      %v6781 = vpop.permute.xlu0 %6780
      %6782 = vrot.lane.b32.xlu0 %v6710, 32
      %v6783 = vpop.permute.xlu0 %6782
      %6784 = vrot.lane.b32.xlu0 %v6711, 32
      %v6785 = vpop.permute.xlu0 %6784
      %6786 = vrot.lane.b32.xlu0 %v6712, 32
      %v6787 = vpop.permute.xlu0 %6786
      %6788 = vrot.lane.b32.xlu0 %v6713, 32
      %v6789 = vpop.permute.xlu0 %6788
      %6790 = vrot.lane.b32.xlu0 %v6714, 32
      %v6791 = vpop.permute.xlu0 %6790
      %6792 = vrot.lane.b32.xlu0 %v6715, 32
      %v6793 = vpop.permute.xlu0 %6792
      %6794 = vrot.lane.b32.xlu0 %v6716, 32
      %v6795 = vpop.permute.xlu0 %6794
      %6796 = vrot.lane.b32.xlu0 %v6717, 32
      %v6797 = vpop.permute.xlu0 %6796
      %6798 = vrot.lane.b32.xlu0 %v6718, 32
      %v6799 = vpop.permute.xlu0 %6798
      %6800 = vrot.lane.b32.xlu0 %v6719, 32
      %v6801 = vpop.permute.xlu0 %6800
      %6802 = vrot.lane.b32.xlu0 %v6720, 32
      %v6803 = vpop.permute.xlu0 %6802
      %6804 = vrot.lane.b32.xlu0 %v6721, 32
      %v6805 = vpop.permute.xlu0 %6804
      %6806 = vrot.lane.b32.xlu0 %v6722, 32
      %v6807 = vpop.permute.xlu0 %6806
      %6808 = vrot.lane.b32.xlu0 %v6723, 32
      %v6809 = vpop.permute.xlu0 %6808
      %6810 = vrot.lane.b32.xlu0 %v6724, 32
      %v6811 = vpop.permute.xlu0 %6810
      %6812 = vrot.lane.b32.xlu0 %v6725, 32
      %v6813 = vpop.permute.xlu0 %6812
      %6814 = vrot.lane.b32.xlu0 %v6726, 32
      %v6815 = vpop.permute.xlu0 %6814
      %6816 = vrot.lane.b32.xlu0 %v6727, 32
      %v6817 = vpop.permute.xlu0 %6816
      %6818 = vrot.lane.b32.xlu0 %v6728, 32
      %v6819 = vpop.permute.xlu0 %6818
      %6820 = vrot.lane.b32.xlu0 %v6729, 32
      %v6821 = vpop.permute.xlu0 %6820
      %6822 = vrot.lane.b32.xlu0 %v6730, 32
      %v6823 = vpop.permute.xlu0 %6822
      %6824 = vrot.lane.b32.xlu0 %v6731, 32
      %v6825 = vpop.permute.xlu0 %6824
      %6826 = vrot.lane.b32.xlu0 %v6732, 32
      %v6827 = vpop.permute.xlu0 %6826
      %6828 = vrot.lane.b32.xlu0 %v6733, 32
      %v6829 = vpop.permute.xlu0 %6828
      %v6862 = vmul.f32 %v6095, %v6767
      %v6863 = vmul.f32 %v6097, %v6769
      %v6864 = vmul.f32 %v6099, %v6771
      %v6865 = vmul.f32 %v6101, %v6773
      %v6866 = vmul.f32 %v6103, %v6775
      %v6867 = vmul.f32 %v6105, %v6777
      %v6868 = vmul.f32 %v6107, %v6779
      %v6869 = vmul.f32 %v6109, %v6781
      %v6870 = vmul.f32 %v6111, %v6783
      %v6871 = vmul.f32 %v6113, %v6785
      %v6872 = vmul.f32 %v6115, %v6787
      %v6873 = vmul.f32 %v6117, %v6789
      %v6874 = vmul.f32 %v6119, %v6791
      %v6875 = vmul.f32 %v6121, %v6793
      %v6876 = vmul.f32 %v6123, %v6795
      %v6877 = vmul.f32 %v6125, %v6797
      %v6878 = vmul.f32 %v6127, %v6799
      %v6879 = vmul.f32 %v6129, %v6801
      %v6880 = vmul.f32 %v6131, %v6803
      %v6881 = vmul.f32 %v6133, %v6805
      %v6882 = vmul.f32 %v6135, %v6807
      %v6883 = vmul.f32 %v6137, %v6809
      %v6884 = vmul.f32 %v6139, %v6811
      %v6885 = vmul.f32 %v6141, %v6813
      %v6886 = vmul.f32 %v6143, %v6815
      %v6887 = vmul.f32 %v6145, %v6817
      %v6888 = vmul.f32 %v6147, %v6819
      %v6889 = vmul.f32 %v6149, %v6821
      %v6890 = vmul.f32 %v6151, %v6823
      %v6891 = vmul.f32 %v6153, %v6825
      %v6892 = vmul.f32 %v6155, %v6827
      %v6893 = vmul.f32 %v6157, %v6829
      %6926 = vrot.lane.b32.xlu0 %v6862, 64
      %v6927 = vpop.permute.xlu0 %6926
      %6928 = vrot.lane.b32.xlu0 %v6863, 64
      %v6929 = vpop.permute.xlu0 %6928
      %6930 = vrot.lane.b32.xlu0 %v6864, 64
      %v6931 = vpop.permute.xlu0 %6930
      %6932 = vrot.lane.b32.xlu0 %v6865, 64
      %v6933 = vpop.permute.xlu0 %6932
      %6934 = vrot.lane.b32.xlu0 %v6866, 64
      %v6935 = vpop.permute.xlu0 %6934
      %6936 = vrot.lane.b32.xlu0 %v6867, 64
      %v6937 = vpop.permute.xlu0 %6936
      %6938 = vrot.lane.b32.xlu0 %v6868, 64
      %v6939 = vpop.permute.xlu0 %6938
      %6940 = vrot.lane.b32.xlu0 %v6869, 64
      %v6941 = vpop.permute.xlu0 %6940
      %6942 = vrot.lane.b32.xlu0 %v6870, 64
      %v6943 = vpop.permute.xlu0 %6942
      %6944 = vrot.lane.b32.xlu0 %v6871, 64
      %v6945 = vpop.permute.xlu0 %6944
      %6946 = vrot.lane.b32.xlu0 %v6872, 64
      %v6947 = vpop.permute.xlu0 %6946
      %6948 = vrot.lane.b32.xlu0 %v6873, 64
      %v6949 = vpop.permute.xlu0 %6948
      %6950 = vrot.lane.b32.xlu0 %v6874, 64
      %v6951 = vpop.permute.xlu0 %6950
      %6952 = vrot.lane.b32.xlu0 %v6875, 64
      %v6953 = vpop.permute.xlu0 %6952
      %6954 = vrot.lane.b32.xlu0 %v6876, 64
      %v6955 = vpop.permute.xlu0 %6954
      %6956 = vrot.lane.b32.xlu0 %v6877, 64
      %v6957 = vpop.permute.xlu0 %6956
      %6958 = vrot.lane.b32.xlu0 %v6878, 64
      %v6959 = vpop.permute.xlu0 %6958
      %6960 = vrot.lane.b32.xlu0 %v6879, 64
      %v6961 = vpop.permute.xlu0 %6960
      %6962 = vrot.lane.b32.xlu0 %v6880, 64
      %v6963 = vpop.permute.xlu0 %6962
      %6964 = vrot.lane.b32.xlu0 %v6881, 64
      %v6965 = vpop.permute.xlu0 %6964
      %6966 = vrot.lane.b32.xlu0 %v6882, 64
      %v6967 = vpop.permute.xlu0 %6966
      %6968 = vrot.lane.b32.xlu0 %v6883, 64
      %v6969 = vpop.permute.xlu0 %6968
      %6970 = vrot.lane.b32.xlu0 %v6884, 64
      %v6971 = vpop.permute.xlu0 %6970
      %6972 = vrot.lane.b32.xlu0 %v6885, 64
      %v6973 = vpop.permute.xlu0 %6972
      %6974 = vrot.lane.b32.xlu0 %v6886, 64
      %v6975 = vpop.permute.xlu0 %6974
      %6976 = vrot.lane.b32.xlu0 %v6887, 64
      %v6977 = vpop.permute.xlu0 %6976
      %6978 = vrot.lane.b32.xlu0 %v6888, 64
      %v6979 = vpop.permute.xlu0 %6978
      %6980 = vrot.lane.b32.xlu0 %v6889, 64
      %v6981 = vpop.permute.xlu0 %6980
      %6982 = vrot.lane.b32.xlu0 %v6890, 64
      %v6983 = vpop.permute.xlu0 %6982
      %6984 = vrot.lane.b32.xlu0 %v6891, 64
      %v6985 = vpop.permute.xlu0 %6984
      %6986 = vrot.lane.b32.xlu0 %v6892, 64
      %v6987 = vpop.permute.xlu0 %6986
      %6988 = vrot.lane.b32.xlu0 %v6893, 64
      %v6989 = vpop.permute.xlu0 %6988
      %vm7022 = vcmask 261120
      %7023 = vst.msk [vmem:[%s301] sm:$0xff] %vm7022, %v6927
      %7024 = vst.msk [vmem:[%s301 + $0x8] sm:$0xff] %vm7022, %v6929
      %7025 = vst.msk [vmem:[%s301 + $0x10] sm:$0xff] %vm7022, %v6931
      %7026 = vst.msk [vmem:[%s301 + $0x18] sm:$0xff] %vm7022, %v6933
      %7027 = vst.msk [vmem:[%s301 + $0x20] sm:$0xff] %vm7022, %v6935
      %7028 = vst.msk [vmem:[%s301 + $0x28] sm:$0xff] %vm7022, %v6937
      %7029 = vst.msk [vmem:[%s301 + $0x30] sm:$0xff] %vm7022, %v6939
      %7030 = vst.msk [vmem:[%s301 + $0x38] sm:$0xff] %vm7022, %v6941
      %7031 = vst.msk [vmem:[%s301 + $0x40] sm:$0xff] %vm7022, %v6943
      %7032 = vst.msk [vmem:[%s301 + $0x48] sm:$0xff] %vm7022, %v6945
      %7033 = vst.msk [vmem:[%s301 + $0x50] sm:$0xff] %vm7022, %v6947
      %7034 = vst.msk [vmem:[%s301 + $0x58] sm:$0xff] %vm7022, %v6949
      %7035 = vst.msk [vmem:[%s301 + $0x60] sm:$0xff] %vm7022, %v6951
      %7036 = vst.msk [vmem:[%s301 + $0x68] sm:$0xff] %vm7022, %v6953
      %7037 = vst.msk [vmem:[%s301 + $0x70] sm:$0xff] %vm7022, %v6955
      %7038 = vst.msk [vmem:[%s301 + $0x78] sm:$0xff] %vm7022, %v6957
      %7039 = vst.msk [vmem:[%s301 + $0x80] sm:$0xff] %vm7022, %v6959
      %7040 = vst.msk [vmem:[%s301 + $0x88] sm:$0xff] %vm7022, %v6961
      %7041 = vst.msk [vmem:[%s301 + $0x90] sm:$0xff] %vm7022, %v6963
      %7042 = vst.msk [vmem:[%s301 + $0x98] sm:$0xff] %vm7022, %v6965
      %7043 = vst.msk [vmem:[%s301 + $0xa0] sm:$0xff] %vm7022, %v6967
      %7044 = vst.msk [vmem:[%s301 + $0xa8] sm:$0xff] %vm7022, %v6969
      %7045 = vst.msk [vmem:[%s301 + $0xb0] sm:$0xff] %vm7022, %v6971
      %7046 = vst.msk [vmem:[%s301 + $0xb8] sm:$0xff] %vm7022, %v6973
      %7047 = vst.msk [vmem:[%s301 + $0xc0] sm:$0xff] %vm7022, %v6975
      %7048 = vst.msk [vmem:[%s301 + $0xc8] sm:$0xff] %vm7022, %v6977
      %7049 = vst.msk [vmem:[%s301 + $0xd0] sm:$0xff] %vm7022, %v6979
      %7050 = vst.msk [vmem:[%s301 + $0xd8] sm:$0xff] %vm7022, %v6981
      %7051 = vst.msk [vmem:[%s301 + $0xe0] sm:$0xff] %vm7022, %v6983
      %7052 = vst.msk [vmem:[%s301 + $0xe8] sm:$0xff] %vm7022, %v6985
      %7053 = vst.msk [vmem:[%s301 + $0xf0] sm:$0xff] %vm7022, %v6987
      %7054 = vst.msk [vmem:[%s301 + $0xf8] sm:$0xff] %vm7022, %v6989
      %7087 = vrot.lane.b32.xlu0 %v6670, 96
      %v7088 = vpop.permute.xlu0 %7087
      %7089 = vrot.lane.b32.xlu0 %v6671, 96
      %v7090 = vpop.permute.xlu0 %7089
      %7091 = vrot.lane.b32.xlu0 %v6672, 96
      %v7092 = vpop.permute.xlu0 %7091
      %7093 = vrot.lane.b32.xlu0 %v6673, 96
      %v7094 = vpop.permute.xlu0 %7093
      %7095 = vrot.lane.b32.xlu0 %v6674, 96
      %v7096 = vpop.permute.xlu0 %7095
      %7097 = vrot.lane.b32.xlu0 %v6675, 96
      %v7098 = vpop.permute.xlu0 %7097
      %7099 = vrot.lane.b32.xlu0 %v6676, 96
      %v7100 = vpop.permute.xlu0 %7099
      %7101 = vrot.lane.b32.xlu0 %v6677, 96
      %v7102 = vpop.permute.xlu0 %7101
      %7103 = vrot.lane.b32.xlu0 %v6678, 96
      %v7104 = vpop.permute.xlu0 %7103
      %7105 = vrot.lane.b32.xlu0 %v6679, 96
      %v7106 = vpop.permute.xlu0 %7105
      %7107 = vrot.lane.b32.xlu0 %v6680, 96
      %v7108 = vpop.permute.xlu0 %7107
      %7109 = vrot.lane.b32.xlu0 %v6681, 96
      %v7110 = vpop.permute.xlu0 %7109
      %7111 = vrot.lane.b32.xlu0 %v6682, 96
      %v7112 = vpop.permute.xlu0 %7111
      %7113 = vrot.lane.b32.xlu0 %v6683, 96
      %v7114 = vpop.permute.xlu0 %7113
      %7115 = vrot.lane.b32.xlu0 %v6684, 96
      %v7116 = vpop.permute.xlu0 %7115
      %7117 = vrot.lane.b32.xlu0 %v6685, 96
      %v7118 = vpop.permute.xlu0 %7117
      %7119 = vrot.lane.b32.xlu0 %v6686, 96
      %v7120 = vpop.permute.xlu0 %7119
      %7121 = vrot.lane.b32.xlu0 %v6687, 96
      %v7122 = vpop.permute.xlu0 %7121
      %7123 = vrot.lane.b32.xlu0 %v6688, 96
      %v7124 = vpop.permute.xlu0 %7123
      %7125 = vrot.lane.b32.xlu0 %v6689, 96
      %v7126 = vpop.permute.xlu0 %7125
      %7127 = vrot.lane.b32.xlu0 %v6690, 96
      %v7128 = vpop.permute.xlu0 %7127
      %7129 = vrot.lane.b32.xlu0 %v6691, 96
      %v7130 = vpop.permute.xlu0 %7129
      %7131 = vrot.lane.b32.xlu0 %v6692, 96
      %v7132 = vpop.permute.xlu0 %7131
      %7133 = vrot.lane.b32.xlu0 %v6693, 96
      %v7134 = vpop.permute.xlu0 %7133
      %7135 = vrot.lane.b32.xlu0 %v6694, 96
      %v7136 = vpop.permute.xlu0 %7135
      %7137 = vrot.lane.b32.xlu0 %v6695, 96
      %v7138 = vpop.permute.xlu0 %7137
      %7139 = vrot.lane.b32.xlu0 %v6696, 96
      %v7140 = vpop.permute.xlu0 %7139
      %7141 = vrot.lane.b32.xlu0 %v6697, 96
      %v7142 = vpop.permute.xlu0 %7141
      %7143 = vrot.lane.b32.xlu0 %v6698, 96
      %v7144 = vpop.permute.xlu0 %7143
      %7145 = vrot.lane.b32.xlu0 %v6699, 96
      %v7146 = vpop.permute.xlu0 %7145
      %7147 = vrot.lane.b32.xlu0 %v6700, 96
      %v7148 = vpop.permute.xlu0 %7147
      %7149 = vrot.lane.b32.xlu0 %v6701, 96
      %v7150 = vpop.permute.xlu0 %7149
      %7183 = vst.msk [vmem:[%s307] sm:$0xff] %vm7022, %v7088
      %7184 = vst.msk [vmem:[%s307 + $0x8] sm:$0xff] %vm7022, %v7090
      %7185 = vst.msk [vmem:[%s307 + $0x10] sm:$0xff] %vm7022, %v7092
      %7186 = vst.msk [vmem:[%s307 + $0x18] sm:$0xff] %vm7022, %v7094
      %7187 = vst.msk [vmem:[%s307 + $0x20] sm:$0xff] %vm7022, %v7096
      %7188 = vst.msk [vmem:[%s307 + $0x28] sm:$0xff] %vm7022, %v7098
      %7189 = vst.msk [vmem:[%s307 + $0x30] sm:$0xff] %vm7022, %v7100
      %7190 = vst.msk [vmem:[%s307 + $0x38] sm:$0xff] %vm7022, %v7102
      %7191 = vst.msk [vmem:[%s307 + $0x40] sm:$0xff] %vm7022, %v7104
      %7192 = vst.msk [vmem:[%s307 + $0x48] sm:$0xff] %vm7022, %v7106
      %7193 = vst.msk [vmem:[%s307 + $0x50] sm:$0xff] %vm7022, %v7108
      %7194 = vst.msk [vmem:[%s307 + $0x58] sm:$0xff] %vm7022, %v7110
      %7195 = vst.msk [vmem:[%s307 + $0x60] sm:$0xff] %vm7022, %v7112
      %7196 = vst.msk [vmem:[%s307 + $0x68] sm:$0xff] %vm7022, %v7114
      %7197 = vst.msk [vmem:[%s307 + $0x70] sm:$0xff] %vm7022, %v7116
      %7198 = vst.msk [vmem:[%s307 + $0x78] sm:$0xff] %vm7022, %v7118
      %7199 = vst.msk [vmem:[%s307 + $0x80] sm:$0xff] %vm7022, %v7120
      %7200 = vst.msk [vmem:[%s307 + $0x88] sm:$0xff] %vm7022, %v7122
      %7201 = vst.msk [vmem:[%s307 + $0x90] sm:$0xff] %vm7022, %v7124
      %7202 = vst.msk [vmem:[%s307 + $0x98] sm:$0xff] %vm7022, %v7126
      %7203 = vst.msk [vmem:[%s307 + $0xa0] sm:$0xff] %vm7022, %v7128
      %7204 = vst.msk [vmem:[%s307 + $0xa8] sm:$0xff] %vm7022, %v7130
      %7205 = vst.msk [vmem:[%s307 + $0xb0] sm:$0xff] %vm7022, %v7132
      %7206 = vst.msk [vmem:[%s307 + $0xb8] sm:$0xff] %vm7022, %v7134
      %7207 = vst.msk [vmem:[%s307 + $0xc0] sm:$0xff] %vm7022, %v7136
      %7208 = vst.msk [vmem:[%s307 + $0xc8] sm:$0xff] %vm7022, %v7138
      %7209 = vst.msk [vmem:[%s307 + $0xd0] sm:$0xff] %vm7022, %v7140
      %7210 = vst.msk [vmem:[%s307 + $0xd8] sm:$0xff] %vm7022, %v7142
      %7211 = vst.msk [vmem:[%s307 + $0xe0] sm:$0xff] %vm7022, %v7144
      %7212 = vst.msk [vmem:[%s307 + $0xe8] sm:$0xff] %vm7022, %v7146
      %7213 = vst.msk [vmem:[%s307 + $0xf0] sm:$0xff] %vm7022, %v7148
      %7214 = vst.msk [vmem:[%s307 + $0xf8] sm:$0xff] %vm7022, %v7150
      %s7215 = smul.u32 32, %s18
      %p7216 = scmp.lt.s32.totalorder %s7215, 63
      %s7217 = scalar_select %p7216, %s7215, 63
      %s7218 = smul.addr %s7217, 8
      %s7219 = scalar_lea.vmem %s5, %s7218
      %s7220 = smul.u32 32, %s18
      %p7221 = scmp.lt.s32.totalorder %s7220, 63
      %s7222 = scalar_select %p7221, %s7220, 63
      %s7223 = smul.addr %s7222, 8
      %s7224 = scalar_lea.vmem %s6, %s7223
      // Predicated region
      $region41: #{tpu_custom_call.1} parent=39 // pred_check
        %p7225 = pneg %p156
      $region42: #{tpu_custom_call.1} parent=39 // pred_check_branch
        %7227 = sbr.rel (%p7225) target = $region44
      $region43: #{tpu_custom_call.1} parent=39 // pred_region
        %s7228 = smul.u32 32, %s18
      $region44: #{tpu_custom_call.1} parent=39 // pred_fallthru
        _
      // Predicated region
      $region45: #{tpu_custom_call.1} parent=39 // pred_check
        %p7229 = pneg %p182
      $region46: #{tpu_custom_call.1} parent=39 // pred_check_branch
        %7231 = sbr.rel (%p7229) target = $region48
      $region47: #{tpu_custom_call.1} parent=39 // pred_region
        %s7232 = smul.u32 32, %s18
      $region48: #{tpu_custom_call.1} parent=39 // pred_fallthru
        _
    $region40: #{tpu_custom_call.1} parent=5 // pred_fallthru
      _
    %p7233 = scmp.le.s32.totalorder 2, %s13
    // Predicated region
    $region49: #{tpu_custom_call.1} parent=5 // pred_check
      %p7234 = pneg %p7233
    $region50: #{tpu_custom_call.1} parent=5 // pred_check_branch
      %7236 = sbr.rel (%p7234) target = $region52
    $region51: #{tpu_custom_call.1} parent=5 // pred_region
      %s7237 = ssub.s32 %s13, 2
      // Predicated region
      $region53: #{tpu_custom_call.1} parent=51 // pred_check
        %p7238 = pneg %p162
      $region54: #{tpu_custom_call.1} parent=51 // pred_check_branch
        %7240 = sbr.rel (%p7238) target = $region56
      $region55: #{tpu_custom_call.1} parent=51 // pred_region
        %s7241 = smul.u32 32, %s19
        %p7242 = scmp.lt.s32.totalorder %s7241, 63
        %s7243 = scalar_select %p7242, %s7241, 63
        %s7244 = smul.addr %s7243, 8
        %s7245 = scalar_lea.vmem %s5, %s7244
      $region56: #{tpu_custom_call.1} parent=51 // pred_fallthru
        _
      // Predicated region
      $region57: #{tpu_custom_call.1} parent=51 // pred_check
        %p7246 = pneg %p188
      $region58: #{tpu_custom_call.1} parent=51 // pred_check_branch
        %7248 = sbr.rel (%p7246) target = $region60
      $region59: #{tpu_custom_call.1} parent=51 // pred_region
        %s7249 = smul.u32 32, %s19
        %p7250 = scmp.lt.s32.totalorder %s7249, 63
        %s7251 = scalar_select %p7250, %s7249, 63
        %s7252 = smul.addr %s7251, 8
        %s7253 = scalar_lea.vmem %s6, %s7252
      $region60: #{tpu_custom_call.1} parent=51 // pred_fallthru
        _
    $region52: #{tpu_custom_call.1} parent=5 // pred_fallthru
      _
  $region6: #{tpu_custom_call.1} parent=0 // loop_footer
    %s17 = sadd.s32 1, %s13
  $region7: #{tpu_custom_call.1} parent=0 // loop_footer_branch
    %12 = sbr.rel target = $region3
  $region8: #{tpu_custom_call.1} parent=0 // loop_exit
    _

</llo_original>
